<compile_context>
chip_gen: v5e
topology: v5e:2x2
jax: 0.10.0
libtpu: 0.0.40
codegen_flags: <defaults>
</compile_context>

<pallas_src>
import functools

import jax
import jax.numpy as jnp
from jax.experimental import pallas as pl
from jax.experimental.pallas import tpu as pltpu


# ----------------------------------------------------------------------------
# In-kernel helpers
# ----------------------------------------------------------------------------
def _layernorm_f32(z, g, b, eps=1e-5):
    # Biased variance + eps=1e-5 matches torch.nn.LayerNorm; stats in f32.
    mean = jnp.mean(z, axis=-1, keepdims=True)
    c = z - mean
    var = jnp.mean(c * c, axis=-1, keepdims=True)
    return c * jax.lax.rsqrt(var + eps) * g + b


# ----------------------------------------------------------------------------
# Fused encoder-layer kernel: one grid step per batch element.
#   qkv -> per-head softmax attention -> out-proj -> add+LN1 -> FFN -> add+LN2
# ----------------------------------------------------------------------------
def _encoder_layer_kernel(x_ref, wqkv_ref, bqkv_ref, wo_ref, bo_ref,
                          w1_ref, b1_ref, w2_ref, b2_ref,
                          g1_ref, be1_ref, g2_ref, be2_ref, o_ref, *, nhead):
    S, E = x_ref.shape[1], x_ref.shape[2]
    H = nhead
    Dh = E // H
    scale = 1.0 / float(Dh) ** 0.5

    xb = x_ref[0]                                       # (S, E) f32
    x_bf = xb.astype(jnp.bfloat16)

    # --- packed QKV projection: (S, 3E), f32 accumulation on the MXU ---
    qkv = jnp.dot(x_bf, wqkv_ref[...], preferred_element_type=jnp.float32)
    qkv = qkv + bqkv_ref[...]

    # --- per-head attention; static unrolled loop, everything stays in vregs ---
    nt_dims = (((1,), (1,)), ((), ()))                  # contract last dims (q k^T w/o .T)
    heads = []
    for h in range(H):
        qh = (qkv[:, h * Dh:(h + 1) * Dh] * scale).astype(jnp.bfloat16)
        kh = qkv[:, E + h * Dh:E + (h + 1) * Dh].astype(jnp.bfloat16)
        vh = qkv[:, 2 * E + h * Dh:2 * E + (h + 1) * Dh].astype(jnp.bfloat16)
        s = jax.lax.dot_general(qh, kh, dimension_numbers=nt_dims,
                                preferred_element_type=jnp.float32)   # (S, S)
        s = s - jnp.max(s, axis=-1, keepdims=True)
        p = jnp.exp(s)
        p = p * pl.reciprocal(jnp.sum(p, axis=-1, keepdims=True), approx=True)
        oh = jnp.dot(p.astype(jnp.bfloat16), vh,
                     preferred_element_type=jnp.float32)              # (S, Dh)
        heads.append(oh)
    attn = jnp.concatenate(heads, axis=-1)              # (S, E) f32

    # --- out-projection + residual + LayerNorm1 (fused, no HBM round trip) ---
    attn_out = jnp.dot(attn.astype(jnp.bfloat16), wo_ref[...],
                       preferred_element_type=jnp.float32) + bo_ref[...]
    h1 = _layernorm_f32(xb + attn_out, g1_ref[...], be1_ref[...])

    # --- feed-forward (ReLU) + residual + LayerNorm2 ---
    ff = jnp.dot(h1.astype(jnp.bfloat16), w1_ref[...],
                 preferred_element_type=jnp.float32) + b1_ref[...]
    ff = jnp.maximum(ff, 0.0)
    ff2 = jnp.dot(ff.astype(jnp.bfloat16), w2_ref[...],
                  preferred_element_type=jnp.float32) + b2_ref[...]
    out = _layernorm_f32(h1 + ff2, g2_ref[...], be2_ref[...])

    o_ref[0] = out


def encoder_layer(x, p, nhead):
    """x: (B, S, E) f32 -> (B, S, E) f32; one fused pallas_call, grid over batch."""
    B, S, E = x.shape
    F = p["w1"].shape[1]

    const2d = lambda shape: pl.BlockSpec(shape, lambda b: (0, 0))

    return pl.pallas_call(
        functools.partial(_encoder_layer_kernel, nhead=nhead),
        out_shape=jax.ShapeDtypeStruct((B, S, E), jnp.float32),
        grid=(B,),
        in_specs=[
            pl.BlockSpec((1, S, E), lambda b: (b, 0, 0)),   # x
            const2d((E, 3 * E)),                            # wqkv (bf16)
            const2d((1, 3 * E)),                            # bqkv
            const2d((E, E)),                                # wo   (bf16)
            const2d((1, E)),                                # bo
            const2d((E, F)),                                # w1   (bf16)
            const2d((1, F)),                                # b1
            const2d((F, E)),                                # w2   (bf16)
            const2d((1, E)),                                # b2
            const2d((1, E)),                                # g1
            const2d((1, E)),                                # be1
            const2d((1, E)),                                # g2
            const2d((1, E)),                                # be2
        ],
        out_specs=pl.BlockSpec((1, S, E), lambda b: (b, 0, 0)),
        compiler_params=pltpu.CompilerParams(dimension_semantics=("parallel",)),
    )(
        x,
        p["wqkv"], p["bqkv"].reshape(1, 3 * E),
        p["wo"], p["bo"].reshape(1, E),
        p["w1"], p["b1"].reshape(1, F),
        p["w2"], p["b2"].reshape(1, E),
        p["g1"].reshape(1, E), p["be1"].reshape(1, E),
        p["g2"].reshape(1, E), p["be2"].reshape(1, E),
    )


# ----------------------------------------------------------------------------
# Final LayerNorm over the dense-concatenated features (lane-dense, D >= 128)
# ----------------------------------------------------------------------------
def _final_ln_kernel(x_ref, g_ref, b_ref, o_ref):
    o_ref[0] = _layernorm_f32(x_ref[0], g_ref[...], b_ref[...])


def final_layernorm(x, g, b):
    B, S, D = x.shape
    return pl.pallas_call(
        _final_ln_kernel,
        out_shape=jax.ShapeDtypeStruct((B, S, D), jnp.float32),
        grid=(B,),
        in_specs=[
            pl.BlockSpec((1, S, D), lambda i: (i, 0, 0)),
            pl.BlockSpec((1, D), lambda i: (0, 0)),
            pl.BlockSpec((1, D), lambda i: (0, 0)),
        ],
        out_specs=pl.BlockSpec((1, S, D), lambda i: (i, 0, 0)),
        compiler_params=pltpu.CompilerParams(dimension_semantics=("parallel",)),
    )(x, g.reshape(1, D), b.reshape(1, D))


# ----------------------------------------------------------------------------
# Dense transformer encoder: output = cat([output, layer(output)], dim=-1)
# ----------------------------------------------------------------------------
@functools.partial(jax.jit, static_argnames=("nhead",))
def dense_transformer_encoder(src, layer_params, norm_params, *, nhead):
    output = src
    for p in layer_params:
        layer_out = encoder_layer(output, p, nhead)
        output = jnp.concatenate([output, layer_out], axis=-1)
    if norm_params is not None:
        output = final_layernorm(output, norm_params["g"], norm_params["b"])
    return output


# ----------------------------------------------------------------------------
# Deterministic parameter construction (matmul weights in bf16, rest f32)
# ----------------------------------------------------------------------------
def make_layer_params(key, d_model, nhead, dim_ff):
    del nhead  # static; passed separately to the kernel
    ks = jax.random.split(key, 4)
    s_in = 1.0 / float(d_model) ** 0.5
    s_ff = 1.0 / float(dim_ff) ** 0.5
    f32 = jnp.float32
    bf16 = jnp.bfloat16
    return {
        "wqkv": (jax.random.normal(ks[0], (d_model, 3 * d_model), f32) * s_in).astype(bf16),
        "bqkv": jnp.zeros((3 * d_model,), f32),
        "wo": (jax.random.normal(ks[1], (d_model, d_model), f32) * s_in).astype(bf16),
        "bo": jnp.zeros((d_model,), f32),
        "w1": (jax.random.normal(ks[2], (d_model, dim_ff), f32) * s_in).astype(bf16),
        "b1": jnp.zeros((dim_ff,), f32),
        "w2": (jax.random.normal(ks[3], (dim_ff, d_model), f32) * s_ff).astype(bf16),
        "b2": jnp.zeros((d_model,), f32),
        "g1": jnp.ones((d_model,), f32),
        "be1": jnp.zeros((d_model,), f32),
        "g2": jnp.ones((d_model,), f32),
        "be2": jnp.zeros((d_model,), f32),
    }


if __name__ == "__main__":
    B, S, E = 2, 8, 32          # batch, sequence, base d_model
    NHEAD = 4
    NUM_LAYERS = 2              # dense layers -> final dim = E * 2**NUM_LAYERS = 128

    key = jax.random.PRNGKey(0)
    k_src, k_layers, _ = jax.random.split(key, 3)

    src = jax.random.normal(k_src, (B, S, E), jnp.float32)

    layer_keys = jax.random.split(k_layers, NUM_LAYERS)
    layer_params = []
    d = E
    for li in range(NUM_LAYERS):
        layer_params.append(make_layer_params(layer_keys[li], d, NHEAD, 2 * d))
        d = 2 * d               # dense concat doubles the width each layer

    norm_params = {
        "g": jnp.ones((d,), jnp.float32),
        "b": jnp.zeros((d,), jnp.float32),
    }

    out = dense_transformer_encoder(src, layer_params, norm_params, nhead=NHEAD)
    out = jax.block_until_ready(out)
    assert out.shape == (B, S, E * (2 ** NUM_LAYERS))
    assert bool(jnp.all(jnp.isfinite(out)))
    print("KERNEL_OK")
</pallas_src>

<mosaic_0001>
module attributes {stable_mosaic.version = 11 : i64} {
  func.func @_encoder_layer_kernel(%arg0: i32, %arg1: memref<1x8x64xf32, #tpu.memory_space<vmem>>, %arg2: memref<64x192xbf16, #tpu.memory_space<vmem>>, %arg3: memref<1x192xf32, #tpu.memory_space<vmem>>, %arg4: memref<64x64xbf16, #tpu.memory_space<vmem>>, %arg5: memref<1x64xf32, #tpu.memory_space<vmem>>, %arg6: memref<64x128xbf16, #tpu.memory_space<vmem>>, %arg7: memref<1x128xf32, #tpu.memory_space<vmem>>, %arg8: memref<128x64xbf16, #tpu.memory_space<vmem>>, %arg9: memref<1x64xf32, #tpu.memory_space<vmem>>, %arg10: memref<1x64xf32, #tpu.memory_space<vmem>>, %arg11: memref<1x64xf32, #tpu.memory_space<vmem>>, %arg12: memref<1x64xf32, #tpu.memory_space<vmem>>, %arg13: memref<1x64xf32, #tpu.memory_space<vmem>>, %arg14: memref<1x8x64xf32, #tpu.memory_space<vmem>>) attributes {dimension_semantics = [#tpu.dimension_semantics<parallel>], iteration_bounds = array<i64: 2>, scalar_prefetch = 0 : i64, scratch_operands = 0 : i64, tpu.core_type = #tpu.core_type<tc>, window_params = [{transform_indices = @transform_0, window_bounds = array<i64: 1, 8, 64>}, {pipeline_mode = #tpu.pipeline_mode<synchronous>, transform_indices = @transform_1, window_bounds = array<i64: 64, 192>}, {pipeline_mode = #tpu.pipeline_mode<synchronous>, transform_indices = @transform_2, window_bounds = array<i64: 1, 192>}, {pipeline_mode = #tpu.pipeline_mode<synchronous>, transform_indices = @transform_3, window_bounds = array<i64: 64, 64>}, {pipeline_mode = #tpu.pipeline_mode<synchronous>, transform_indices = @transform_4, window_bounds = array<i64: 1, 64>}, {pipeline_mode = #tpu.pipeline_mode<synchronous>, transform_indices = @transform_5, window_bounds = array<i64: 64, 128>}, {pipeline_mode = #tpu.pipeline_mode<synchronous>, transform_indices = @transform_6, window_bounds = array<i64: 1, 128>}, {pipeline_mode = #tpu.pipeline_mode<synchronous>, transform_indices = @transform_7, window_bounds = array<i64: 128, 64>}, {pipeline_mode = #tpu.pipeline_mode<synchronous>, transform_indices = @transform_8, window_bounds = array<i64: 1, 64>}, {pipeline_mode = #tpu.pipeline_mode<synchronous>, transform_indices = @transform_9, window_bounds = array<i64: 1, 64>}, {pipeline_mode = #tpu.pipeline_mode<synchronous>, transform_indices = @transform_10, window_bounds = array<i64: 1, 64>}, {pipeline_mode = #tpu.pipeline_mode<synchronous>, transform_indices = @transform_11, window_bounds = array<i64: 1, 64>}, {pipeline_mode = #tpu.pipeline_mode<synchronous>, transform_indices = @transform_12, window_bounds = array<i64: 1, 64>}, {transform_indices = @transform_13, window_bounds = array<i64: 1, 8, 64>}]} {
    %c0 = arith.constant 0 : index
    %c0_0 = arith.constant 0 : index
    %c0_1 = arith.constant 0 : index
    %0 = vector.load %arg1[%c0, %c0_0, %c0_1] : memref<1x8x64xf32, #tpu.memory_space<vmem>>, vector<1x8x64xf32>
    %1 = vector.shape_cast %0 : vector<1x8x64xf32> to vector<8x64xf32>
    %2 = arith.truncf %1 : vector<8x64xf32> to vector<8x64xbf16>
    %c0_2 = arith.constant 0 : index
    %c0_3 = arith.constant 0 : index
    %3 = vector.load %arg2[%c0_2, %c0_3] : memref<64x192xbf16, #tpu.memory_space<vmem>>, vector<64x192xbf16>
    %cst = arith.constant dense<0.000000e+00> : vector<8x192xf32>
    %4 = tpu.matmul %2, %3, %cst {dimension_numbers = #tpu.dot_dimension_numbers<[1], [0], [0], [1], [0, 0, 1, 1], [], []>} : vector<8x64xbf16>, vector<64x192xbf16>, vector<8x192xf32> -> vector<8x192xf32>
    %c0_4 = arith.constant 0 : index
    %c0_5 = arith.constant 0 : index
    %5 = vector.load %arg3[%c0_4, %c0_5] : memref<1x192xf32, #tpu.memory_space<vmem>>, vector<1x192xf32>
    %6 = vector.broadcast %5 : vector<1x192xf32> to vector<8x192xf32>
    %7 = arith.addf %4, %6 : vector<8x192xf32>
    %8 = vector.extract_strided_slice %7 {offsets = [0, 0], sizes = [8, 16], strides = [1, 1]} : vector<8x192xf32> to vector<8x16xf32>
    %cst_6 = arith.constant 2.500000e-01 : f32
    %9 = vector.broadcast %cst_6 : f32 to vector<8x16xf32>
    %10 = arith.mulf %8, %9 : vector<8x16xf32>
    %11 = arith.truncf %10 : vector<8x16xf32> to vector<8x16xbf16>
    %12 = vector.extract_strided_slice %7 {offsets = [0, 64], sizes = [8, 16], strides = [1, 1]} : vector<8x192xf32> to vector<8x16xf32>
    %13 = arith.truncf %12 : vector<8x16xf32> to vector<8x16xbf16>
    %14 = vector.extract_strided_slice %7 {offsets = [0, 128], sizes = [8, 16], strides = [1, 1]} : vector<8x192xf32> to vector<8x16xf32>
    %15 = arith.truncf %14 : vector<8x16xf32> to vector<8x16xbf16>
    %cst_7 = arith.constant dense<0.000000e+00> : vector<8x8xf32>
    %16 = tpu.matmul %11, %13, %cst_7 {dimension_numbers = #tpu.dot_dimension_numbers<[1], [1], [0], [0], [0, 0, 1, 0], [], []>} : vector<8x16xbf16>, vector<8x16xbf16>, vector<8x8xf32> -> vector<8x8xf32>
    %cst_8 = arith.constant dense<0xFF800000> : vector<8xf32>
    %17 = vector.multi_reduction <maximumf>, %16, %cst_8 [1] : vector<8x8xf32> to vector<8xf32>
    %18 = vector.shape_cast %17 : vector<8xf32> to vector<8x1xf32>
    %19 = vector.broadcast %18 : vector<8x1xf32> to vector<8x8xf32>
    %20 = arith.subf %16, %19 : vector<8x8xf32>
    %21 = math.exp %20 : vector<8x8xf32>
    %cst_9 = arith.constant dense<0.000000e+00> : vector<8xf32>
    %22 = vector.multi_reduction <add>, %21, %cst_9 [1] : vector<8x8xf32> to vector<8xf32>
    %23 = vector.shape_cast %22 : vector<8xf32> to vector<8x1xf32>
    %24 = tpu.reciprocal %23 {approx = true} : vector<8x1xf32> -> vector<8x1xf32>
    %25 = vector.broadcast %24 : vector<8x1xf32> to vector<8x8xf32>
    %26 = arith.mulf %21, %25 : vector<8x8xf32>
    %27 = arith.truncf %26 : vector<8x8xf32> to vector<8x8xbf16>
    %cst_10 = arith.constant dense<0.000000e+00> : vector<8x16xf32>
    %28 = tpu.matmul %27, %15, %cst_10 {dimension_numbers = #tpu.dot_dimension_numbers<[1], [0], [0], [1], [0, 0, 1, 1], [], []>} : vector<8x8xbf16>, vector<8x16xbf16>, vector<8x16xf32> -> vector<8x16xf32>
    %29 = vector.extract_strided_slice %7 {offsets = [0, 16], sizes = [8, 16], strides = [1, 1]} : vector<8x192xf32> to vector<8x16xf32>
    %cst_11 = arith.constant 2.500000e-01 : f32
    %30 = vector.broadcast %cst_11 : f32 to vector<8x16xf32>
    %31 = arith.mulf %29, %30 : vector<8x16xf32>
    %32 = arith.truncf %31 : vector<8x16xf32> to vector<8x16xbf16>
    %33 = vector.extract_strided_slice %7 {offsets = [0, 80], sizes = [8, 16], strides = [1, 1]} : vector<8x192xf32> to vector<8x16xf32>
    %34 = arith.truncf %33 : vector<8x16xf32> to vector<8x16xbf16>
    %35 = vector.extract_strided_slice %7 {offsets = [0, 144], sizes = [8, 16], strides = [1, 1]} : vector<8x192xf32> to vector<8x16xf32>
    %36 = arith.truncf %35 : vector<8x16xf32> to vector<8x16xbf16>
    %cst_12 = arith.constant dense<0.000000e+00> : vector<8x8xf32>
    %37 = tpu.matmul %32, %34, %cst_12 {dimension_numbers = #tpu.dot_dimension_numbers<[1], [1], [0], [0], [0, 0, 1, 0], [], []>} : vector<8x16xbf16>, vector<8x16xbf16>, vector<8x8xf32> -> vector<8x8xf32>
    %cst_13 = arith.constant dense<0xFF800000> : vector<8xf32>
    %38 = vector.multi_reduction <maximumf>, %37, %cst_13 [1] : vector<8x8xf32> to vector<8xf32>
    %39 = vector.shape_cast %38 : vector<8xf32> to vector<8x1xf32>
    %40 = vector.broadcast %39 : vector<8x1xf32> to vector<8x8xf32>
    %41 = arith.subf %37, %40 : vector<8x8xf32>
    %42 = math.exp %41 : vector<8x8xf32>
    %cst_14 = arith.constant dense<0.000000e+00> : vector<8xf32>
    %43 = vector.multi_reduction <add>, %42, %cst_14 [1] : vector<8x8xf32> to vector<8xf32>
    %44 = vector.shape_cast %43 : vector<8xf32> to vector<8x1xf32>
    %45 = tpu.reciprocal %44 {approx = true} : vector<8x1xf32> -> vector<8x1xf32>
    %46 = vector.broadcast %45 : vector<8x1xf32> to vector<8x8xf32>
    %47 = arith.mulf %42, %46 : vector<8x8xf32>
    %48 = arith.truncf %47 : vector<8x8xf32> to vector<8x8xbf16>
    %cst_15 = arith.constant dense<0.000000e+00> : vector<8x16xf32>
    %49 = tpu.matmul %48, %36, %cst_15 {dimension_numbers = #tpu.dot_dimension_numbers<[1], [0], [0], [1], [0, 0, 1, 1], [], []>} : vector<8x8xbf16>, vector<8x16xbf16>, vector<8x16xf32> -> vector<8x16xf32>
    %50 = vector.extract_strided_slice %7 {offsets = [0, 32], sizes = [8, 16], strides = [1, 1]} : vector<8x192xf32> to vector<8x16xf32>
    %cst_16 = arith.constant 2.500000e-01 : f32
    %51 = vector.broadcast %cst_16 : f32 to vector<8x16xf32>
    %52 = arith.mulf %50, %51 : vector<8x16xf32>
    %53 = arith.truncf %52 : vector<8x16xf32> to vector<8x16xbf16>
    %54 = vector.extract_strided_slice %7 {offsets = [0, 96], sizes = [8, 16], strides = [1, 1]} : vector<8x192xf32> to vector<8x16xf32>
    %55 = arith.truncf %54 : vector<8x16xf32> to vector<8x16xbf16>
    %56 = vector.extract_strided_slice %7 {offsets = [0, 160], sizes = [8, 16], strides = [1, 1]} : vector<8x192xf32> to vector<8x16xf32>
    %57 = arith.truncf %56 : vector<8x16xf32> to vector<8x16xbf16>
    %cst_17 = arith.constant dense<0.000000e+00> : vector<8x8xf32>
    %58 = tpu.matmul %53, %55, %cst_17 {dimension_numbers = #tpu.dot_dimension_numbers<[1], [1], [0], [0], [0, 0, 1, 0], [], []>} : vector<8x16xbf16>, vector<8x16xbf16>, vector<8x8xf32> -> vector<8x8xf32>
    %cst_18 = arith.constant dense<0xFF800000> : vector<8xf32>
    %59 = vector.multi_reduction <maximumf>, %58, %cst_18 [1] : vector<8x8xf32> to vector<8xf32>
    %60 = vector.shape_cast %59 : vector<8xf32> to vector<8x1xf32>
    %61 = vector.broadcast %60 : vector<8x1xf32> to vector<8x8xf32>
    %62 = arith.subf %58, %61 : vector<8x8xf32>
    %63 = math.exp %62 : vector<8x8xf32>
    %cst_19 = arith.constant dense<0.000000e+00> : vector<8xf32>
    %64 = vector.multi_reduction <add>, %63, %cst_19 [1] : vector<8x8xf32> to vector<8xf32>
    %65 = vector.shape_cast %64 : vector<8xf32> to vector<8x1xf32>
    %66 = tpu.reciprocal %65 {approx = true} : vector<8x1xf32> -> vector<8x1xf32>
    %67 = vector.broadcast %66 : vector<8x1xf32> to vector<8x8xf32>
    %68 = arith.mulf %63, %67 : vector<8x8xf32>
    %69 = arith.truncf %68 : vector<8x8xf32> to vector<8x8xbf16>
    %cst_20 = arith.constant dense<0.000000e+00> : vector<8x16xf32>
    %70 = tpu.matmul %69, %57, %cst_20 {dimension_numbers = #tpu.dot_dimension_numbers<[1], [0], [0], [1], [0, 0, 1, 1], [], []>} : vector<8x8xbf16>, vector<8x16xbf16>, vector<8x16xf32> -> vector<8x16xf32>
    %71 = vector.extract_strided_slice %7 {offsets = [0, 48], sizes = [8, 16], strides = [1, 1]} : vector<8x192xf32> to vector<8x16xf32>
    %cst_21 = arith.constant 2.500000e-01 : f32
    %72 = vector.broadcast %cst_21 : f32 to vector<8x16xf32>
    %73 = arith.mulf %71, %72 : vector<8x16xf32>
    %74 = arith.truncf %73 : vector<8x16xf32> to vector<8x16xbf16>
    %75 = vector.extract_strided_slice %7 {offsets = [0, 112], sizes = [8, 16], strides = [1, 1]} : vector<8x192xf32> to vector<8x16xf32>
    %76 = arith.truncf %75 : vector<8x16xf32> to vector<8x16xbf16>
    %77 = vector.extract_strided_slice %7 {offsets = [0, 176], sizes = [8, 16], strides = [1, 1]} : vector<8x192xf32> to vector<8x16xf32>
    %78 = arith.truncf %77 : vector<8x16xf32> to vector<8x16xbf16>
    %cst_22 = arith.constant dense<0.000000e+00> : vector<8x8xf32>
    %79 = tpu.matmul %74, %76, %cst_22 {dimension_numbers = #tpu.dot_dimension_numbers<[1], [1], [0], [0], [0, 0, 1, 0], [], []>} : vector<8x16xbf16>, vector<8x16xbf16>, vector<8x8xf32> -> vector<8x8xf32>
    %cst_23 = arith.constant dense<0xFF800000> : vector<8xf32>
    %80 = vector.multi_reduction <maximumf>, %79, %cst_23 [1] : vector<8x8xf32> to vector<8xf32>
    %81 = vector.shape_cast %80 : vector<8xf32> to vector<8x1xf32>
    %82 = vector.broadcast %81 : vector<8x1xf32> to vector<8x8xf32>
    %83 = arith.subf %79, %82 : vector<8x8xf32>
    %84 = math.exp %83 : vector<8x8xf32>
    %cst_24 = arith.constant dense<0.000000e+00> : vector<8xf32>
    %85 = vector.multi_reduction <add>, %84, %cst_24 [1] : vector<8x8xf32> to vector<8xf32>
    %86 = vector.shape_cast %85 : vector<8xf32> to vector<8x1xf32>
    %87 = tpu.reciprocal %86 {approx = true} : vector<8x1xf32> -> vector<8x1xf32>
    %88 = vector.broadcast %87 : vector<8x1xf32> to vector<8x8xf32>
    %89 = arith.mulf %84, %88 : vector<8x8xf32>
    %90 = arith.truncf %89 : vector<8x8xf32> to vector<8x8xbf16>
    %cst_25 = arith.constant dense<0.000000e+00> : vector<8x16xf32>
    %91 = tpu.matmul %90, %78, %cst_25 {dimension_numbers = #tpu.dot_dimension_numbers<[1], [0], [0], [1], [0, 0, 1, 1], [], []>} : vector<8x8xbf16>, vector<8x16xbf16>, vector<8x16xf32> -> vector<8x16xf32>
    %92 = tpu.concatenate %28, %49, %70, %91 in 1 : vector<8x16xf32>, vector<8x16xf32>, vector<8x16xf32>, vector<8x16xf32> -> vector<8x64xf32>
    %93 = arith.truncf %92 : vector<8x64xf32> to vector<8x64xbf16>
    %c0_26 = arith.constant 0 : index
    %c0_27 = arith.constant 0 : index
    %94 = vector.load %arg4[%c0_26, %c0_27] : memref<64x64xbf16, #tpu.memory_space<vmem>>, vector<64x64xbf16>
    %cst_28 = arith.constant dense<0.000000e+00> : vector<8x64xf32>
    %95 = tpu.matmul %93, %94, %cst_28 {dimension_numbers = #tpu.dot_dimension_numbers<[1], [0], [0], [1], [0, 0, 1, 1], [], []>} : vector<8x64xbf16>, vector<64x64xbf16>, vector<8x64xf32> -> vector<8x64xf32>
    %c0_29 = arith.constant 0 : index
    %c0_30 = arith.constant 0 : index
    %96 = vector.load %arg5[%c0_29, %c0_30] : memref<1x64xf32, #tpu.memory_space<vmem>>, vector<1x64xf32>
    %97 = vector.broadcast %96 : vector<1x64xf32> to vector<8x64xf32>
    %98 = arith.addf %95, %97 : vector<8x64xf32>
    %99 = arith.addf %1, %98 : vector<8x64xf32>
    %c0_31 = arith.constant 0 : index
    %c0_32 = arith.constant 0 : index
    %100 = vector.load %arg10[%c0_31, %c0_32] : memref<1x64xf32, #tpu.memory_space<vmem>>, vector<1x64xf32>
    %c0_33 = arith.constant 0 : index
    %c0_34 = arith.constant 0 : index
    %101 = vector.load %arg11[%c0_33, %c0_34] : memref<1x64xf32, #tpu.memory_space<vmem>>, vector<1x64xf32>
    %cst_35 = arith.constant dense<0.000000e+00> : vector<8xf32>
    %102 = vector.multi_reduction <add>, %99, %cst_35 [1] : vector<8x64xf32> to vector<8xf32>
    %103 = vector.shape_cast %102 : vector<8xf32> to vector<8x1xf32>
    %cst_36 = arith.constant 6.400000e+01 : f32
    %104 = vector.broadcast %cst_36 : f32 to vector<8x1xf32>
    %105 = arith.divf %103, %104 : vector<8x1xf32>
    %106 = vector.broadcast %105 : vector<8x1xf32> to vector<8x64xf32>
    %107 = arith.subf %99, %106 : vector<8x64xf32>
    %108 = arith.mulf %107, %107 : vector<8x64xf32>
    %cst_37 = arith.constant dense<0.000000e+00> : vector<8xf32>
    %109 = vector.multi_reduction <add>, %108, %cst_37 [1] : vector<8x64xf32> to vector<8xf32>
    %110 = vector.shape_cast %109 : vector<8xf32> to vector<8x1xf32>
    %cst_38 = arith.constant 6.400000e+01 : f32
    %111 = vector.broadcast %cst_38 : f32 to vector<8x1xf32>
    %112 = arith.divf %110, %111 : vector<8x1xf32>
    %cst_39 = arith.constant 9.99999974E-6 : f32
    %113 = vector.broadcast %cst_39 : f32 to vector<8x1xf32>
    %114 = arith.addf %112, %113 : vector<8x1xf32>
    %115 = math.rsqrt %114 : vector<8x1xf32>
    %116 = vector.broadcast %115 : vector<8x1xf32> to vector<8x64xf32>
    %117 = arith.mulf %107, %116 : vector<8x64xf32>
    %118 = vector.broadcast %100 : vector<1x64xf32> to vector<8x64xf32>
    %119 = arith.mulf %117, %118 : vector<8x64xf32>
    %120 = vector.broadcast %101 : vector<1x64xf32> to vector<8x64xf32>
    %121 = arith.addf %119, %120 : vector<8x64xf32>
    %122 = arith.truncf %121 : vector<8x64xf32> to vector<8x64xbf16>
    %c0_40 = arith.constant 0 : index
    %c0_41 = arith.constant 0 : index
    %123 = vector.load %arg6[%c0_40, %c0_41] : memref<64x128xbf16, #tpu.memory_space<vmem>>, vector<64x128xbf16>
    %cst_42 = arith.constant dense<0.000000e+00> : vector<8x128xf32>
    %124 = tpu.matmul %122, %123, %cst_42 {dimension_numbers = #tpu.dot_dimension_numbers<[1], [0], [0], [1], [0, 0, 1, 1], [], []>} : vector<8x64xbf16>, vector<64x128xbf16>, vector<8x128xf32> -> vector<8x128xf32>
    %c0_43 = arith.constant 0 : index
    %c0_44 = arith.constant 0 : index
    %125 = vector.load %arg7[%c0_43, %c0_44] : memref<1x128xf32, #tpu.memory_space<vmem>>, vector<1x128xf32>
    %126 = vector.broadcast %125 : vector<1x128xf32> to vector<8x128xf32>
    %127 = arith.addf %124, %126 : vector<8x128xf32>
    %cst_45 = arith.constant 0.000000e+00 : f32
    %128 = vector.broadcast %cst_45 : f32 to vector<8x128xf32>
    %129 = arith.maximumf %127, %128 : vector<8x128xf32>
    %130 = arith.truncf %129 : vector<8x128xf32> to vector<8x128xbf16>
    %c0_46 = arith.constant 0 : index
    %c0_47 = arith.constant 0 : index
    %131 = vector.load %arg8[%c0_46, %c0_47] : memref<128x64xbf16, #tpu.memory_space<vmem>>, vector<128x64xbf16>
    %cst_48 = arith.constant dense<0.000000e+00> : vector<8x64xf32>
    %132 = tpu.matmul %130, %131, %cst_48 {dimension_numbers = #tpu.dot_dimension_numbers<[1], [0], [0], [1], [0, 0, 1, 1], [], []>} : vector<8x128xbf16>, vector<128x64xbf16>, vector<8x64xf32> -> vector<8x64xf32>
    %c0_49 = arith.constant 0 : index
    %c0_50 = arith.constant 0 : index
    %133 = vector.load %arg9[%c0_49, %c0_50] : memref<1x64xf32, #tpu.memory_space<vmem>>, vector<1x64xf32>
    %134 = vector.broadcast %133 : vector<1x64xf32> to vector<8x64xf32>
    %135 = arith.addf %132, %134 : vector<8x64xf32>
    %136 = arith.addf %121, %135 : vector<8x64xf32>
    %c0_51 = arith.constant 0 : index
    %c0_52 = arith.constant 0 : index
    %137 = vector.load %arg12[%c0_51, %c0_52] : memref<1x64xf32, #tpu.memory_space<vmem>>, vector<1x64xf32>
    %c0_53 = arith.constant 0 : index
    %c0_54 = arith.constant 0 : index
    %138 = vector.load %arg13[%c0_53, %c0_54] : memref<1x64xf32, #tpu.memory_space<vmem>>, vector<1x64xf32>
    %cst_55 = arith.constant dense<0.000000e+00> : vector<8xf32>
    %139 = vector.multi_reduction <add>, %136, %cst_55 [1] : vector<8x64xf32> to vector<8xf32>
    %140 = vector.shape_cast %139 : vector<8xf32> to vector<8x1xf32>
    %cst_56 = arith.constant 6.400000e+01 : f32
    %141 = vector.broadcast %cst_56 : f32 to vector<8x1xf32>
    %142 = arith.divf %140, %141 : vector<8x1xf32>
    %143 = vector.broadcast %142 : vector<8x1xf32> to vector<8x64xf32>
    %144 = arith.subf %136, %143 : vector<8x64xf32>
    %145 = arith.mulf %144, %144 : vector<8x64xf32>
    %cst_57 = arith.constant dense<0.000000e+00> : vector<8xf32>
    %146 = vector.multi_reduction <add>, %145, %cst_57 [1] : vector<8x64xf32> to vector<8xf32>
    %147 = vector.shape_cast %146 : vector<8xf32> to vector<8x1xf32>
    %cst_58 = arith.constant 6.400000e+01 : f32
    %148 = vector.broadcast %cst_58 : f32 to vector<8x1xf32>
    %149 = arith.divf %147, %148 : vector<8x1xf32>
    %cst_59 = arith.constant 9.99999974E-6 : f32
    %150 = vector.broadcast %cst_59 : f32 to vector<8x1xf32>
    %151 = arith.addf %149, %150 : vector<8x1xf32>
    %152 = math.rsqrt %151 : vector<8x1xf32>
    %153 = vector.broadcast %152 : vector<8x1xf32> to vector<8x64xf32>
    %154 = arith.mulf %144, %153 : vector<8x64xf32>
    %155 = vector.broadcast %137 : vector<1x64xf32> to vector<8x64xf32>
    %156 = arith.mulf %154, %155 : vector<8x64xf32>
    %157 = vector.broadcast %138 : vector<1x64xf32> to vector<8x64xf32>
    %158 = arith.addf %156, %157 : vector<8x64xf32>
    %c0_60 = arith.constant 0 : index
    %c0_61 = arith.constant 0 : index
    %c0_62 = arith.constant 0 : index
    %159 = vector.load %arg14[%c0_60, %c0_61, %c0_62] : memref<1x8x64xf32, #tpu.memory_space<vmem>>, vector<1x8x64xf32>
    %160 = vector.shape_cast %159 : vector<1x8x64xf32> to vector<8x64xf32>
    %161 = vector.shape_cast %158 : vector<8x64xf32> to vector<1x8x64xf32>
    tpu.vector_store %arg14[%c0_60, %c0_61, %c0_62], %161 {strides = array<i32>} : memref<1x8x64xf32, #tpu.memory_space<vmem>>, vector<1x8x64xf32>,
    return
  }
  func.func @transform_0(%arg0: i32) -> (i32, i32, i32) {
    %c0_i32 = arith.constant 0 : i32
    %c0_i32_0 = arith.constant 0 : i32
    %c0_i32_1 = arith.constant 0 : i32
    return %arg0, %c0_i32, %c0_i32_0 : i32, i32, i32
  }
  func.func @transform_1(%arg0: i32) -> (i32, i32) {
    %c0_i32 = arith.constant 0 : i32
    %c0_i32_0 = arith.constant 0 : i32
    %c0_i32_1 = arith.constant 0 : i32
    return %c0_i32, %c0_i32_0 : i32, i32
  }
  func.func @transform_2(%arg0: i32) -> (i32, i32) {
    %c0_i32 = arith.constant 0 : i32
    %c0_i32_0 = arith.constant 0 : i32
    %c0_i32_1 = arith.constant 0 : i32
    return %c0_i32, %c0_i32_0 : i32, i32
  }
  func.func @transform_3(%arg0: i32) -> (i32, i32) {
    %c0_i32 = arith.constant 0 : i32
    %c0_i32_0 = arith.constant 0 : i32
    %c0_i32_1 = arith.constant 0 : i32
    return %c0_i32, %c0_i32_0 : i32, i32
  }
  func.func @transform_4(%arg0: i32) -> (i32, i32) {
    %c0_i32 = arith.constant 0 : i32
    %c0_i32_0 = arith.constant 0 : i32
    %c0_i32_1 = arith.constant 0 : i32
    return %c0_i32, %c0_i32_0 : i32, i32
  }
  func.func @transform_5(%arg0: i32) -> (i32, i32) {
    %c0_i32 = arith.constant 0 : i32
    %c0_i32_0 = arith.constant 0 : i32
    %c0_i32_1 = arith.constant 0 : i32
    return %c0_i32, %c0_i32_0 : i32, i32
  }
  func.func @transform_6(%arg0: i32) -> (i32, i32) {
    %c0_i32 = arith.constant 0 : i32
    %c0_i32_0 = arith.constant 0 : i32
    %c0_i32_1 = arith.constant 0 : i32
    return %c0_i32, %c0_i32_0 : i32, i32
  }
  func.func @transform_7(%arg0: i32) -> (i32, i32) {
    %c0_i32 = arith.constant 0 : i32
    %c0_i32_0 = arith.constant 0 : i32
    %c0_i32_1 = arith.constant 0 : i32
    return %c0_i32, %c0_i32_0 : i32, i32
  }
  func.func @transform_8(%arg0: i32) -> (i32, i32) {
    %c0_i32 = arith.constant 0 : i32
    %c0_i32_0 = arith.constant 0 : i32
    %c0_i32_1 = arith.constant 0 : i32
    return %c0_i32, %c0_i32_0 : i32, i32
  }
  func.func @transform_9(%arg0: i32) -> (i32, i32) {
    %c0_i32 = arith.constant 0 : i32
    %c0_i32_0 = arith.constant 0 : i32
    %c0_i32_1 = arith.constant 0 : i32
    return %c0_i32, %c0_i32_0 : i32, i32
  }
  func.func @transform_10(%arg0: i32) -> (i32, i32) {
    %c0_i32 = arith.constant 0 : i32
    %c0_i32_0 = arith.constant 0 : i32
    %c0_i32_1 = arith.constant 0 : i32
    return %c0_i32, %c0_i32_0 : i32, i32
  }
  func.func @transform_11(%arg0: i32) -> (i32, i32) {
    %c0_i32 = arith.constant 0 : i32
    %c0_i32_0 = arith.constant 0 : i32
    %c0_i32_1 = arith.constant 0 : i32
    return %c0_i32, %c0_i32_0 : i32, i32
  }
  func.func @transform_12(%arg0: i32) -> (i32, i32) {
    %c0_i32 = arith.constant 0 : i32
    %c0_i32_0 = arith.constant 0 : i32
    %c0_i32_1 = arith.constant 0 : i32
    return %c0_i32, %c0_i32_0 : i32, i32
  }
  func.func @transform_13(%arg0: i32) -> (i32, i32, i32) {
    %c0_i32 = arith.constant 0 : i32
    %c0_i32_0 = arith.constant 0 : i32
    %c0_i32_1 = arith.constant 0 : i32
    return %arg0, %c0_i32, %c0_i32_0 : i32, i32, i32
  }
}

module attributes {stable_mosaic.version = 11 : i64} {
  func.func @_encoder_layer_kernel(%arg0: i32, %arg1: memref<1x8x32xf32, #tpu.memory_space<vmem>>, %arg2: memref<32x96xbf16, #tpu.memory_space<vmem>>, %arg3: memref<1x96xf32, #tpu.memory_space<vmem>>, %arg4: memref<32x32xbf16, #tpu.memory_space<vmem>>, %arg5: memref<1x32xf32, #tpu.memory_space<vmem>>, %arg6: memref<32x64xbf16, #tpu.memory_space<vmem>>, %arg7: memref<1x64xf32, #tpu.memory_space<vmem>>, %arg8: memref<64x32xbf16, #tpu.memory_space<vmem>>, %arg9: memref<1x32xf32, #tpu.memory_space<vmem>>, %arg10: memref<1x32xf32, #tpu.memory_space<vmem>>, %arg11: memref<1x32xf32, #tpu.memory_space<vmem>>, %arg12: memref<1x32xf32, #tpu.memory_space<vmem>>, %arg13: memref<1x32xf32, #tpu.memory_space<vmem>>, %arg14: memref<1x8x32xf32, #tpu.memory_space<vmem>>) attributes {dimension_semantics = [#tpu.dimension_semantics<parallel>], iteration_bounds = array<i64: 2>, scalar_prefetch = 0 : i64, scratch_operands = 0 : i64, tpu.core_type = #tpu.core_type<tc>, window_params = [{transform_indices = @transform_0, window_bounds = array<i64: 1, 8, 32>}, {pipeline_mode = #tpu.pipeline_mode<synchronous>, transform_indices = @transform_1, window_bounds = array<i64: 32, 96>}, {pipeline_mode = #tpu.pipeline_mode<synchronous>, transform_indices = @transform_2, window_bounds = array<i64: 1, 96>}, {pipeline_mode = #tpu.pipeline_mode<synchronous>, transform_indices = @transform_3, window_bounds = array<i64: 32, 32>}, {pipeline_mode = #tpu.pipeline_mode<synchronous>, transform_indices = @transform_4, window_bounds = array<i64: 1, 32>}, {pipeline_mode = #tpu.pipeline_mode<synchronous>, transform_indices = @transform_5, window_bounds = array<i64: 32, 64>}, {pipeline_mode = #tpu.pipeline_mode<synchronous>, transform_indices = @transform_6, window_bounds = array<i64: 1, 64>}, {pipeline_mode = #tpu.pipeline_mode<synchronous>, transform_indices = @transform_7, window_bounds = array<i64: 64, 32>}, {pipeline_mode = #tpu.pipeline_mode<synchronous>, transform_indices = @transform_8, window_bounds = array<i64: 1, 32>}, {pipeline_mode = #tpu.pipeline_mode<synchronous>, transform_indices = @transform_9, window_bounds = array<i64: 1, 32>}, {pipeline_mode = #tpu.pipeline_mode<synchronous>, transform_indices = @transform_10, window_bounds = array<i64: 1, 32>}, {pipeline_mode = #tpu.pipeline_mode<synchronous>, transform_indices = @transform_11, window_bounds = array<i64: 1, 32>}, {pipeline_mode = #tpu.pipeline_mode<synchronous>, transform_indices = @transform_12, window_bounds = array<i64: 1, 32>}, {transform_indices = @transform_13, window_bounds = array<i64: 1, 8, 32>}]} {
    %c0 = arith.constant 0 : index
    %c0_0 = arith.constant 0 : index
    %c0_1 = arith.constant 0 : index
    %0 = vector.load %arg1[%c0, %c0_0, %c0_1] : memref<1x8x32xf32, #tpu.memory_space<vmem>>, vector<1x8x32xf32>
    %1 = vector.shape_cast %0 : vector<1x8x32xf32> to vector<8x32xf32>
    %2 = arith.truncf %1 : vector<8x32xf32> to vector<8x32xbf16>
    %c0_2 = arith.constant 0 : index
    %c0_3 = arith.constant 0 : index
    %3 = vector.load %arg2[%c0_2, %c0_3] : memref<32x96xbf16, #tpu.memory_space<vmem>>, vector<32x96xbf16>
    %cst = arith.constant dense<0.000000e+00> : vector<8x96xf32>
    %4 = tpu.matmul %2, %3, %cst {dimension_numbers = #tpu.dot_dimension_numbers<[1], [0], [0], [1], [0, 0, 1, 1], [], []>} : vector<8x32xbf16>, vector<32x96xbf16>, vector<8x96xf32> -> vector<8x96xf32>
    %c0_4 = arith.constant 0 : index
    %c0_5 = arith.constant 0 : index
    %5 = vector.load %arg3[%c0_4, %c0_5] : memref<1x96xf32, #tpu.memory_space<vmem>>, vector<1x96xf32>
    %6 = vector.broadcast %5 : vector<1x96xf32> to vector<8x96xf32>
    %7 = arith.addf %4, %6 : vector<8x96xf32>
    %8 = vector.extract_strided_slice %7 {offsets = [0, 0], sizes = [8, 8], strides = [1, 1]} : vector<8x96xf32> to vector<8x8xf32>
    %cst_6 = arith.constant 0.353553385 : f32
    %9 = vector.broadcast %cst_6 : f32 to vector<8x8xf32>
    %10 = arith.mulf %8, %9 : vector<8x8xf32>
    %11 = arith.truncf %10 : vector<8x8xf32> to vector<8x8xbf16>
    %12 = vector.extract_strided_slice %7 {offsets = [0, 32], sizes = [8, 8], strides = [1, 1]} : vector<8x96xf32> to vector<8x8xf32>
    %13 = arith.truncf %12 : vector<8x8xf32> to vector<8x8xbf16>
    %14 = vector.extract_strided_slice %7 {offsets = [0, 64], sizes = [8, 8], strides = [1, 1]} : vector<8x96xf32> to vector<8x8xf32>
    %15 = arith.truncf %14 : vector<8x8xf32> to vector<8x8xbf16>
    %cst_7 = arith.constant dense<0.000000e+00> : vector<8x8xf32>
    %16 = tpu.matmul %11, %13, %cst_7 {dimension_numbers = #tpu.dot_dimension_numbers<[1], [1], [0], [0], [0, 0, 1, 0], [], []>} : vector<8x8xbf16>, vector<8x8xbf16>, vector<8x8xf32> -> vector<8x8xf32>
    %cst_8 = arith.constant dense<0xFF800000> : vector<8xf32>
    %17 = vector.multi_reduction <maximumf>, %16, %cst_8 [1] : vector<8x8xf32> to vector<8xf32>
    %18 = vector.shape_cast %17 : vector<8xf32> to vector<8x1xf32>
    %19 = vector.broadcast %18 : vector<8x1xf32> to vector<8x8xf32>
    %20 = arith.subf %16, %19 : vector<8x8xf32>
    %21 = math.exp %20 : vector<8x8xf32>
    %cst_9 = arith.constant dense<0.000000e+00> : vector<8xf32>
    %22 = vector.multi_reduction <add>, %21, %cst_9 [1] : vector<8x8xf32> to vector<8xf32>
    %23 = vector.shape_cast %22 : vector<8xf32> to vector<8x1xf32>
    %24 = tpu.reciprocal %23 {approx = true} : vector<8x1xf32> -> vector<8x1xf32>
    %25 = vector.broadcast %24 : vector<8x1xf32> to vector<8x8xf32>
    %26 = arith.mulf %21, %25 : vector<8x8xf32>
    %27 = arith.truncf %26 : vector<8x8xf32> to vector<8x8xbf16>
    %cst_10 = arith.constant dense<0.000000e+00> : vector<8x8xf32>
    %28 = tpu.matmul %27, %15, %cst_10 {dimension_numbers = #tpu.dot_dimension_numbers<[1], [0], [0], [1], [0, 0, 1, 1], [], []>} : vector<8x8xbf16>, vector<8x8xbf16>, vector<8x8xf32> -> vector<8x8xf32>
    %29 = vector.extract_strided_slice %7 {offsets = [0, 8], sizes = [8, 8], strides = [1, 1]} : vector<8x96xf32> to vector<8x8xf32>
    %cst_11 = arith.constant 0.353553385 : f32
    %30 = vector.broadcast %cst_11 : f32 to vector<8x8xf32>
    %31 = arith.mulf %29, %30 : vector<8x8xf32>
    %32 = arith.truncf %31 : vector<8x8xf32> to vector<8x8xbf16>
    %33 = vector.extract_strided_slice %7 {offsets = [0, 40], sizes = [8, 8], strides = [1, 1]} : vector<8x96xf32> to vector<8x8xf32>
    %34 = arith.truncf %33 : vector<8x8xf32> to vector<8x8xbf16>
    %35 = vector.extract_strided_slice %7 {offsets = [0, 72], sizes = [8, 8], strides = [1, 1]} : vector<8x96xf32> to vector<8x8xf32>
    %36 = arith.truncf %35 : vector<8x8xf32> to vector<8x8xbf16>
    %cst_12 = arith.constant dense<0.000000e+00> : vector<8x8xf32>
    %37 = tpu.matmul %32, %34, %cst_12 {dimension_numbers = #tpu.dot_dimension_numbers<[1], [1], [0], [0], [0, 0, 1, 0], [], []>} : vector<8x8xbf16>, vector<8x8xbf16>, vector<8x8xf32> -> vector<8x8xf32>
    %cst_13 = arith.constant dense<0xFF800000> : vector<8xf32>
    %38 = vector.multi_reduction <maximumf>, %37, %cst_13 [1] : vector<8x8xf32> to vector<8xf32>
    %39 = vector.shape_cast %38 : vector<8xf32> to vector<8x1xf32>
    %40 = vector.broadcast %39 : vector<8x1xf32> to vector<8x8xf32>
    %41 = arith.subf %37, %40 : vector<8x8xf32>
    %42 = math.exp %41 : vector<8x8xf32>
    %cst_14 = arith.constant dense<0.000000e+00> : vector<8xf32>
    %43 = vector.multi_reduction <add>, %42, %cst_14 [1] : vector<8x8xf32> to vector<8xf32>
    %44 = vector.shape_cast %43 : vector<8xf32> to vector<8x1xf32>
    %45 = tpu.reciprocal %44 {approx = true} : vector<8x1xf32> -> vector<8x1xf32>
    %46 = vector.broadcast %45 : vector<8x1xf32> to vector<8x8xf32>
    %47 = arith.mulf %42, %46 : vector<8x8xf32>
    %48 = arith.truncf %47 : vector<8x8xf32> to vector<8x8xbf16>
    %cst_15 = arith.constant dense<0.000000e+00> : vector<8x8xf32>
    %49 = tpu.matmul %48, %36, %cst_15 {dimension_numbers = #tpu.dot_dimension_numbers<[1], [0], [0], [1], [0, 0, 1, 1], [], []>} : vector<8x8xbf16>, vector<8x8xbf16>, vector<8x8xf32> -> vector<8x8xf32>
    %50 = vector.extract_strided_slice %7 {offsets = [0, 16], sizes = [8, 8], strides = [1, 1]} : vector<8x96xf32> to vector<8x8xf32>
    %cst_16 = arith.constant 0.353553385 : f32
    %51 = vector.broadcast %cst_16 : f32 to vector<8x8xf32>
    %52 = arith.mulf %50, %51 : vector<8x8xf32>
    %53 = arith.truncf %52 : vector<8x8xf32> to vector<8x8xbf16>
    %54 = vector.extract_strided_slice %7 {offsets = [0, 48], sizes = [8, 8], strides = [1, 1]} : vector<8x96xf32> to vector<8x8xf32>
    %55 = arith.truncf %54 : vector<8x8xf32> to vector<8x8xbf16>
    %56 = vector.extract_strided_slice %7 {offsets = [0, 80], sizes = [8, 8], strides = [1, 1]} : vector<8x96xf32> to vector<8x8xf32>
    %57 = arith.truncf %56 : vector<8x8xf32> to vector<8x8xbf16>
    %cst_17 = arith.constant dense<0.000000e+00> : vector<8x8xf32>
    %58 = tpu.matmul %53, %55, %cst_17 {dimension_numbers = #tpu.dot_dimension_numbers<[1], [1], [0], [0], [0, 0, 1, 0], [], []>} : vector<8x8xbf16>, vector<8x8xbf16>, vector<8x8xf32> -> vector<8x8xf32>
    %cst_18 = arith.constant dense<0xFF800000> : vector<8xf32>
    %59 = vector.multi_reduction <maximumf>, %58, %cst_18 [1] : vector<8x8xf32> to vector<8xf32>
    %60 = vector.shape_cast %59 : vector<8xf32> to vector<8x1xf32>
    %61 = vector.broadcast %60 : vector<8x1xf32> to vector<8x8xf32>
    %62 = arith.subf %58, %61 : vector<8x8xf32>
    %63 = math.exp %62 : vector<8x8xf32>
    %cst_19 = arith.constant dense<0.000000e+00> : vector<8xf32>
    %64 = vector.multi_reduction <add>, %63, %cst_19 [1] : vector<8x8xf32> to vector<8xf32>
    %65 = vector.shape_cast %64 : vector<8xf32> to vector<8x1xf32>
    %66 = tpu.reciprocal %65 {approx = true} : vector<8x1xf32> -> vector<8x1xf32>
    %67 = vector.broadcast %66 : vector<8x1xf32> to vector<8x8xf32>
    %68 = arith.mulf %63, %67 : vector<8x8xf32>
    %69 = arith.truncf %68 : vector<8x8xf32> to vector<8x8xbf16>
    %cst_20 = arith.constant dense<0.000000e+00> : vector<8x8xf32>
    %70 = tpu.matmul %69, %57, %cst_20 {dimension_numbers = #tpu.dot_dimension_numbers<[1], [0], [0], [1], [0, 0, 1, 1], [], []>} : vector<8x8xbf16>, vector<8x8xbf16>, vector<8x8xf32> -> vector<8x8xf32>
    %71 = vector.extract_strided_slice %7 {offsets = [0, 24], sizes = [8, 8], strides = [1, 1]} : vector<8x96xf32> to vector<8x8xf32>
    %cst_21 = arith.constant 0.353553385 : f32
    %72 = vector.broadcast %cst_21 : f32 to vector<8x8xf32>
    %73 = arith.mulf %71, %72 : vector<8x8xf32>
    %74 = arith.truncf %73 : vector<8x8xf32> to vector<8x8xbf16>
    %75 = vector.extract_strided_slice %7 {offsets = [0, 56], sizes = [8, 8], strides = [1, 1]} : vector<8x96xf32> to vector<8x8xf32>
    %76 = arith.truncf %75 : vector<8x8xf32> to vector<8x8xbf16>
    %77 = vector.extract_strided_slice %7 {offsets = [0, 88], sizes = [8, 8], strides = [1, 1]} : vector<8x96xf32> to vector<8x8xf32>
    %78 = arith.truncf %77 : vector<8x8xf32> to vector<8x8xbf16>
    %cst_22 = arith.constant dense<0.000000e+00> : vector<8x8xf32>
    %79 = tpu.matmul %74, %76, %cst_22 {dimension_numbers = #tpu.dot_dimension_numbers<[1], [1], [0], [0], [0, 0, 1, 0], [], []>} : vector<8x8xbf16>, vector<8x8xbf16>, vector<8x8xf32> -> vector<8x8xf32>
    %cst_23 = arith.constant dense<0xFF800000> : vector<8xf32>
    %80 = vector.multi_reduction <maximumf>, %79, %cst_23 [1] : vector<8x8xf32> to vector<8xf32>
    %81 = vector.shape_cast %80 : vector<8xf32> to vector<8x1xf32>
    %82 = vector.broadcast %81 : vector<8x1xf32> to vector<8x8xf32>
    %83 = arith.subf %79, %82 : vector<8x8xf32>
    %84 = math.exp %83 : vector<8x8xf32>
    %cst_24 = arith.constant dense<0.000000e+00> : vector<8xf32>
    %85 = vector.multi_reduction <add>, %84, %cst_24 [1] : vector<8x8xf32> to vector<8xf32>
    %86 = vector.shape_cast %85 : vector<8xf32> to vector<8x1xf32>
    %87 = tpu.reciprocal %86 {approx = true} : vector<8x1xf32> -> vector<8x1xf32>
    %88 = vector.broadcast %87 : vector<8x1xf32> to vector<8x8xf32>
    %89 = arith.mulf %84, %88 : vector<8x8xf32>
    %90 = arith.truncf %89 : vector<8x8xf32> to vector<8x8xbf16>
    %cst_25 = arith.constant dense<0.000000e+00> : vector<8x8xf32>
    %91 = tpu.matmul %90, %78, %cst_25 {dimension_numbers = #tpu.dot_dimension_numbers<[1], [0], [0], [1], [0, 0, 1, 1], [], []>} : vector<8x8xbf16>, vector<8x8xbf16>, vector<8x8xf32> -> vector<8x8xf32>
    %92 = tpu.concatenate %28, %49, %70, %91 in 1 : vector<8x8xf32>, vector<8x8xf32>, vector<8x8xf32>, vector<8x8xf32> -> vector<8x32xf32>
    %93 = arith.truncf %92 : vector<8x32xf32> to vector<8x32xbf16>
    %c0_26 = arith.constant 0 : index
    %c0_27 = arith.constant 0 : index
    %94 = vector.load %arg4[%c0_26, %c0_27] : memref<32x32xbf16, #tpu.memory_space<vmem>>, vector<32x32xbf16>
    %cst_28 = arith.constant dense<0.000000e+00> : vector<8x32xf32>
    %95 = tpu.matmul %93, %94, %cst_28 {dimension_numbers = #tpu.dot_dimension_numbers<[1], [0], [0], [1], [0, 0, 1, 1], [], []>} : vector<8x32xbf16>, vector<32x32xbf16>, vector<8x32xf32> -> vector<8x32xf32>
    %c0_29 = arith.constant 0 : index
    %c0_30 = arith.constant 0 : index
    %96 = vector.load %arg5[%c0_29, %c0_30] : memref<1x32xf32, #tpu.memory_space<vmem>>, vector<1x32xf32>
    %97 = vector.broadcast %96 : vector<1x32xf32> to vector<8x32xf32>
    %98 = arith.addf %95, %97 : vector<8x32xf32>
    %99 = arith.addf %1, %98 : vector<8x32xf32>
    %c0_31 = arith.constant 0 : index
    %c0_32 = arith.constant 0 : index
    %100 = vector.load %arg10[%c0_31, %c0_32] : memref<1x32xf32, #tpu.memory_space<vmem>>, vector<1x32xf32>
    %c0_33 = arith.constant 0 : index
    %c0_34 = arith.constant 0 : index
    %101 = vector.load %arg11[%c0_33, %c0_34] : memref<1x32xf32, #tpu.memory_space<vmem>>, vector<1x32xf32>
    %cst_35 = arith.constant dense<0.000000e+00> : vector<8xf32>
    %102 = vector.multi_reduction <add>, %99, %cst_35 [1] : vector<8x32xf32> to vector<8xf32>
    %103 = vector.shape_cast %102 : vector<8xf32> to vector<8x1xf32>
    %cst_36 = arith.constant 3.200000e+01 : f32
    %104 = vector.broadcast %cst_36 : f32 to vector<8x1xf32>
    %105 = arith.divf %103, %104 : vector<8x1xf32>
    %106 = vector.broadcast %105 : vector<8x1xf32> to vector<8x32xf32>
    %107 = arith.subf %99, %106 : vector<8x32xf32>
    %108 = arith.mulf %107, %107 : vector<8x32xf32>
    %cst_37 = arith.constant dense<0.000000e+00> : vector<8xf32>
    %109 = vector.multi_reduction <add>, %108, %cst_37 [1] : vector<8x32xf32> to vector<8xf32>
    %110 = vector.shape_cast %109 : vector<8xf32> to vector<8x1xf32>
    %cst_38 = arith.constant 3.200000e+01 : f32
    %111 = vector.broadcast %cst_38 : f32 to vector<8x1xf32>
    %112 = arith.divf %110, %111 : vector<8x1xf32>
    %cst_39 = arith.constant 9.99999974E-6 : f32
    %113 = vector.broadcast %cst_39 : f32 to vector<8x1xf32>
    %114 = arith.addf %112, %113 : vector<8x1xf32>
    %115 = math.rsqrt %114 : vector<8x1xf32>
    %116 = vector.broadcast %115 : vector<8x1xf32> to vector<8x32xf32>
    %117 = arith.mulf %107, %116 : vector<8x32xf32>
    %118 = vector.broadcast %100 : vector<1x32xf32> to vector<8x32xf32>
    %119 = arith.mulf %117, %118 : vector<8x32xf32>
    %120 = vector.broadcast %101 : vector<1x32xf32> to vector<8x32xf32>
    %121 = arith.addf %119, %120 : vector<8x32xf32>
    %122 = arith.truncf %121 : vector<8x32xf32> to vector<8x32xbf16>
    %c0_40 = arith.constant 0 : index
    %c0_41 = arith.constant 0 : index
    %123 = vector.load %arg6[%c0_40, %c0_41] : memref<32x64xbf16, #tpu.memory_space<vmem>>, vector<32x64xbf16>
    %cst_42 = arith.constant dense<0.000000e+00> : vector<8x64xf32>
    %124 = tpu.matmul %122, %123, %cst_42 {dimension_numbers = #tpu.dot_dimension_numbers<[1], [0], [0], [1], [0, 0, 1, 1], [], []>} : vector<8x32xbf16>, vector<32x64xbf16>, vector<8x64xf32> -> vector<8x64xf32>
    %c0_43 = arith.constant 0 : index
    %c0_44 = arith.constant 0 : index
    %125 = vector.load %arg7[%c0_43, %c0_44] : memref<1x64xf32, #tpu.memory_space<vmem>>, vector<1x64xf32>
    %126 = vector.broadcast %125 : vector<1x64xf32> to vector<8x64xf32>
    %127 = arith.addf %124, %126 : vector<8x64xf32>
    %cst_45 = arith.constant 0.000000e+00 : f32
    %128 = vector.broadcast %cst_45 : f32 to vector<8x64xf32>
    %129 = arith.maximumf %127, %128 : vector<8x64xf32>
    %130 = arith.truncf %129 : vector<8x64xf32> to vector<8x64xbf16>
    %c0_46 = arith.constant 0 : index
    %c0_47 = arith.constant 0 : index
    %131 = vector.load %arg8[%c0_46, %c0_47] : memref<64x32xbf16, #tpu.memory_space<vmem>>, vector<64x32xbf16>
    %cst_48 = arith.constant dense<0.000000e+00> : vector<8x32xf32>
    %132 = tpu.matmul %130, %131, %cst_48 {dimension_numbers = #tpu.dot_dimension_numbers<[1], [0], [0], [1], [0, 0, 1, 1], [], []>} : vector<8x64xbf16>, vector<64x32xbf16>, vector<8x32xf32> -> vector<8x32xf32>
    %c0_49 = arith.constant 0 : index
    %c0_50 = arith.constant 0 : index
    %133 = vector.load %arg9[%c0_49, %c0_50] : memref<1x32xf32, #tpu.memory_space<vmem>>, vector<1x32xf32>
    %134 = vector.broadcast %133 : vector<1x32xf32> to vector<8x32xf32>
    %135 = arith.addf %132, %134 : vector<8x32xf32>
    %136 = arith.addf %121, %135 : vector<8x32xf32>
    %c0_51 = arith.constant 0 : index
    %c0_52 = arith.constant 0 : index
    %137 = vector.load %arg12[%c0_51, %c0_52] : memref<1x32xf32, #tpu.memory_space<vmem>>, vector<1x32xf32>
    %c0_53 = arith.constant 0 : index
    %c0_54 = arith.constant 0 : index
    %138 = vector.load %arg13[%c0_53, %c0_54] : memref<1x32xf32, #tpu.memory_space<vmem>>, vector<1x32xf32>
    %cst_55 = arith.constant dense<0.000000e+00> : vector<8xf32>
    %139 = vector.multi_reduction <add>, %136, %cst_55 [1] : vector<8x32xf32> to vector<8xf32>
    %140 = vector.shape_cast %139 : vector<8xf32> to vector<8x1xf32>
    %cst_56 = arith.constant 3.200000e+01 : f32
    %141 = vector.broadcast %cst_56 : f32 to vector<8x1xf32>
    %142 = arith.divf %140, %141 : vector<8x1xf32>
    %143 = vector.broadcast %142 : vector<8x1xf32> to vector<8x32xf32>
    %144 = arith.subf %136, %143 : vector<8x32xf32>
    %145 = arith.mulf %144, %144 : vector<8x32xf32>
    %cst_57 = arith.constant dense<0.000000e+00> : vector<8xf32>
    %146 = vector.multi_reduction <add>, %145, %cst_57 [1] : vector<8x32xf32> to vector<8xf32>
    %147 = vector.shape_cast %146 : vector<8xf32> to vector<8x1xf32>
    %cst_58 = arith.constant 3.200000e+01 : f32
    %148 = vector.broadcast %cst_58 : f32 to vector<8x1xf32>
    %149 = arith.divf %147, %148 : vector<8x1xf32>
    %cst_59 = arith.constant 9.99999974E-6 : f32
    %150 = vector.broadcast %cst_59 : f32 to vector<8x1xf32>
    %151 = arith.addf %149, %150 : vector<8x1xf32>
    %152 = math.rsqrt %151 : vector<8x1xf32>
    %153 = vector.broadcast %152 : vector<8x1xf32> to vector<8x32xf32>
    %154 = arith.mulf %144, %153 : vector<8x32xf32>
    %155 = vector.broadcast %137 : vector<1x32xf32> to vector<8x32xf32>
    %156 = arith.mulf %154, %155 : vector<8x32xf32>
    %157 = vector.broadcast %138 : vector<1x32xf32> to vector<8x32xf32>
    %158 = arith.addf %156, %157 : vector<8x32xf32>
    %c0_60 = arith.constant 0 : index
    %c0_61 = arith.constant 0 : index
    %c0_62 = arith.constant 0 : index
    %159 = vector.load %arg14[%c0_60, %c0_61, %c0_62] : memref<1x8x32xf32, #tpu.memory_space<vmem>>, vector<1x8x32xf32>
    %160 = vector.shape_cast %159 : vector<1x8x32xf32> to vector<8x32xf32>
    %161 = vector.shape_cast %158 : vector<8x32xf32> to vector<1x8x32xf32>
    tpu.vector_store %arg14[%c0_60, %c0_61, %c0_62], %161 {strides = array<i32>} : memref<1x8x32xf32, #tpu.memory_space<vmem>>, vector<1x8x32xf32>,
    return
  }
  func.func @transform_0(%arg0: i32) -> (i32, i32, i32) {
    %c0_i32 = arith.constant 0 : i32
    %c0_i32_0 = arith.constant 0 : i32
    %c0_i32_1 = arith.constant 0 : i32
    return %arg0, %c0_i32, %c0_i32_0 : i32, i32, i32
  }
  func.func @transform_1(%arg0: i32) -> (i32, i32) {
    %c0_i32 = arith.constant 0 : i32
    %c0_i32_0 = arith.constant 0 : i32
    %c0_i32_1 = arith.constant 0 : i32
    return %c0_i32, %c0_i32_0 : i32, i32
  }
  func.func @transform_2(%arg0: i32) -> (i32, i32) {
    %c0_i32 = arith.constant 0 : i32
    %c0_i32_0 = arith.constant 0 : i32
    %c0_i32_1 = arith.constant 0 : i32
    return %c0_i32, %c0_i32_0 : i32, i32
  }
  func.func @transform_3(%arg0: i32) -> (i32, i32) {
    %c0_i32 = arith.constant 0 : i32
    %c0_i32_0 = arith.constant 0 : i32
    %c0_i32_1 = arith.constant 0 : i32
    return %c0_i32, %c0_i32_0 : i32, i32
  }
  func.func @transform_4(%arg0: i32) -> (i32, i32) {
    %c0_i32 = arith.constant 0 : i32
    %c0_i32_0 = arith.constant 0 : i32
    %c0_i32_1 = arith.constant 0 : i32
    return %c0_i32, %c0_i32_0 : i32, i32
  }
  func.func @transform_5(%arg0: i32) -> (i32, i32) {
    %c0_i32 = arith.constant 0 : i32
    %c0_i32_0 = arith.constant 0 : i32
    %c0_i32_1 = arith.constant 0 : i32
    return %c0_i32, %c0_i32_0 : i32, i32
  }
  func.func @transform_6(%arg0: i32) -> (i32, i32) {
    %c0_i32 = arith.constant 0 : i32
    %c0_i32_0 = arith.constant 0 : i32
    %c0_i32_1 = arith.constant 0 : i32
    return %c0_i32, %c0_i32_0 : i32, i32
  }
  func.func @transform_7(%arg0: i32) -> (i32, i32) {
    %c0_i32 = arith.constant 0 : i32
    %c0_i32_0 = arith.constant 0 : i32
    %c0_i32_1 = arith.constant 0 : i32
    return %c0_i32, %c0_i32_0 : i32, i32
  }
  func.func @transform_8(%arg0: i32) -> (i32, i32) {
    %c0_i32 = arith.constant 0 : i32
    %c0_i32_0 = arith.constant 0 : i32
    %c0_i32_1 = arith.constant 0 : i32
    return %c0_i32, %c0_i32_0 : i32, i32
  }
  func.func @transform_9(%arg0: i32) -> (i32, i32) {
    %c0_i32 = arith.constant 0 : i32
    %c0_i32_0 = arith.constant 0 : i32
    %c0_i32_1 = arith.constant 0 : i32
    return %c0_i32, %c0_i32_0 : i32, i32
  }
  func.func @transform_10(%arg0: i32) -> (i32, i32) {
    %c0_i32 = arith.constant 0 : i32
    %c0_i32_0 = arith.constant 0 : i32
    %c0_i32_1 = arith.constant 0 : i32
    return %c0_i32, %c0_i32_0 : i32, i32
  }
  func.func @transform_11(%arg0: i32) -> (i32, i32) {
    %c0_i32 = arith.constant 0 : i32
    %c0_i32_0 = arith.constant 0 : i32
    %c0_i32_1 = arith.constant 0 : i32
    return %c0_i32, %c0_i32_0 : i32, i32
  }
  func.func @transform_12(%arg0: i32) -> (i32, i32) {
    %c0_i32 = arith.constant 0 : i32
    %c0_i32_0 = arith.constant 0 : i32
    %c0_i32_1 = arith.constant 0 : i32
    return %c0_i32, %c0_i32_0 : i32, i32
  }
  func.func @transform_13(%arg0: i32) -> (i32, i32, i32) {
    %c0_i32 = arith.constant 0 : i32
    %c0_i32_0 = arith.constant 0 : i32
    %c0_i32_1 = arith.constant 0 : i32
    return %arg0, %c0_i32, %c0_i32_0 : i32, i32, i32
  }
}

module attributes {stable_mosaic.version = 11 : i64} {
  func.func @_final_ln_kernel(%arg0: i32, %arg1: memref<1x8x128xf32, #tpu.memory_space<vmem>>, %arg2: memref<1x128xf32, #tpu.memory_space<vmem>>, %arg3: memref<1x128xf32, #tpu.memory_space<vmem>>, %arg4: memref<1x8x128xf32, #tpu.memory_space<vmem>>) attributes {dimension_semantics = [#tpu.dimension_semantics<parallel>], iteration_bounds = array<i64: 2>, scalar_prefetch = 0 : i64, scratch_operands = 0 : i64, tpu.core_type = #tpu.core_type<tc>, window_params = [{transform_indices = @transform_0, window_bounds = array<i64: 1, 8, 128>}, {pipeline_mode = #tpu.pipeline_mode<synchronous>, transform_indices = @transform_1, window_bounds = array<i64: 1, 128>}, {pipeline_mode = #tpu.pipeline_mode<synchronous>, transform_indices = @transform_2, window_bounds = array<i64: 1, 128>}, {transform_indices = @transform_3, window_bounds = array<i64: 1, 8, 128>}]} {
    %c0 = arith.constant 0 : index
    %c0_0 = arith.constant 0 : index
    %c0_1 = arith.constant 0 : index
    %0 = vector.load %arg1[%c0, %c0_0, %c0_1] : memref<1x8x128xf32, #tpu.memory_space<vmem>>, vector<1x8x128xf32>
    %1 = vector.shape_cast %0 : vector<1x8x128xf32> to vector<8x128xf32>
    %c0_2 = arith.constant 0 : index
    %c0_3 = arith.constant 0 : index
    %2 = vector.load %arg2[%c0_2, %c0_3] : memref<1x128xf32, #tpu.memory_space<vmem>>, vector<1x128xf32>
    %c0_4 = arith.constant 0 : index
    %c0_5 = arith.constant 0 : index
    %3 = vector.load %arg3[%c0_4, %c0_5] : memref<1x128xf32, #tpu.memory_space<vmem>>, vector<1x128xf32>
    %cst = arith.constant dense<0.000000e+00> : vector<8xf32>
    %4 = vector.multi_reduction <add>, %1, %cst [1] : vector<8x128xf32> to vector<8xf32>
    %5 = vector.shape_cast %4 : vector<8xf32> to vector<8x1xf32>
    %cst_6 = arith.constant 1.280000e+02 : f32
    %6 = vector.broadcast %cst_6 : f32 to vector<8x1xf32>
    %7 = arith.divf %5, %6 : vector<8x1xf32>
    %8 = vector.broadcast %7 : vector<8x1xf32> to vector<8x128xf32>
    %9 = arith.subf %1, %8 : vector<8x128xf32>
    %10 = arith.mulf %9, %9 : vector<8x128xf32>
    %cst_7 = arith.constant dense<0.000000e+00> : vector<8xf32>
    %11 = vector.multi_reduction <add>, %10, %cst_7 [1] : vector<8x128xf32> to vector<8xf32>
    %12 = vector.shape_cast %11 : vector<8xf32> to vector<8x1xf32>
    %cst_8 = arith.constant 1.280000e+02 : f32
    %13 = vector.broadcast %cst_8 : f32 to vector<8x1xf32>
    %14 = arith.divf %12, %13 : vector<8x1xf32>
    %cst_9 = arith.constant 9.99999974E-6 : f32
    %15 = vector.broadcast %cst_9 : f32 to vector<8x1xf32>
    %16 = arith.addf %14, %15 : vector<8x1xf32>
    %17 = math.rsqrt %16 : vector<8x1xf32>
    %18 = vector.broadcast %17 : vector<8x1xf32> to vector<8x128xf32>
    %19 = arith.mulf %9, %18 : vector<8x128xf32>
    %20 = vector.broadcast %2 : vector<1x128xf32> to vector<8x128xf32>
    %21 = arith.mulf %19, %20 : vector<8x128xf32>
    %22 = vector.broadcast %3 : vector<1x128xf32> to vector<8x128xf32>
    %23 = arith.addf %21, %22 : vector<8x128xf32>
    %c0_10 = arith.constant 0 : index
    %c0_11 = arith.constant 0 : index
    %c0_12 = arith.constant 0 : index
    %24 = vector.load %arg4[%c0_10, %c0_11, %c0_12] : memref<1x8x128xf32, #tpu.memory_space<vmem>>, vector<1x8x128xf32>
    %25 = vector.shape_cast %24 : vector<1x8x128xf32> to vector<8x128xf32>
    %26 = vector.shape_cast %23 : vector<8x128xf32> to vector<1x8x128xf32>
    tpu.vector_store %arg4[%c0_10, %c0_11, %c0_12], %26 {strides = array<i32>} : memref<1x8x128xf32, #tpu.memory_space<vmem>>, vector<1x8x128xf32>,
    return
  }
  func.func @transform_0(%arg0: i32) -> (i32, i32, i32) {
    %c0_i32 = arith.constant 0 : i32
    %c0_i32_0 = arith.constant 0 : i32
    %c0_i32_1 = arith.constant 0 : i32
    return %arg0, %c0_i32, %c0_i32_0 : i32, i32, i32
  }
  func.func @transform_1(%arg0: i32) -> (i32, i32) {
    %c0_i32 = arith.constant 0 : i32
    %c0_i32_0 = arith.constant 0 : i32
    %c0_i32_1 = arith.constant 0 : i32
    return %c0_i32, %c0_i32_0 : i32, i32
  }
  func.func @transform_2(%arg0: i32) -> (i32, i32) {
    %c0_i32 = arith.constant 0 : i32
    %c0_i32_0 = arith.constant 0 : i32
    %c0_i32_1 = arith.constant 0 : i32
    return %c0_i32, %c0_i32_0 : i32, i32
  }
  func.func @transform_3(%arg0: i32) -> (i32, i32, i32) {
    %c0_i32 = arith.constant 0 : i32
    %c0_i32_0 = arith.constant 0 : i32
    %c0_i32_1 = arith.constant 0 : i32
    return %arg0, %c0_i32, %c0_i32_0 : i32, i32, i32
  }
}

</mosaic_0001>

<llo_original>
// kernel: dense_transformer_encoder.5
$region0: #{dense_transformer_encoder.5}
  #allocation0 [shape = 'u32[]', space=smem, size = 0x4, offset = 0x4, fixed_abs, tag = 'smem constant byte address 0x4 - core index']
  #allocation1 [shape = 'u32[72,128]{1,0:T(1,128)}', space=vmem, size = 0x9000, scoped, tag = 'internal scratch']
  %s0 = inlined_call_operand.vmem [shape: f32[2,8,128], index: 0, kind: input, shape index: {}]
  %s1 = inlined_call_operand.vmem [shape: f32[1,128], index: 1, kind: input, shape index: {}]
  %s2 = inlined_call_operand.vmem [shape: f32[1,128], index: 2, kind: input, shape index: {}]
  %s3 = inlined_call_operand.hbm [shape: f32[2,8,128], index: 3, kind: output, shape index: {}]
  %s4 = sld [smem:[#allocation0]]
  $region45: #{dense_transformer_encoder.5} parent=0
    _
  %s6 = ssub.s32 1, %s4
  %s7 = scalar_select 0, %s6, %s4
  $region1: #{dense_transformer_encoder.5} parent=0
    #allocation2 [shape = 'u8[8192]{0}', space=vmem, size = 0x2000, scoped, tag = 'output window, operand 0']
    #allocation3 [shape = 's32[2]{0}', space=sflag, size = 0x8, scoped, tag = 'scoped memory for dense_transformer_encoder.5']
    %8 = vsyncpa [#allocation3], 0
    %s9 = scalar_lea.sflag [#allocation3], 1
    %10 = vsyncpa %s9, 0
    loop: start=0, step=1, limit=4
    $region2: #{dense_transformer_encoder.5} parent=1 // loop_pre_header
      _
    $region3: #{dense_transformer_encoder.5} parent=1 // loop_header
      %s12 = sphi 0, %s16
      %p13 = scmp.ge.s32.totalorder %s12, 4
      %s22 = sphi 0, %s24
      %s25 = sphi 0, %s22
      %s26 = sphi 0, %s25
      %s42 = sphi 0, %s26
      %s46 = sphi 0, %s46
      %s48 = sphi 0, %s46
      %s49 = sphi 0, %s48
      %s63 = sphi 0, %s49
      %s67 = sphi 0, %s67
      %s69 = sphi 0, %s67
      %s70 = sphi 0, %s69
      %s84 = sphi 0, %s70
      %s90 = sphi 0, %s92
      %s93 = sphi 0, %s90
      %s94 = sphi 0, %s93
      %s110 = sphi 0, %s94
    $region4: #{dense_transformer_encoder.5} parent=1 // loop_header_branch
      %15 = sbr.rel (%p13) target = $region8
    $region5: #{dense_transformer_encoder.5} parent=1 // loop_body
      %s17 = ssub.s32 %s12, 1
      %s18 = ssub.s32 %s12, 2
      %s19 = sadd.s32 %s12, 1
      %s20 = ssub.s32 %s12, %s19
      %p21 = scmp.eq.s32.totalorder %s20, 0
      %s23 = sadd.s32 %s22, 1
      %s24 = scalar_select %p21, %s22, %s23
      %p27 = pneg %p21
      %p28 = scmp.eq.s32.totalorder %s12, 1
      %p29 = por %p27, %p28
      %p30 = scmp.ne.s32.totalorder %s22, %s25
      %p31 = scmp.eq.s32.totalorder %s12, 0
      %p32 = por %p30, %p31
      %p33 = scmp.ne.s32.totalorder %s22, %s25
      %p34 = scmp.eq.s32.totalorder %s17, 1
      %p35 = por %p33, %p34
      %p36 = scmp.ne.s32.totalorder %s25, %s26
      %p37 = scmp.eq.s32.totalorder %s17, 0
      %p38 = por %p36, %p37
      %p39 = scmp.ne.s32.totalorder %s25, %s26
      %p40 = scmp.eq.s32.totalorder %s18, 1
      %p41 = por %p39, %p40
      %p43 = scmp.ne.s32.totalorder %s26, %s42
      %p44 = scmp.eq.s32.totalorder %s18, 0
      %p45 = por %p43, %p44
      %s47 = sadd.s32 %s46, 1
      %p50 = scmp.eq.s32.totalorder %s12, 1
      %p51 = scmp.ne.s32.totalorder %s46, %s48
      %p52 = scmp.eq.s32.totalorder %s12, 0
      %p53 = por %p51, %p52
      %p54 = scmp.ne.s32.totalorder %s46, %s48
      %p55 = scmp.eq.s32.totalorder %s17, 1
      %p56 = por %p54, %p55
      %p57 = scmp.ne.s32.totalorder %s48, %s49
      %p58 = scmp.eq.s32.totalorder %s17, 0
      %p59 = por %p57, %p58
      %p60 = scmp.ne.s32.totalorder %s48, %s49
      %p61 = scmp.eq.s32.totalorder %s18, 1
      %p62 = por %p60, %p61
      %p64 = scmp.ne.s32.totalorder %s49, %s63
      %p65 = scmp.eq.s32.totalorder %s18, 0
      %p66 = por %p64, %p65
      %s68 = sadd.s32 %s67, 1
      %p71 = scmp.eq.s32.totalorder %s12, 1
      %p72 = scmp.ne.s32.totalorder %s67, %s69
      %p73 = scmp.eq.s32.totalorder %s12, 0
      %p74 = por %p72, %p73
      %p75 = scmp.ne.s32.totalorder %s67, %s69
      %p76 = scmp.eq.s32.totalorder %s17, 1
      %p77 = por %p75, %p76
      %p78 = scmp.ne.s32.totalorder %s69, %s70
      %p79 = scmp.eq.s32.totalorder %s17, 0
      %p80 = por %p78, %p79
      %p81 = scmp.ne.s32.totalorder %s69, %s70
      %p82 = scmp.eq.s32.totalorder %s18, 1
      %p83 = por %p81, %p82
      %p85 = scmp.ne.s32.totalorder %s70, %s84
      %p86 = scmp.eq.s32.totalorder %s18, 0
      %p87 = por %p85, %p86
      %s88 = ssub.s32 %s12, %s19
      %p89 = scmp.eq.s32.totalorder %s88, 0
      %s91 = sadd.s32 %s90, 1
      %s92 = scalar_select %p89, %s90, %s91
      %p95 = pneg %p89
      %p96 = scmp.eq.s32.totalorder %s12, 1
      %p97 = por %p95, %p96
      %p98 = scmp.ne.s32.totalorder %s90, %s93
      %p99 = scmp.eq.s32.totalorder %s12, 0
      %p100 = por %p98, %p99
      %p101 = scmp.ne.s32.totalorder %s90, %s93
      %p102 = scmp.eq.s32.totalorder %s17, 1
      %p103 = por %p101, %p102
      %p104 = scmp.ne.s32.totalorder %s93, %s94
      %p105 = scmp.eq.s32.totalorder %s17, 0
      %p106 = por %p104, %p105
      %p107 = scmp.ne.s32.totalorder %s93, %s94
      %p108 = scmp.eq.s32.totalorder %s18, 1
      %p109 = por %p107, %p108
      %p111 = scmp.ne.s32.totalorder %s94, %s110
      %p112 = scmp.eq.s32.totalorder %s18, 0
      %p113 = por %p111, %p112
      %p114 = scmp.le.s32.totalorder 1, %s12
      %p115 = scmp.lt.s32.totalorder %s12, 3
      %p116 = pnand %p114, %p115
      %p117 = pneg %p116
      // Predicated region
      $region9: #{dense_transformer_encoder.5} parent=5 // pred_check
        _
      $region10: #{dense_transformer_encoder.5} parent=5 // pred_check_branch
        %119 = sbr.rel (%p116) target = $region12
      $region11: #{dense_transformer_encoder.5} parent=5 // pred_region
        %s120 = ssub.s32 %s12, 1
        // Predicated region
        $region13: #{dense_transformer_encoder.5} parent=11 // pred_check
          %p121 = pneg %p59
        $region14: #{dense_transformer_encoder.5} parent=11 // pred_check_branch
          %123 = sbr.rel (%p121) target = $region16
        $region15: #{dense_transformer_encoder.5} parent=11 // pred_region
          _
        $region16: #{dense_transformer_encoder.5} parent=11 // pred_fallthru
          _
        // Predicated region
        $region17: #{dense_transformer_encoder.5} parent=11 // pred_check
          %p124 = pneg %p80
        $region18: #{dense_transformer_encoder.5} parent=11 // pred_check_branch
          %126 = sbr.rel (%p124) target = $region20
        $region19: #{dense_transformer_encoder.5} parent=11 // pred_region
          _
        $region20: #{dense_transformer_encoder.5} parent=11 // pred_fallthru
          _
      $region12: #{dense_transformer_encoder.5} parent=5 // pred_fallthru
        _
      %p127 = scmp.lt.s32.totalorder %s12, 2
      // Predicated region
      $region21: #{dense_transformer_encoder.5} parent=5 // pred_check
        %p128 = pneg %p127
      $region22: #{dense_transformer_encoder.5} parent=5 // pred_check_branch
        %130 = sbr.rel (%p128) target = $region24
      $region23: #{dense_transformer_encoder.5} parent=5 // pred_region
        // Predicated region
        $region25: #{dense_transformer_encoder.5} parent=23 // pred_check
          %p131 = pneg %p32
        $region26: #{dense_transformer_encoder.5} parent=23 // pred_check_branch
          %133 = sbr.rel (%p131) target = $region28
        $region27: #{dense_transformer_encoder.5} parent=23 // pred_region
          %p134 = scmp.lt.s32.totalorder %s12, 1
          %s135 = scalar_select %p134, %s12, 1
          %s136 = smul.addr %s135, 8
          %s137 = scalar_lea.vmem %s0, %s136
        $region28: #{dense_transformer_encoder.5} parent=23 // pred_fallthru
          _
      $region24: #{dense_transformer_encoder.5} parent=5 // pred_fallthru
        _
      %p138 = scmp.le.s32.totalorder 1, %s12
      %p139 = scmp.lt.s32.totalorder %s12, 3
      %p140 = pnand %p138, %p139
      %p141 = pneg %p140
      // Predicated region
      $region29: #{dense_transformer_encoder.5} parent=5 // pred_check
        _
      $region30: #{dense_transformer_encoder.5} parent=5 // pred_check_branch
        %143 = sbr.rel (%p140) target = $region32
      $region31: #{dense_transformer_encoder.5} parent=5 // pred_region
        %s144 = ssub.s32 %s12, 1
        %p145 = scmp.lt.s32.totalorder %s17, 1
        %s146 = scalar_select %p145, %s17, 1
        %s147 = smul.addr %s146, 8
        %s148 = scalar_lea.vmem %s0, %s147
        %p149 = pneg %p38
        %p150 = pneg %p35
        %p151 = pneg %p59
        %p152 = pneg %p56
        %p153 = pneg %p80
        %p154 = pneg %p77
        %p155 = pneg %p106
        %p156 = pneg %p103
        %s157 = sand.u32 %s93, 1
        %s158 = scalar_lea.sflag [#allocation3], %s157
        %s159 = sand.u32 %s93, 1
        %s160 = smul.addr %s159, 8
        %s161 = scalar_lea.vmem [#allocation2], %s160
        %p162 = scmp.lt.s32.totalorder %s17, 1
        %s163 = scalar_select %p162, %s17, 1
        %s164 = smul.addr %s163, 8
        %s165 = scalar_lea.vmem %s0, %s164
        %v166 = vld [vmem:[%s165] sm:$0xff]
        %v167 = vld [vmem:[%s1] sm:$0x1]
        %v168 = vld [vmem:[%s2] sm:$0x1]
        %169 = vadd.xlane.f32.xlu0 %v166
        %v170 = vpop.xlane.xlu0 %169
        %v171 = vrcp.pop 128.0
        %v172 = vmul.f32 128.0, %v171
        %v173 = vsub.f32 1.0, %v172
        %v174 = vmul.f32 %v171, %v173
        %v175 = vadd.f32 %v171, %v174
        %vm176 = vweird.f32 %v171
        %v177 = vsel %vm176, %v171, %v175
        %v178 = vmul.f32 %v170, %v177
        %v179 = vsub.f32 %v166, %v178
        %v180 = vmul.f32 %v179, %v179
        %181 = vadd.xlane.f32.xlu0 %v180
        %v182 = vpop.xlane.xlu0 %181
        %v183 = vmul.f32 %v182, %v177
        %v184 = vadd.f32 %v183, 1e-05
        %v185 = vrsqrt.pop %v184
        %v186 = vmul.f32 %v185, %v184
        %v187 = vmul.f32 %v186, %v185
        %v188 = vmul.f32 0.5, %v187
        %v189 = vsub.f32 1.5, %v188
        %v190 = vmul.f32 %v185, %v189
        %vm191 = vweird.f32 %v184
        %vm192 = vweird.f32 %v185
        %vm193 = vmor %vm191, %vm192
        %v194 = vsel %vm193, %v185, %v190
        %v195 = vmul.f32 %v179, %v194
        %v197 = vperm.slane %v167, 0
        %v199 = vmul.f32 %v195, %v197
        %v201 = vperm.slane %v168, 0
        %v203 = vadd.f32 %v199, %v201
        %204 = vst [vmem:[%s161] sm:$0xff] %v203
        %s205 = sand.u32 %s93, 1
        %s206 = scalar_lea.sflag [#allocation3], %s205
        %s207 = sand.u32 %s93, 1
        %s208 = smul.addr %s207, 8
        %s209 = scalar_lea.vmem [#allocation2], %s208
        // Predicated region
        $region33: #{dense_transformer_encoder.5} parent=31 // pred_check
          %p210 = pneg %p103
        $region34: #{dense_transformer_encoder.5} parent=31 // pred_check_branch
          %212 = sbr.rel (%p210) target = $region36
        $region35: #{dense_transformer_encoder.5} parent=31 // pred_region
          %214 = vsyncadd %s206, 0
          %s215 = smul.addr %s17, 8
          %s216 = scalar_lea.hbm %s3, %s215
          %s218 = sshll.u32 %s209, 4
          %s219 = int_to_ptr.vmem [resolvable:$true] %s218
          %s220 = sshll.u32 %s216, 4
          %s221 = int_to_ptr.hbm [resolvable:$true] %s220
          %223 = dma.vmem_to_hbm [thread:$0]  %s219, 128, %s221, %s206
        $region36: #{dense_transformer_encoder.5} parent=31 // pred_fallthru
          _
      $region32: #{dense_transformer_encoder.5} parent=5 // pred_fallthru
        _
      %p224 = scmp.le.s32.totalorder 2, %s12
      // Predicated region
      $region37: #{dense_transformer_encoder.5} parent=5 // pred_check
        %p225 = pneg %p224
      $region38: #{dense_transformer_encoder.5} parent=5 // pred_check_branch
        %227 = sbr.rel (%p225) target = $region40
      $region39: #{dense_transformer_encoder.5} parent=5 // pred_region
        %s228 = ssub.s32 %s12, 2
        // Predicated region
        $region41: #{dense_transformer_encoder.5} parent=39 // pred_check
          %p229 = pneg %p109
        $region42: #{dense_transformer_encoder.5} parent=39 // pred_check_branch
          %231 = sbr.rel (%p229) target = $region44
        $region43: #{dense_transformer_encoder.5} parent=39 // pred_region
          %s232 = sand.u32 %s94, 1
          %s233 = scalar_lea.sflag [#allocation3], %s232
          %s234 = sand.u32 %s94, 1
          %s235 = smul.addr %s234, 8
          %s236 = scalar_lea.vmem [#allocation2], %s235
          %238 = dma.done %s233, 128
        $region44: #{dense_transformer_encoder.5} parent=39 // pred_fallthru
          _
      $region40: #{dense_transformer_encoder.5} parent=5 // pred_fallthru
        _
    $region6: #{dense_transformer_encoder.5} parent=1 // loop_footer
      %s16 = sadd.s32 1, %s12
    $region7: #{dense_transformer_encoder.5} parent=1 // loop_footer_branch
      %11 = sbr.rel target = $region3
    $region8: #{dense_transformer_encoder.5} parent=1 // loop_exit
      _
    %239 = vsyncpa [#allocation3], 1
    %s240 = scalar_lea.sflag [#allocation3], 1
    %241 = vsyncpa %s240, 1

// kernel: dense_transformer_encoder.4
$region0: #{dense_transformer_encoder.4}
  #allocation0 [shape = 'u32[]', space=smem, size = 0x4, offset = 0x4, fixed_abs, tag = 'smem constant byte address 0x4 - core index']
  #allocation1 [shape = 'u32[72,128]{1,0:T(1,128)}', space=vmem, size = 0x9000, scoped, tag = 'internal scratch']
  %s0 = inlined_call_operand.vmem [shape: f32[2,8,64], index: 0, kind: input, shape index: {}]
  %s1 = inlined_call_operand.vmem [shape: bf16[64,192], index: 1, kind: input, shape index: {}]
  %s2 = inlined_call_operand.vmem [shape: f32[1,192], index: 2, kind: input, shape index: {}]
  %s3 = inlined_call_operand.vmem [shape: bf16[64,64], index: 3, kind: input, shape index: {}]
  %s4 = inlined_call_operand.vmem [shape: f32[1,64], index: 4, kind: input, shape index: {}]
  %s5 = inlined_call_operand.vmem [shape: bf16[64,128], index: 5, kind: input, shape index: {}]
  %s6 = inlined_call_operand.vmem [shape: f32[1,128], index: 6, kind: input, shape index: {}]
  %s7 = inlined_call_operand.vmem [shape: bf16[128,64], index: 7, kind: input, shape index: {}]
  %s8 = inlined_call_operand.vmem [shape: f32[1,64], index: 8, kind: input, shape index: {}]
  %s9 = inlined_call_operand.vmem [shape: f32[1,64], index: 9, kind: input, shape index: {}]
  %s10 = inlined_call_operand.hbm [shape: f32[1,64], index: 10, kind: input, shape index: {}]
  %s11 = inlined_call_operand.vmem [shape: f32[1,64], index: 11, kind: input, shape index: {}]
  %s12 = inlined_call_operand.vmem [shape: f32[1,64], index: 12, kind: input, shape index: {}]
  %s13 = inlined_call_operand.vmem [shape: f32[2,8,64], index: 13, kind: output, shape index: {}]
  %s14 = sld [smem:[#allocation0]]
  $region89: #{dense_transformer_encoder.4} parent=0
    _
  %s16 = ssub.s32 1, %s14
  %s17 = scalar_select 0, %s16, %s14
  $region1: #{dense_transformer_encoder.4} parent=0
    #allocation2 [shape = 'u8[512]{0}', space=vmem, size = 0x400, scoped, tag = 'input window, operand 10, single buffered']
    #allocation3 [shape = 's32[2]{0}', space=sflag, size = 0x8, scoped, tag = 'scoped memory for dense_transformer_encoder.4']
    %18 = vsyncpa [#allocation3], 0
    loop: start=0, step=1, limit=4
    $region2: #{dense_transformer_encoder.4} parent=1 // loop_pre_header
      _
    $region3: #{dense_transformer_encoder.4} parent=1 // loop_header
      %s20 = sphi 0, %s24
      %p21 = scmp.ge.s32.totalorder %s20, 4
      %s30 = sphi 0, %s32
      %s33 = sphi 0, %s30
      %s34 = sphi 0, %s33
      %s50 = sphi 0, %s34
      %s54 = sphi 0, %s54
      %s56 = sphi 0, %s54
      %s57 = sphi 0, %s56
      %s71 = sphi 0, %s57
      %s75 = sphi 0, %s75
      %s77 = sphi 0, %s75
      %s78 = sphi 0, %s77
      %s92 = sphi 0, %s78
      %s96 = sphi 0, %s96
      %s98 = sphi 0, %s96
      %s99 = sphi 0, %s98
      %s113 = sphi 0, %s99
      %s117 = sphi 0, %s117
      %s119 = sphi 0, %s117
      %s120 = sphi 0, %s119
      %s134 = sphi 0, %s120
      %s138 = sphi 0, %s138
      %s140 = sphi 0, %s138
      %s141 = sphi 0, %s140
      %s155 = sphi 0, %s141
      %s159 = sphi 0, %s159
      %s161 = sphi 0, %s159
      %s162 = sphi 0, %s161
      %s176 = sphi 0, %s162
      %s180 = sphi 0, %s180
      %s182 = sphi 0, %s180
      %s183 = sphi 0, %s182
      %s197 = sphi 0, %s183
      %s201 = sphi 0, %s201
      %s203 = sphi 0, %s201
      %s204 = sphi 0, %s203
      %s218 = sphi 0, %s204
      %s222 = sphi 0, %s222
      %s224 = sphi 0, %s222
      %s225 = sphi 0, %s224
      %s239 = sphi 0, %s225
      %s243 = sphi 0, %s243
      %s245 = sphi 0, %s243
      %s246 = sphi 0, %s245
      %s260 = sphi 0, %s246
      %s264 = sphi 0, %s264
      %s266 = sphi 0, %s264
      %s267 = sphi 0, %s266
      %s281 = sphi 0, %s267
      %s285 = sphi 0, %s285
      %s287 = sphi 0, %s285
      %s288 = sphi 0, %s287
      %s302 = sphi 0, %s288
      %s308 = sphi 0, %s310
      %s311 = sphi 0, %s308
      %s312 = sphi 0, %s311
      %s328 = sphi 0, %s312
    $region4: #{dense_transformer_encoder.4} parent=1 // loop_header_branch
      %23 = sbr.rel (%p21) target = $region8
    $region5: #{dense_transformer_encoder.4} parent=1 // loop_body
      %s25 = ssub.s32 %s20, 1
      %s26 = ssub.s32 %s20, 2
      %s27 = sadd.s32 %s20, 1
      %s28 = ssub.s32 %s20, %s27
      %p29 = scmp.eq.s32.totalorder %s28, 0
      %s31 = sadd.s32 %s30, 1
      %s32 = scalar_select %p29, %s30, %s31
      %p35 = pneg %p29
      %p36 = scmp.eq.s32.totalorder %s20, 1
      %p37 = por %p35, %p36
      %p38 = scmp.ne.s32.totalorder %s30, %s33
      %p39 = scmp.eq.s32.totalorder %s20, 0
      %p40 = por %p38, %p39
      %p41 = scmp.ne.s32.totalorder %s30, %s33
      %p42 = scmp.eq.s32.totalorder %s25, 1
      %p43 = por %p41, %p42
      %p44 = scmp.ne.s32.totalorder %s33, %s34
      %p45 = scmp.eq.s32.totalorder %s25, 0
      %p46 = por %p44, %p45
      %p47 = scmp.ne.s32.totalorder %s33, %s34
      %p48 = scmp.eq.s32.totalorder %s26, 1
      %p49 = por %p47, %p48
      %p51 = scmp.ne.s32.totalorder %s34, %s50
      %p52 = scmp.eq.s32.totalorder %s26, 0
      %p53 = por %p51, %p52
      %s55 = sadd.s32 %s54, 1
      %p58 = scmp.eq.s32.totalorder %s20, 1
      %p59 = scmp.ne.s32.totalorder %s54, %s56
      %p60 = scmp.eq.s32.totalorder %s20, 0
      %p61 = por %p59, %p60
      %p62 = scmp.ne.s32.totalorder %s54, %s56
      %p63 = scmp.eq.s32.totalorder %s25, 1
      %p64 = por %p62, %p63
      %p65 = scmp.ne.s32.totalorder %s56, %s57
      %p66 = scmp.eq.s32.totalorder %s25, 0
      %p67 = por %p65, %p66
      %p68 = scmp.ne.s32.totalorder %s56, %s57
      %p69 = scmp.eq.s32.totalorder %s26, 1
      %p70 = por %p68, %p69
      %p72 = scmp.ne.s32.totalorder %s57, %s71
      %p73 = scmp.eq.s32.totalorder %s26, 0
      %p74 = por %p72, %p73
      %s76 = sadd.s32 %s75, 1
      %p79 = scmp.eq.s32.totalorder %s20, 1
      %p80 = scmp.ne.s32.totalorder %s75, %s77
      %p81 = scmp.eq.s32.totalorder %s20, 0
      %p82 = por %p80, %p81
      %p83 = scmp.ne.s32.totalorder %s75, %s77
      %p84 = scmp.eq.s32.totalorder %s25, 1
      %p85 = por %p83, %p84
      %p86 = scmp.ne.s32.totalorder %s77, %s78
      %p87 = scmp.eq.s32.totalorder %s25, 0
      %p88 = por %p86, %p87
      %p89 = scmp.ne.s32.totalorder %s77, %s78
      %p90 = scmp.eq.s32.totalorder %s26, 1
      %p91 = por %p89, %p90
      %p93 = scmp.ne.s32.totalorder %s78, %s92
      %p94 = scmp.eq.s32.totalorder %s26, 0
      %p95 = por %p93, %p94
      %s97 = sadd.s32 %s96, 1
      %p100 = scmp.eq.s32.totalorder %s20, 1
      %p101 = scmp.ne.s32.totalorder %s96, %s98
      %p102 = scmp.eq.s32.totalorder %s20, 0
      %p103 = por %p101, %p102
      %p104 = scmp.ne.s32.totalorder %s96, %s98
      %p105 = scmp.eq.s32.totalorder %s25, 1
      %p106 = por %p104, %p105
      %p107 = scmp.ne.s32.totalorder %s98, %s99
      %p108 = scmp.eq.s32.totalorder %s25, 0
      %p109 = por %p107, %p108
      %p110 = scmp.ne.s32.totalorder %s98, %s99
      %p111 = scmp.eq.s32.totalorder %s26, 1
      %p112 = por %p110, %p111
      %p114 = scmp.ne.s32.totalorder %s99, %s113
      %p115 = scmp.eq.s32.totalorder %s26, 0
      %p116 = por %p114, %p115
      %s118 = sadd.s32 %s117, 1
      %p121 = scmp.eq.s32.totalorder %s20, 1
      %p122 = scmp.ne.s32.totalorder %s117, %s119
      %p123 = scmp.eq.s32.totalorder %s20, 0
      %p124 = por %p122, %p123
      %p125 = scmp.ne.s32.totalorder %s117, %s119
      %p126 = scmp.eq.s32.totalorder %s25, 1
      %p127 = por %p125, %p126
      %p128 = scmp.ne.s32.totalorder %s119, %s120
      %p129 = scmp.eq.s32.totalorder %s25, 0
      %p130 = por %p128, %p129
      %p131 = scmp.ne.s32.totalorder %s119, %s120
      %p132 = scmp.eq.s32.totalorder %s26, 1
      %p133 = por %p131, %p132
      %p135 = scmp.ne.s32.totalorder %s120, %s134
      %p136 = scmp.eq.s32.totalorder %s26, 0
      %p137 = por %p135, %p136
      %s139 = sadd.s32 %s138, 1
      %p142 = scmp.eq.s32.totalorder %s20, 1
      %p143 = scmp.ne.s32.totalorder %s138, %s140
      %p144 = scmp.eq.s32.totalorder %s20, 0
      %p145 = por %p143, %p144
      %p146 = scmp.ne.s32.totalorder %s138, %s140
      %p147 = scmp.eq.s32.totalorder %s25, 1
      %p148 = por %p146, %p147
      %p149 = scmp.ne.s32.totalorder %s140, %s141
      %p150 = scmp.eq.s32.totalorder %s25, 0
      %p151 = por %p149, %p150
      %p152 = scmp.ne.s32.totalorder %s140, %s141
      %p153 = scmp.eq.s32.totalorder %s26, 1
      %p154 = por %p152, %p153
      %p156 = scmp.ne.s32.totalorder %s141, %s155
      %p157 = scmp.eq.s32.totalorder %s26, 0
      %p158 = por %p156, %p157
      %s160 = sadd.s32 %s159, 1
      %p163 = scmp.eq.s32.totalorder %s20, 1
      %p164 = scmp.ne.s32.totalorder %s159, %s161
      %p165 = scmp.eq.s32.totalorder %s20, 0
      %p166 = por %p164, %p165
      %p167 = scmp.ne.s32.totalorder %s159, %s161
      %p168 = scmp.eq.s32.totalorder %s25, 1
      %p169 = por %p167, %p168
      %p170 = scmp.ne.s32.totalorder %s161, %s162
      %p171 = scmp.eq.s32.totalorder %s25, 0
      %p172 = por %p170, %p171
      %p173 = scmp.ne.s32.totalorder %s161, %s162
      %p174 = scmp.eq.s32.totalorder %s26, 1
      %p175 = por %p173, %p174
      %p177 = scmp.ne.s32.totalorder %s162, %s176
      %p178 = scmp.eq.s32.totalorder %s26, 0
      %p179 = por %p177, %p178
      %s181 = sadd.s32 %s180, 1
      %p184 = scmp.eq.s32.totalorder %s20, 1
      %p185 = scmp.ne.s32.totalorder %s180, %s182
      %p186 = scmp.eq.s32.totalorder %s20, 0
      %p187 = por %p185, %p186
      %p188 = scmp.ne.s32.totalorder %s180, %s182
      %p189 = scmp.eq.s32.totalorder %s25, 1
      %p190 = por %p188, %p189
      %p191 = scmp.ne.s32.totalorder %s182, %s183
      %p192 = scmp.eq.s32.totalorder %s25, 0
      %p193 = por %p191, %p192
      %p194 = scmp.ne.s32.totalorder %s182, %s183
      %p195 = scmp.eq.s32.totalorder %s26, 1
      %p196 = por %p194, %p195
      %p198 = scmp.ne.s32.totalorder %s183, %s197
      %p199 = scmp.eq.s32.totalorder %s26, 0
      %p200 = por %p198, %p199
      %s202 = sadd.s32 %s201, 1
      %p205 = scmp.eq.s32.totalorder %s20, 1
      %p206 = scmp.ne.s32.totalorder %s201, %s203
      %p207 = scmp.eq.s32.totalorder %s20, 0
      %p208 = por %p206, %p207
      %p209 = scmp.ne.s32.totalorder %s201, %s203
      %p210 = scmp.eq.s32.totalorder %s25, 1
      %p211 = por %p209, %p210
      %p212 = scmp.ne.s32.totalorder %s203, %s204
      %p213 = scmp.eq.s32.totalorder %s25, 0
      %p214 = por %p212, %p213
      %p215 = scmp.ne.s32.totalorder %s203, %s204
      %p216 = scmp.eq.s32.totalorder %s26, 1
      %p217 = por %p215, %p216
      %p219 = scmp.ne.s32.totalorder %s204, %s218
      %p220 = scmp.eq.s32.totalorder %s26, 0
      %p221 = por %p219, %p220
      %s223 = sadd.s32 %s222, 1
      %p226 = scmp.eq.s32.totalorder %s20, 1
      %p227 = scmp.ne.s32.totalorder %s222, %s224
      %p228 = scmp.eq.s32.totalorder %s20, 0
      %p229 = por %p227, %p228
      %p230 = scmp.ne.s32.totalorder %s222, %s224
      %p231 = scmp.eq.s32.totalorder %s25, 1
      %p232 = por %p230, %p231
      %p233 = scmp.ne.s32.totalorder %s224, %s225
      %p234 = scmp.eq.s32.totalorder %s25, 0
      %p235 = por %p233, %p234
      %p236 = scmp.ne.s32.totalorder %s224, %s225
      %p237 = scmp.eq.s32.totalorder %s26, 1
      %p238 = por %p236, %p237
      %p240 = scmp.ne.s32.totalorder %s225, %s239
      %p241 = scmp.eq.s32.totalorder %s26, 0
      %p242 = por %p240, %p241
      %s244 = sadd.s32 %s243, 1
      %p247 = scmp.eq.s32.totalorder %s20, 1
      %p248 = scmp.ne.s32.totalorder %s243, %s245
      %p249 = scmp.eq.s32.totalorder %s20, 0
      %p250 = por %p248, %p249
      %p251 = scmp.ne.s32.totalorder %s243, %s245
      %p252 = scmp.eq.s32.totalorder %s25, 1
      %p253 = por %p251, %p252
      %p254 = scmp.ne.s32.totalorder %s245, %s246
      %p255 = scmp.eq.s32.totalorder %s25, 0
      %p256 = por %p254, %p255
      %p257 = scmp.ne.s32.totalorder %s245, %s246
      %p258 = scmp.eq.s32.totalorder %s26, 1
      %p259 = por %p257, %p258
      %p261 = scmp.ne.s32.totalorder %s246, %s260
      %p262 = scmp.eq.s32.totalorder %s26, 0
      %p263 = por %p261, %p262
      %s265 = sadd.s32 %s264, 1
      %p268 = scmp.eq.s32.totalorder %s20, 1
      %p269 = scmp.ne.s32.totalorder %s264, %s266
      %p270 = scmp.eq.s32.totalorder %s20, 0
      %p271 = por %p269, %p270
      %p272 = scmp.ne.s32.totalorder %s264, %s266
      %p273 = scmp.eq.s32.totalorder %s25, 1
      %p274 = por %p272, %p273
      %p275 = scmp.ne.s32.totalorder %s266, %s267
      %p276 = scmp.eq.s32.totalorder %s25, 0
      %p277 = por %p275, %p276
      %p278 = scmp.ne.s32.totalorder %s266, %s267
      %p279 = scmp.eq.s32.totalorder %s26, 1
      %p280 = por %p278, %p279
      %p282 = scmp.ne.s32.totalorder %s267, %s281
      %p283 = scmp.eq.s32.totalorder %s26, 0
      %p284 = por %p282, %p283
      %s286 = sadd.s32 %s285, 1
      %p289 = scmp.eq.s32.totalorder %s20, 1
      %p290 = scmp.ne.s32.totalorder %s285, %s287
      %p291 = scmp.eq.s32.totalorder %s20, 0
      %p292 = por %p290, %p291
      %p293 = scmp.ne.s32.totalorder %s285, %s287
      %p294 = scmp.eq.s32.totalorder %s25, 1
      %p295 = por %p293, %p294
      %p296 = scmp.ne.s32.totalorder %s287, %s288
      %p297 = scmp.eq.s32.totalorder %s25, 0
      %p298 = por %p296, %p297
      %p299 = scmp.ne.s32.totalorder %s287, %s288
      %p300 = scmp.eq.s32.totalorder %s26, 1
      %p301 = por %p299, %p300
      %p303 = scmp.ne.s32.totalorder %s288, %s302
      %p304 = scmp.eq.s32.totalorder %s26, 0
      %p305 = por %p303, %p304
      %s306 = ssub.s32 %s20, %s27
      %p307 = scmp.eq.s32.totalorder %s306, 0
      %s309 = sadd.s32 %s308, 1
      %s310 = scalar_select %p307, %s308, %s309
      %p313 = pneg %p307
      %p314 = scmp.eq.s32.totalorder %s20, 1
      %p315 = por %p313, %p314
      %p316 = scmp.ne.s32.totalorder %s308, %s311
      %p317 = scmp.eq.s32.totalorder %s20, 0
      %p318 = por %p316, %p317
      %p319 = scmp.ne.s32.totalorder %s308, %s311
      %p320 = scmp.eq.s32.totalorder %s25, 1
      %p321 = por %p319, %p320
      %p322 = scmp.ne.s32.totalorder %s311, %s312
      %p323 = scmp.eq.s32.totalorder %s25, 0
      %p324 = por %p322, %p323
      %p325 = scmp.ne.s32.totalorder %s311, %s312
      %p326 = scmp.eq.s32.totalorder %s26, 1
      %p327 = por %p325, %p326
      %p329 = scmp.ne.s32.totalorder %s312, %s328
      %p330 = scmp.eq.s32.totalorder %s26, 0
      %p331 = por %p329, %p330
      %p332 = scmp.le.s32.totalorder 1, %s20
      %p333 = scmp.lt.s32.totalorder %s20, 3
      %p334 = pnand %p332, %p333
      %p335 = pneg %p334
      // Predicated region
      $region9: #{dense_transformer_encoder.4} parent=5 // pred_check
        _
      $region10: #{dense_transformer_encoder.4} parent=5 // pred_check_branch
        %337 = sbr.rel (%p334) target = $region12
      $region11: #{dense_transformer_encoder.4} parent=5 // pred_region
        %s338 = ssub.s32 %s20, 1
        // Predicated region
        $region13: #{dense_transformer_encoder.4} parent=11 // pred_check
          %p339 = pneg %p67
        $region14: #{dense_transformer_encoder.4} parent=11 // pred_check_branch
          %341 = sbr.rel (%p339) target = $region16
        $region15: #{dense_transformer_encoder.4} parent=11 // pred_region
          _
        $region16: #{dense_transformer_encoder.4} parent=11 // pred_fallthru
          _
        // Predicated region
        $region17: #{dense_transformer_encoder.4} parent=11 // pred_check
          %p342 = pneg %p88
        $region18: #{dense_transformer_encoder.4} parent=11 // pred_check_branch
          %344 = sbr.rel (%p342) target = $region20
        $region19: #{dense_transformer_encoder.4} parent=11 // pred_region
          _
        $region20: #{dense_transformer_encoder.4} parent=11 // pred_fallthru
          _
        // Predicated region
        $region21: #{dense_transformer_encoder.4} parent=11 // pred_check
          %p345 = pneg %p109
        $region22: #{dense_transformer_encoder.4} parent=11 // pred_check_branch
          %347 = sbr.rel (%p345) target = $region24
        $region23: #{dense_transformer_encoder.4} parent=11 // pred_region
          _
        $region24: #{dense_transformer_encoder.4} parent=11 // pred_fallthru
          _
        // Predicated region
        $region25: #{dense_transformer_encoder.4} parent=11 // pred_check
          %p348 = pneg %p130
        $region26: #{dense_transformer_encoder.4} parent=11 // pred_check_branch
          %350 = sbr.rel (%p348) target = $region28
        $region27: #{dense_transformer_encoder.4} parent=11 // pred_region
          _
        $region28: #{dense_transformer_encoder.4} parent=11 // pred_fallthru
          _
        // Predicated region
        $region29: #{dense_transformer_encoder.4} parent=11 // pred_check
          %p351 = pneg %p151
        $region30: #{dense_transformer_encoder.4} parent=11 // pred_check_branch
          %353 = sbr.rel (%p351) target = $region32
        $region31: #{dense_transformer_encoder.4} parent=11 // pred_region
          _
        $region32: #{dense_transformer_encoder.4} parent=11 // pred_fallthru
          _
        // Predicated region
        $region33: #{dense_transformer_encoder.4} parent=11 // pred_check
          %p354 = pneg %p172
        $region34: #{dense_transformer_encoder.4} parent=11 // pred_check_branch
          %356 = sbr.rel (%p354) target = $region36
        $region35: #{dense_transformer_encoder.4} parent=11 // pred_region
          _
        $region36: #{dense_transformer_encoder.4} parent=11 // pred_fallthru
          _
        // Predicated region
        $region37: #{dense_transformer_encoder.4} parent=11 // pred_check
          %p357 = pneg %p193
        $region38: #{dense_transformer_encoder.4} parent=11 // pred_check_branch
          %359 = sbr.rel (%p357) target = $region40
        $region39: #{dense_transformer_encoder.4} parent=11 // pred_region
          _
        $region40: #{dense_transformer_encoder.4} parent=11 // pred_fallthru
          _
        // Predicated region
        $region41: #{dense_transformer_encoder.4} parent=11 // pred_check
          %p360 = pneg %p214
        $region42: #{dense_transformer_encoder.4} parent=11 // pred_check_branch
          %362 = sbr.rel (%p360) target = $region44
        $region43: #{dense_transformer_encoder.4} parent=11 // pred_region
          _
        $region44: #{dense_transformer_encoder.4} parent=11 // pred_fallthru
          _
        // Predicated region
        $region45: #{dense_transformer_encoder.4} parent=11 // pred_check
          %p363 = pneg %p235
        $region46: #{dense_transformer_encoder.4} parent=11 // pred_check_branch
          %365 = sbr.rel (%p363) target = $region48
        $region47: #{dense_transformer_encoder.4} parent=11 // pred_region
          _
        $region48: #{dense_transformer_encoder.4} parent=11 // pred_fallthru
          _
        // Predicated region
        $region49: #{dense_transformer_encoder.4} parent=11 // pred_check
          %p366 = pneg %p256
        $region50: #{dense_transformer_encoder.4} parent=11 // pred_check_branch
          %368 = sbr.rel (%p366) target = $region52
        $region51: #{dense_transformer_encoder.4} parent=11 // pred_region
          %370 = vsyncadd [#allocation3], 0
          %s372 = sshll.u32 %s10, 4
          %s373 = int_to_ptr.hbm [resolvable:$true] %s372
          %s374 = sshll.u32 [#allocation2], 4
          %s375 = int_to_ptr.vmem [resolvable:$true] %s374
          %377 = dma.hbm_to_vmem [thread:$0]  %s373, 16, %s375, [#allocation3]
        $region52: #{dense_transformer_encoder.4} parent=11 // pred_fallthru
          _
        // Predicated region
        $region53: #{dense_transformer_encoder.4} parent=11 // pred_check
          %p378 = pneg %p277
        $region54: #{dense_transformer_encoder.4} parent=11 // pred_check_branch
          %380 = sbr.rel (%p378) target = $region56
        $region55: #{dense_transformer_encoder.4} parent=11 // pred_region
          _
        $region56: #{dense_transformer_encoder.4} parent=11 // pred_fallthru
          _
        // Predicated region
        $region57: #{dense_transformer_encoder.4} parent=11 // pred_check
          %p381 = pneg %p298
        $region58: #{dense_transformer_encoder.4} parent=11 // pred_check_branch
          %383 = sbr.rel (%p381) target = $region60
        $region59: #{dense_transformer_encoder.4} parent=11 // pred_region
          _
        $region60: #{dense_transformer_encoder.4} parent=11 // pred_fallthru
          _
      $region12: #{dense_transformer_encoder.4} parent=5 // pred_fallthru
        _
      %p384 = scmp.lt.s32.totalorder %s20, 2
      // Predicated region
      $region61: #{dense_transformer_encoder.4} parent=5 // pred_check
        %p385 = pneg %p384
      $region62: #{dense_transformer_encoder.4} parent=5 // pred_check_branch
        %387 = sbr.rel (%p385) target = $region64
      $region63: #{dense_transformer_encoder.4} parent=5 // pred_region
        // Predicated region
        $region65: #{dense_transformer_encoder.4} parent=63 // pred_check
          %p388 = pneg %p40
        $region66: #{dense_transformer_encoder.4} parent=63 // pred_check_branch
          %390 = sbr.rel (%p388) target = $region68
        $region67: #{dense_transformer_encoder.4} parent=63 // pred_region
          %p391 = scmp.lt.s32.totalorder %s20, 1
          %s392 = scalar_select %p391, %s20, 1
          %s393 = smul.addr %s392, 8
          %s394 = scalar_lea.vmem %s0, %s393
        $region68: #{dense_transformer_encoder.4} parent=63 // pred_fallthru
          _
      $region64: #{dense_transformer_encoder.4} parent=5 // pred_fallthru
        _
      %p395 = scmp.le.s32.totalorder 1, %s20
      %p396 = scmp.lt.s32.totalorder %s20, 3
      %p397 = pnand %p395, %p396
      %p398 = pneg %p397
      // Predicated region
      $region69: #{dense_transformer_encoder.4} parent=5 // pred_check
        _
      $region70: #{dense_transformer_encoder.4} parent=5 // pred_check_branch
        %400 = sbr.rel (%p397) target = $region72
      $region71: #{dense_transformer_encoder.4} parent=5 // pred_region
        %s401 = ssub.s32 %s20, 1
        // Predicated region
        $region73: #{dense_transformer_encoder.4} parent=71 // pred_check
          %p402 = pneg %p256
        $region74: #{dense_transformer_encoder.4} parent=71 // pred_check_branch
          %404 = sbr.rel (%p402) target = $region76
        $region75: #{dense_transformer_encoder.4} parent=71 // pred_region
          %406 = dma.done [#allocation3], 16
        $region76: #{dense_transformer_encoder.4} parent=71 // pred_fallthru
          _
        %p407 = scmp.lt.s32.totalorder %s25, 1
        %s408 = scalar_select %p407, %s25, 1
        %s409 = smul.addr %s408, 8
        %s410 = scalar_lea.vmem %s0, %s409
        %p411 = pneg %p46
        %p412 = pneg %p43
        %p413 = pneg %p67
        %p414 = pneg %p64
        %p415 = pneg %p88
        %p416 = pneg %p85
        %p417 = pneg %p109
        %p418 = pneg %p106
        %p419 = pneg %p130
        %p420 = pneg %p127
        %p421 = pneg %p151
        %p422 = pneg %p148
        %p423 = pneg %p172
        %p424 = pneg %p169
        %p425 = pneg %p193
        %p426 = pneg %p190
        %p427 = pneg %p214
        %p428 = pneg %p211
        %p429 = pneg %p235
        %p430 = pneg %p232
        %p431 = pneg %p256
        %p432 = pneg %p253
        %p433 = pneg %p277
        %p434 = pneg %p274
        %p435 = pneg %p298
        %p436 = pneg %p295
        %p437 = pneg %p324
        %p438 = pneg %p321
        %p439 = scmp.lt.s32.totalorder %s25, 1
        %s440 = scalar_select %p439, %s25, 1
        %s441 = smul.addr %s440, 8
        %s442 = scalar_lea.vmem %s13, %s441
        %p443 = scmp.lt.s32.totalorder %s25, 1
        %s444 = scalar_select %p443, %s25, 1
        %s445 = smul.addr %s444, 8
        %s446 = scalar_lea.vmem %s0, %s445
        %p447 = scmp.lt.s32.totalorder %s25, 1
        %s448 = scalar_select %p447, %s25, 1
        %s449 = smul.addr %s448, 8
        %s450 = scalar_lea.vmem %s13, %s449
        %v452 = vld [vmem:[%s446] sm:$0xff]
        %v453 = vpack.c.bf16 %v452, %v452
        %v454 = vld [vmem:[%s1] sm:$0xff]
        %v455 = vld [vmem:[%s1 + $0x8] sm:$0xff]
        %v456 = vld [vmem:[%s1 + $0x10] sm:$0xff]
        %v457 = vld [vmem:[%s1 + $0x18] sm:$0xff]
        %v458 = vld [vmem:[%s1 + $0x20] sm:$0xff]
        %v459 = vld [vmem:[%s1 + $0x28] sm:$0xff]
        %v460 = vld [vmem:[%s1 + $0x30] sm:$0xff]
        %v461 = vld [vmem:[%s1 + $0x38] sm:$0xff]
        %v462 = vld [vmem:[%s2] sm:$0x3]
        %v464 = vperm.slane %v462, 0
        %v465 = vperm.slane %v462, 1
        %v476 = vunpack.c.l.b16 %v454
        %v477 = vunpack.c.h.b16 %v454
        %v478 = vunpack.c.l.b16 %v455
        %v479 = vunpack.c.h.b16 %v455
        %v480 = vunpack.c.l.b16 %v456
        %v481 = vunpack.c.h.b16 %v456
        %v482 = vunpack.c.l.b16 %v457
        %v483 = vunpack.c.h.b16 %v457
        %v484 = vunpack.c.l.b16 %v458
        %v485 = vunpack.c.h.b16 %v458
        %v486 = vunpack.c.l.b16 %v459
        %v487 = vunpack.c.h.b16 %v459
        %v488 = vunpack.c.l.b16 %v460
        %v489 = vunpack.c.h.b16 %v460
        %v490 = vunpack.c.l.b16 %v461
        %v491 = vunpack.c.h.b16 %v461
        %v492 = vpack.c.b16 %v478, %v476
        %v493 = vpack.c.b16 %v479, %v477
        %v494 = vpack.c.b16 %v482, %v480
        %v495 = vpack.c.b16 %v483, %v481
        %v496 = vpack.c.b16 %v486, %v484
        %v497 = vpack.c.b16 %v487, %v485
        %v498 = vpack.c.b16 %v490, %v488
        %v499 = vpack.c.b16 %v491, %v489
        %vm508 = vcmask 523264
        %v510 = vsel %vm508, %v453, 0
        %512 = vmatpush.bf16.msra.mxu0 0
        %513 = vmatpush.bf16.msra.mxu0 0
        %514 = vmatpush.bf16.msra.mxu0 0
        %515 = vmatpush.bf16.msra.mxu0 0
        %516 = vmatpush.bf16.msra.mxu0 %v498
        %517 = vmatpush.bf16.msra.mxu0 %v496
        %518 = vmatpush.bf16.msra.mxu0 %v494
        %519 = vmatpush.bf16.msra.mxu0 %v492
        %520 = vmatmul.bf16.gmra.mxu0 %v510
        %v521 = vpop.f32.mrf.mxu0
        %v522 = vadd.f32 %v464, %v521
        %v523 = vpop.f32.mrf.mxu0
        %524 = vdwg.mxu0
        %525 = vmatpush.bf16.msra.mxu0 0
        %526 = vmatpush.bf16.msra.mxu0 0
        %527 = vmatpush.bf16.msra.mxu0 0
        %528 = vmatpush.bf16.msra.mxu0 0
        %529 = vmatpush.bf16.msra.mxu0 %v499
        %530 = vmatpush.bf16.msra.mxu0 %v497
        %531 = vmatpush.bf16.msra.mxu0 %v495
        %532 = vmatpush.bf16.msra.mxu0 %v493
        %533 = vmatmul.bf16.gmra.mxu0 %v510
        %v534 = vpop.f32.mrf.mxu0
        %v535 = vadd.f32 %v465, %v534
        %v536 = vpop.f32.mrf.mxu0
        %537 = vdwg.mxu0
        %v538 = vmul.f32 %v522, 0.25
        %v539 = vpack.c.bf16 %v538, %v538
        %v540 = vpack.c.bf16 %v522, %v522
        %v541 = vpack.c.bf16 %v535, %v535
        %543 = vrot.lane.b32.xlu0 %v540, 64
        %v544 = vpop.permute.xlu0 %543
        %vm545 = vcmask 130048
        %v547 = vsel %vm545, %v539, 0
        %v550 = vsel %vm545, %v544, 0
        %552 = vmatpush.bf16.xpose.msra.mxu0 0
        %553 = vmatpush.bf16.xpose.msra.mxu0 0
        %554 = vmatpush.bf16.xpose.msra.mxu0 0
        %555 = vmatpush.bf16.xpose.msra.mxu0 0
        %556 = vmatpush.bf16.xpose.msra.mxu0 0
        %557 = vmatpush.bf16.xpose.msra.mxu0 0
        %558 = vmatpush.bf16.xpose.msra.mxu0 0
        %559 = vmatpush.bf16.xpose.msra.mxu0 %v550
        %560 = vmatmul.bf16.gmra.mxu0 %v547
        %v561 = vpop.f32.mrf.mxu0
        %v562 = vadd.f32 0.0, %v561
        %v563 = vpop.f32.mrf.mxu0
        %564 = vdwg.mxu0
        %vm565 = vcmask 64512
        %v566 = vsel %vm565, %v562, -inf
        %567 = vmax.xlane.f32.xlu0 %v566
        %v568 = vpop.xlane.xlu0 %567
        %v569 = vsub.f32 %v562, %v568
        %v570 = vmul.f32 %v569, 1.442695
        %v571 = vpow.pop %v570
        %v572 = vsel %vm565, %v571, 0.0
        %573 = vadd.xlane.f32.xlu0 %v572
        %v574 = vpop.xlane.xlu0 %573
        %v575 = vrcp.pop %v574
        %v576 = vmul.f32 %v571, %v575
        %v577 = vpack.c.bf16 %v576, %v576
        %v579 = vsel %vm565, %v577, 0
        %vm581 = vcmask 1043456
        %v583 = vsel %vm581, %v541, 0
        %585 = vmatpush.bf16.msra.mxu0 0
        %586 = vmatpush.bf16.msra.mxu0 0
        %587 = vmatpush.bf16.msra.mxu0 0
        %588 = vmatpush.bf16.msra.mxu0 0
        %589 = vmatpush.bf16.msra.mxu0 0
        %590 = vmatpush.bf16.msra.mxu0 0
        %591 = vmatpush.bf16.msra.mxu0 0
        %592 = vmatpush.bf16.msra.mxu0 %v583
        %593 = vmatmul.bf16.gmra.mxu0 %v579
        %v594 = vpop.f32.mrf.mxu0
        %v595 = vadd.f32 0.0, %v594
        %v596 = vpop.f32.mrf.mxu0
        %597 = vdwg.mxu0
        %599 = vrot.lane.b32.xlu0 %v539, 112
        %v600 = vpop.permute.xlu0 %599
        %601 = vrot.lane.b32.xlu0 %v540, 48
        %v602 = vpop.permute.xlu0 %601
        %v604 = vsel %vm545, %v600, 0
        %v607 = vsel %vm545, %v602, 0
        %609 = vmatpush.bf16.xpose.msra.mxu0 0
        %610 = vmatpush.bf16.xpose.msra.mxu0 0
        %611 = vmatpush.bf16.xpose.msra.mxu0 0
        %612 = vmatpush.bf16.xpose.msra.mxu0 0
        %613 = vmatpush.bf16.xpose.msra.mxu0 0
        %614 = vmatpush.bf16.xpose.msra.mxu0 0
        %615 = vmatpush.bf16.xpose.msra.mxu0 0
        %616 = vmatpush.bf16.xpose.msra.mxu0 %v607
        %617 = vmatmul.bf16.gmra.mxu0 %v604
        %v618 = vpop.f32.mrf.mxu0
        %v619 = vadd.f32 0.0, %v618
        %v620 = vpop.f32.mrf.mxu0
        %621 = vdwg.mxu0
        %v622 = vsel %vm565, %v619, -inf
        %623 = vmax.xlane.f32.xlu0 %v622
        %v624 = vpop.xlane.xlu0 %623
        %v625 = vsub.f32 %v619, %v624
        %v626 = vmul.f32 %v625, 1.442695
        %v627 = vpow.pop %v626
        %v628 = vsel %vm565, %v627, 0.0
        %629 = vadd.xlane.f32.xlu0 %v628
        %v630 = vpop.xlane.xlu0 %629
        %v631 = vrcp.pop %v630
        %v632 = vmul.f32 %v627, %v631
        %v633 = vpack.c.bf16 %v632, %v632
        %635 = vrot.lane.b32.xlu0 %v541, 112
        %v636 = vpop.permute.xlu0 %635
        %v638 = vsel %vm565, %v633, 0
        %v641 = vsel %vm581, %v636, 0
        %643 = vmatpush.bf16.msra.mxu0 0
        %644 = vmatpush.bf16.msra.mxu0 0
        %645 = vmatpush.bf16.msra.mxu0 0
        %646 = vmatpush.bf16.msra.mxu0 0
        %647 = vmatpush.bf16.msra.mxu0 0
        %648 = vmatpush.bf16.msra.mxu0 0
        %649 = vmatpush.bf16.msra.mxu0 0
        %650 = vmatpush.bf16.msra.mxu0 %v641
        %651 = vmatmul.bf16.gmra.mxu0 %v638
        %v652 = vpop.f32.mrf.mxu0
        %v653 = vadd.f32 0.0, %v652
        %v654 = vpop.f32.mrf.mxu0
        %655 = vdwg.mxu0
        %656 = vrot.lane.b32.xlu0 %v539, 96
        %v657 = vpop.permute.xlu0 %656
        %658 = vrot.lane.b32.xlu0 %v540, 32
        %v659 = vpop.permute.xlu0 %658
        %v661 = vsel %vm545, %v657, 0
        %v664 = vsel %vm545, %v659, 0
        %666 = vmatpush.bf16.xpose.msra.mxu0 0
        %667 = vmatpush.bf16.xpose.msra.mxu0 0
        %668 = vmatpush.bf16.xpose.msra.mxu0 0
        %669 = vmatpush.bf16.xpose.msra.mxu0 0
        %670 = vmatpush.bf16.xpose.msra.mxu0 0
        %671 = vmatpush.bf16.xpose.msra.mxu0 0
        %672 = vmatpush.bf16.xpose.msra.mxu0 0
        %673 = vmatpush.bf16.xpose.msra.mxu0 %v664
        %674 = vmatmul.bf16.gmra.mxu0 %v661
        %v675 = vpop.f32.mrf.mxu0
        %v676 = vadd.f32 0.0, %v675
        %v677 = vpop.f32.mrf.mxu0
        %678 = vdwg.mxu0
        %v679 = vsel %vm565, %v676, -inf
        %680 = vmax.xlane.f32.xlu0 %v679
        %v681 = vpop.xlane.xlu0 %680
        %v682 = vsub.f32 %v676, %v681
        %v683 = vmul.f32 %v682, 1.442695
        %v684 = vpow.pop %v683
        %v685 = vsel %vm565, %v684, 0.0
        %686 = vadd.xlane.f32.xlu0 %v685
        %v687 = vpop.xlane.xlu0 %686
        %v688 = vrcp.pop %v687
        %v689 = vmul.f32 %v684, %v688
        %v690 = vpack.c.bf16 %v689, %v689
        %691 = vrot.lane.b32.xlu0 %v541, 96
        %v692 = vpop.permute.xlu0 %691
        %v694 = vsel %vm565, %v690, 0
        %v697 = vsel %vm581, %v692, 0
        %699 = vmatpush.bf16.msra.mxu0 0
        %700 = vmatpush.bf16.msra.mxu0 0
        %701 = vmatpush.bf16.msra.mxu0 0
        %702 = vmatpush.bf16.msra.mxu0 0
        %703 = vmatpush.bf16.msra.mxu0 0
        %704 = vmatpush.bf16.msra.mxu0 0
        %705 = vmatpush.bf16.msra.mxu0 0
        %706 = vmatpush.bf16.msra.mxu0 %v697
        %707 = vmatmul.bf16.gmra.mxu0 %v694
        %v708 = vpop.f32.mrf.mxu0
        %v709 = vadd.f32 0.0, %v708
        %v710 = vpop.f32.mrf.mxu0
        %711 = vdwg.mxu0
        %712 = vrot.lane.b32.xlu0 %v539, 80
        %v713 = vpop.permute.xlu0 %712
        %714 = vrot.lane.b32.xlu0 %v540, 16
        %v715 = vpop.permute.xlu0 %714
        %v717 = vsel %vm545, %v713, 0
        %v720 = vsel %vm545, %v715, 0
        %722 = vmatpush.bf16.xpose.msra.mxu0 0
        %723 = vmatpush.bf16.xpose.msra.mxu0 0
        %724 = vmatpush.bf16.xpose.msra.mxu0 0
        %725 = vmatpush.bf16.xpose.msra.mxu0 0
        %726 = vmatpush.bf16.xpose.msra.mxu0 0
        %727 = vmatpush.bf16.xpose.msra.mxu0 0
        %728 = vmatpush.bf16.xpose.msra.mxu0 0
        %729 = vmatpush.bf16.xpose.msra.mxu0 %v720
        %730 = vmatmul.bf16.gmra.mxu0 %v717
        %v731 = vpop.f32.mrf.mxu0
        %v732 = vadd.f32 0.0, %v731
        %v733 = vpop.f32.mrf.mxu0
        %734 = vdwg.mxu0
        %v735 = vsel %vm565, %v732, -inf
        %736 = vmax.xlane.f32.xlu0 %v735
        %v737 = vpop.xlane.xlu0 %736
        %v738 = vsub.f32 %v732, %v737
        %v739 = vmul.f32 %v738, 1.442695
        %v740 = vpow.pop %v739
        %v741 = vsel %vm565, %v740, 0.0
        %742 = vadd.xlane.f32.xlu0 %v741
        %v743 = vpop.xlane.xlu0 %742
        %v744 = vrcp.pop %v743
        %v745 = vmul.f32 %v740, %v744
        %v746 = vpack.c.bf16 %v745, %v745
        %747 = vrot.lane.b32.xlu0 %v541, 80
        %v748 = vpop.permute.xlu0 %747
        %v750 = vsel %vm565, %v746, 0
        %v753 = vsel %vm581, %v748, 0
        %755 = vmatpush.bf16.msra.mxu0 0
        %756 = vmatpush.bf16.msra.mxu0 0
        %757 = vmatpush.bf16.msra.mxu0 0
        %758 = vmatpush.bf16.msra.mxu0 0
        %759 = vmatpush.bf16.msra.mxu0 0
        %760 = vmatpush.bf16.msra.mxu0 0
        %761 = vmatpush.bf16.msra.mxu0 0
        %762 = vmatpush.bf16.msra.mxu0 %v753
        %763 = vmatmul.bf16.gmra.mxu0 %v750
        %v764 = vpop.f32.mrf.mxu0
        %v765 = vadd.f32 0.0, %v764
        %v766 = vpop.f32.mrf.mxu0
        %767 = vdwg.mxu0
        %769 = vrot.lane.b32.xlu0 %v653, 16
        %v770 = vpop.permute.xlu0 %769
        %773 = vrot.lane.b32.xlu0 %v709, 32
        %v774 = vpop.permute.xlu0 %773
        %777 = vrot.lane.b32.xlu0 %v765, 48
        %v778 = vpop.permute.xlu0 %777
        %v780 = vsel %vm545, %v595, %v770
        %vm781 = vcmask 261120
        %v782 = vsel %vm781, %v780, %v774
        %vm783 = vcmask 392192
        %v784 = vsel %vm783, %v782, %v778
        %v785 = vpack.c.bf16 %v784, %v784
        %v786 = vld [vmem:[%s3] sm:$0xf]
        %v787 = vld [vmem:[%s3 + $0x4] sm:$0xf]
        %v788 = vld [vmem:[%s3 + $0x8] sm:$0xf]
        %v789 = vld [vmem:[%s3 + $0xc] sm:$0xf]
        %v790 = vld [vmem:[%s3 + $0x10] sm:$0xf]
        %v791 = vld [vmem:[%s3 + $0x14] sm:$0xf]
        %v792 = vld [vmem:[%s3 + $0x18] sm:$0xf]
        %v793 = vld [vmem:[%s3 + $0x1c] sm:$0xf]
        %v794 = vld [vmem:[%s4] sm:$0x1]
        %v796 = vperm.slane %v794, 0
        %v806 = vunpack.c.l.b16 %v786
        %v807 = vunpack.c.l.b16 %v787
        %v808 = vunpack.c.l.b16 %v788
        %v809 = vunpack.c.l.b16 %v789
        %v810 = vunpack.c.l.b16 %v790
        %v811 = vunpack.c.l.b16 %v791
        %v812 = vunpack.c.l.b16 %v792
        %v813 = vunpack.c.l.b16 %v793
        %v814 = vpack.c.b16 %v807, %v806
        %v815 = vpack.c.b16 %v809, %v808
        %v816 = vpack.c.b16 %v811, %v810
        %v817 = vpack.c.b16 %v813, %v812
        %v823 = vsel %vm508, %v785, 0
        %825 = vmatpush.bf16.msra.mxu0 0
        %826 = vmatpush.bf16.msra.mxu0 0
        %827 = vmatpush.bf16.msra.mxu0 0
        %828 = vmatpush.bf16.msra.mxu0 0
        %829 = vmatpush.bf16.msra.mxu0 %v817
        %830 = vmatpush.bf16.msra.mxu0 %v816
        %831 = vmatpush.bf16.msra.mxu0 %v815
        %832 = vmatpush.bf16.msra.mxu0 %v814
        %833 = vmatmul.bf16.gmra.mxu0 %v823
        %v834 = vpop.f32.mrf.mxu0
        %v835 = vadd.f32 %v796, %v834
        %v836 = vpop.f32.mrf.mxu0
        %837 = vdwg.mxu0
        %v838 = vadd.f32 %v452, %v835
        %v839 = vld [vmem:[%s9] sm:$0x1]
        %v840 = vld [vmem:[#allocation2] sm:$0x1]
        %v841 = vsel %vm508, %v838, 0.0
        %842 = vadd.xlane.f32.xlu0 %v841
        %v843 = vpop.xlane.xlu0 %842
        %v844 = vrcp.pop 64.0
        %v845 = vmul.f32 64.0, %v844
        %v846 = vsub.f32 1.0, %v845
        %v847 = vmul.f32 %v844, %v846
        %v848 = vadd.f32 %v844, %v847
        %vm849 = vweird.f32 %v844
        %v850 = vsel %vm849, %v844, %v848
        %v851 = vmul.f32 %v843, %v850
        %v852 = vsub.f32 %v838, %v851
        %v853 = vmul.f32 %v852, %v852
        %v854 = vsel %vm508, %v853, 0.0
        %855 = vadd.xlane.f32.xlu0 %v854
        %v856 = vpop.xlane.xlu0 %855
        %v857 = vmul.f32 %v856, %v850
        %v858 = vadd.f32 %v857, 1e-05
        %v859 = vrsqrt.pop %v858
        %v860 = vmul.f32 %v859, %v858
        %v861 = vmul.f32 %v860, %v859
        %v862 = vmul.f32 0.5, %v861
        %v863 = vsub.f32 1.5, %v862
        %v864 = vmul.f32 %v859, %v863
        %vm865 = vweird.f32 %v858
        %vm866 = vweird.f32 %v859
        %vm867 = vmor %vm865, %vm866
        %v868 = vsel %vm867, %v859, %v864
        %v869 = vmul.f32 %v852, %v868
        %v871 = vperm.slane %v839, 0
        %v873 = vmul.f32 %v869, %v871
        %v875 = vperm.slane %v840, 0
        %v877 = vadd.f32 %v873, %v875
        %v878 = vpack.c.bf16 %v877, %v877
        %v879 = vld [vmem:[%s5] sm:$0xf]
        %v880 = vld [vmem:[%s5 + $0x4] sm:$0xf]
        %v881 = vld [vmem:[%s5 + $0x8] sm:$0xf]
        %v882 = vld [vmem:[%s5 + $0xc] sm:$0xf]
        %v883 = vld [vmem:[%s5 + $0x10] sm:$0xf]
        %v884 = vld [vmem:[%s5 + $0x14] sm:$0xf]
        %v885 = vld [vmem:[%s5 + $0x18] sm:$0xf]
        %v886 = vld [vmem:[%s5 + $0x1c] sm:$0xf]
        %v887 = vld [vmem:[%s6] sm:$0x1]
        %v889 = vperm.slane %v887, 0
        %v899 = vunpack.c.l.b16 %v879
        %v900 = vunpack.c.l.b16 %v880
        %v901 = vunpack.c.l.b16 %v881
        %v902 = vunpack.c.l.b16 %v882
        %v903 = vunpack.c.l.b16 %v883
        %v904 = vunpack.c.l.b16 %v884
        %v905 = vunpack.c.l.b16 %v885
        %v906 = vunpack.c.l.b16 %v886
        %v907 = vpack.c.b16 %v900, %v899
        %v908 = vpack.c.b16 %v902, %v901
        %v909 = vpack.c.b16 %v904, %v903
        %v910 = vpack.c.b16 %v906, %v905
        %v916 = vsel %vm508, %v878, 0
        %918 = vmatpush.bf16.msra.mxu0 0
        %919 = vmatpush.bf16.msra.mxu0 0
        %920 = vmatpush.bf16.msra.mxu0 0
        %921 = vmatpush.bf16.msra.mxu0 0
        %922 = vmatpush.bf16.msra.mxu0 %v910
        %923 = vmatpush.bf16.msra.mxu0 %v909
        %924 = vmatpush.bf16.msra.mxu0 %v908
        %925 = vmatpush.bf16.msra.mxu0 %v907
        %926 = vmatmul.bf16.gmra.mxu0 %v916
        %v927 = vpop.f32.mrf.mxu0
        %v928 = vadd.f32 %v889, %v927
        %v929 = vpop.f32.mrf.mxu0
        %930 = vdwg.mxu0
        %v931 = vmax.f32 %v928, 0.0
        %v932 = vpack.c.bf16 %v931, %v931
        %v933 = vld [vmem:[%s7] sm:$0xf]
        %v934 = vld [vmem:[%s7 + $0x4] sm:$0xf]
        %v935 = vld [vmem:[%s7 + $0x8] sm:$0xf]
        %v936 = vld [vmem:[%s7 + $0xc] sm:$0xf]
        %v937 = vld [vmem:[%s7 + $0x10] sm:$0xf]
        %v938 = vld [vmem:[%s7 + $0x14] sm:$0xf]
        %v939 = vld [vmem:[%s7 + $0x18] sm:$0xf]
        %v940 = vld [vmem:[%s7 + $0x1c] sm:$0xf]
        %v941 = vld [vmem:[%s7 + $0x20] sm:$0xf]
        %v942 = vld [vmem:[%s7 + $0x24] sm:$0xf]
        %v943 = vld [vmem:[%s7 + $0x28] sm:$0xf]
        %v944 = vld [vmem:[%s7 + $0x2c] sm:$0xf]
        %v945 = vld [vmem:[%s7 + $0x30] sm:$0xf]
        %v946 = vld [vmem:[%s7 + $0x34] sm:$0xf]
        %v947 = vld [vmem:[%s7 + $0x38] sm:$0xf]
        %v948 = vld [vmem:[%s7 + $0x3c] sm:$0xf]
        %v949 = vld [vmem:[%s8] sm:$0x1]
        %v951 = vperm.slane %v949, 0
        %v969 = vunpack.c.l.b16 %v933
        %v970 = vunpack.c.l.b16 %v934
        %v971 = vunpack.c.l.b16 %v935
        %v972 = vunpack.c.l.b16 %v936
        %v973 = vunpack.c.l.b16 %v937
        %v974 = vunpack.c.l.b16 %v938
        %v975 = vunpack.c.l.b16 %v939
        %v976 = vunpack.c.l.b16 %v940
        %v977 = vunpack.c.l.b16 %v941
        %v978 = vunpack.c.l.b16 %v942
        %v979 = vunpack.c.l.b16 %v943
        %v980 = vunpack.c.l.b16 %v944
        %v981 = vunpack.c.l.b16 %v945
        %v982 = vunpack.c.l.b16 %v946
        %v983 = vunpack.c.l.b16 %v947
        %v984 = vunpack.c.l.b16 %v948
        %v985 = vpack.c.b16 %v970, %v969
        %v986 = vpack.c.b16 %v972, %v971
        %v987 = vpack.c.b16 %v974, %v973
        %v988 = vpack.c.b16 %v976, %v975
        %v989 = vpack.c.b16 %v978, %v977
        %v990 = vpack.c.b16 %v980, %v979
        %v991 = vpack.c.b16 %v982, %v981
        %v992 = vpack.c.b16 %v984, %v983
        %1001 = vmatpush.bf16.msra.mxu0 %v992
        %1002 = vmatpush.bf16.msra.mxu0 %v991
        %1003 = vmatpush.bf16.msra.mxu0 %v990
        %1004 = vmatpush.bf16.msra.mxu0 %v989
        %1005 = vmatpush.bf16.msra.mxu0 %v988
        %1006 = vmatpush.bf16.msra.mxu0 %v987
        %1007 = vmatpush.bf16.msra.mxu0 %v986
        %1008 = vmatpush.bf16.msra.mxu0 %v985
        %1009 = vmatmul.bf16.gmra.mxu0 %v932
        %v1010 = vpop.f32.mrf.mxu0
        %v1011 = vadd.f32 %v951, %v1010
        %v1012 = vpop.f32.mrf.mxu0
        %1013 = vdwg.mxu0
        %v1014 = vadd.f32 %v877, %v1011
        %v1015 = vld [vmem:[%s11] sm:$0x1]
        %v1016 = vld [vmem:[%s12] sm:$0x1]
        %v1017 = vsel %vm508, %v1014, 0.0
        %1018 = vadd.xlane.f32.xlu0 %v1017
        %v1019 = vpop.xlane.xlu0 %1018
        %v1020 = vmul.f32 %v1019, %v850
        %v1021 = vsub.f32 %v1014, %v1020
        %v1022 = vmul.f32 %v1021, %v1021
        %v1023 = vsel %vm508, %v1022, 0.0
        %1024 = vadd.xlane.f32.xlu0 %v1023
        %v1025 = vpop.xlane.xlu0 %1024
        %v1026 = vmul.f32 %v1025, %v850
        %v1027 = vadd.f32 %v1026, 1e-05
        %v1028 = vrsqrt.pop %v1027
        %v1029 = vmul.f32 %v1028, %v1027
        %v1030 = vmul.f32 %v1029, %v1028
        %v1031 = vmul.f32 0.5, %v1030
        %v1032 = vsub.f32 1.5, %v1031
        %v1033 = vmul.f32 %v1028, %v1032
        %vm1034 = vweird.f32 %v1027
        %vm1035 = vweird.f32 %v1028
        %vm1036 = vmor %vm1034, %vm1035
        %v1037 = vsel %vm1036, %v1028, %v1033
        %v1038 = vmul.f32 %v1021, %v1037
        %v1040 = vperm.slane %v1015, 0
        %v1042 = vmul.f32 %v1038, %v1040
        %v1044 = vperm.slane %v1016, 0
        %v1046 = vadd.f32 %v1042, %v1044
        %1047 = vst.msk [vmem:[%s450] sm:$0xff] %vm508, %v1046
        %p1048 = scmp.lt.s32.totalorder %s25, 1
        %s1049 = scalar_select %p1048, %s25, 1
        %s1050 = smul.addr %s1049, 8
        %s1051 = scalar_lea.vmem %s13, %s1050
        // Predicated region
        $region77: #{dense_transformer_encoder.4} parent=71 // pred_check
          %p1052 = pneg %p321
        $region78: #{dense_transformer_encoder.4} parent=71 // pred_check_branch
          %1054 = sbr.rel (%p1052) target = $region80
        $region79: #{dense_transformer_encoder.4} parent=71 // pred_region
          _
        $region80: #{dense_transformer_encoder.4} parent=71 // pred_fallthru
          _
      $region72: #{dense_transformer_encoder.4} parent=5 // pred_fallthru
        _
      %p1055 = scmp.le.s32.totalorder 2, %s20
      // Predicated region
      $region81: #{dense_transformer_encoder.4} parent=5 // pred_check
        %p1056 = pneg %p1055
      $region82: #{dense_transformer_encoder.4} parent=5 // pred_check_branch
        %1058 = sbr.rel (%p1056) target = $region84
      $region83: #{dense_transformer_encoder.4} parent=5 // pred_region
        %s1059 = ssub.s32 %s20, 2
        // Predicated region
        $region85: #{dense_transformer_encoder.4} parent=83 // pred_check
          %p1060 = pneg %p327
        $region86: #{dense_transformer_encoder.4} parent=83 // pred_check_branch
          %1062 = sbr.rel (%p1060) target = $region88
        $region87: #{dense_transformer_encoder.4} parent=83 // pred_region
          %p1063 = scmp.lt.s32.totalorder %s26, 1
          %s1064 = scalar_select %p1063, %s26, 1
          %s1065 = smul.addr %s1064, 8
          %s1066 = scalar_lea.vmem %s13, %s1065
        $region88: #{dense_transformer_encoder.4} parent=83 // pred_fallthru
          _
      $region84: #{dense_transformer_encoder.4} parent=5 // pred_fallthru
        _
    $region6: #{dense_transformer_encoder.4} parent=1 // loop_footer
      %s24 = sadd.s32 1, %s20
    $region7: #{dense_transformer_encoder.4} parent=1 // loop_footer_branch
      %19 = sbr.rel target = $region3
    $region8: #{dense_transformer_encoder.4} parent=1 // loop_exit
      _
    %1067 = vsyncpa [#allocation3], 1
    %s1068 = scalar_lea.sflag [#allocation3], 1
    %1069 = vsyncpa %s1068, 1

// kernel: dense_transformer_encoder.3
$region0: #{dense_transformer_encoder.3}
  #allocation0 [shape = 'u32[]', space=smem, size = 0x4, offset = 0x4, fixed_abs, tag = 'smem constant byte address 0x4 - core index']
  #allocation1 [shape = 'u32[72,128]{1,0:T(1,128)}', space=vmem, size = 0x9000, scoped, tag = 'internal scratch']
  %s0 = inlined_call_operand.vmem [shape: f32[2,8,32], index: 0, kind: input, shape index: {}]
  %s1 = inlined_call_operand.vmem [shape: bf16[32,96], index: 1, kind: input, shape index: {}]
  %s2 = inlined_call_operand.vmem [shape: f32[1,96], index: 2, kind: input, shape index: {}]
  %s3 = inlined_call_operand.hbm [shape: bf16[32,32], index: 3, kind: input, shape index: {}]
  %s4 = inlined_call_operand.vmem [shape: f32[1,32], index: 4, kind: input, shape index: {}]
  %s5 = inlined_call_operand.hbm [shape: bf16[32,64], index: 5, kind: input, shape index: {}]
  %s6 = inlined_call_operand.vmem [shape: f32[1,64], index: 6, kind: input, shape index: {}]
  %s7 = inlined_call_operand.vmem [shape: bf16[64,32], index: 7, kind: input, shape index: {}]
  %s8 = inlined_call_operand.vmem [shape: f32[1,32], index: 8, kind: input, shape index: {}]
  %s9 = inlined_call_operand.vmem [shape: f32[1,32], index: 9, kind: input, shape index: {}]
  %s10 = inlined_call_operand.vmem [shape: f32[1,32], index: 10, kind: input, shape index: {}]
  %s11 = inlined_call_operand.vmem [shape: f32[1,32], index: 11, kind: input, shape index: {}]
  %s12 = inlined_call_operand.vmem [shape: f32[1,32], index: 12, kind: input, shape index: {}]
  %s13 = inlined_call_operand.vmem [shape: f32[2,8,32], index: 13, kind: output, shape index: {}]
  %s14 = sld [smem:[#allocation0]]
  $region93: #{dense_transformer_encoder.3} parent=0
    _
  %s16 = ssub.s32 1, %s14
  %s17 = scalar_select 0, %s16, %s14
  $region1: #{dense_transformer_encoder.3} parent=0
    #allocation2 [shape = 'u8[8192]{0}', space=vmem, size = 0x2000, scoped, tag = 'input window, operand 3, single buffered']
    #allocation3 [shape = 's32[2]{0}', space=sflag, size = 0x8, scoped, tag = 'scoped memory for dense_transformer_encoder.3']
    #allocation4 [shape = 'u8[8192]{0}', space=vmem, size = 0x2000, scoped, tag = 'input window, operand 5, single buffered']
    #allocation5 [shape = 's32[1]{0}', space=sflag, size = 0x4, scoped, tag = 'scoped memory for dense_transformer_encoder.3']
    %18 = vsyncpa [#allocation3], 0
    %19 = vsyncpa [#allocation5], 0
    loop: start=0, step=1, limit=4
    $region2: #{dense_transformer_encoder.3} parent=1 // loop_pre_header
      _
    $region3: #{dense_transformer_encoder.3} parent=1 // loop_header
      %s21 = sphi 0, %s25
      %p22 = scmp.ge.s32.totalorder %s21, 4
      %s31 = sphi 0, %s33
      %s34 = sphi 0, %s31
      %s35 = sphi 0, %s34
      %s51 = sphi 0, %s35
      %s55 = sphi 0, %s55
      %s57 = sphi 0, %s55
      %s58 = sphi 0, %s57
      %s72 = sphi 0, %s58
      %s76 = sphi 0, %s76
      %s78 = sphi 0, %s76
      %s79 = sphi 0, %s78
      %s93 = sphi 0, %s79
      %s97 = sphi 0, %s97
      %s99 = sphi 0, %s97
      %s100 = sphi 0, %s99
      %s114 = sphi 0, %s100
      %s118 = sphi 0, %s118
      %s120 = sphi 0, %s118
      %s121 = sphi 0, %s120
      %s135 = sphi 0, %s121
      %s139 = sphi 0, %s139
      %s141 = sphi 0, %s139
      %s142 = sphi 0, %s141
      %s156 = sphi 0, %s142
      %s160 = sphi 0, %s160
      %s162 = sphi 0, %s160
      %s163 = sphi 0, %s162
      %s177 = sphi 0, %s163
      %s181 = sphi 0, %s181
      %s183 = sphi 0, %s181
      %s184 = sphi 0, %s183
      %s198 = sphi 0, %s184
      %s202 = sphi 0, %s202
      %s204 = sphi 0, %s202
      %s205 = sphi 0, %s204
      %s219 = sphi 0, %s205
      %s223 = sphi 0, %s223
      %s225 = sphi 0, %s223
      %s226 = sphi 0, %s225
      %s240 = sphi 0, %s226
      %s244 = sphi 0, %s244
      %s246 = sphi 0, %s244
      %s247 = sphi 0, %s246
      %s261 = sphi 0, %s247
      %s265 = sphi 0, %s265
      %s267 = sphi 0, %s265
      %s268 = sphi 0, %s267
      %s282 = sphi 0, %s268
      %s286 = sphi 0, %s286
      %s288 = sphi 0, %s286
      %s289 = sphi 0, %s288
      %s303 = sphi 0, %s289
      %s309 = sphi 0, %s311
      %s312 = sphi 0, %s309
      %s313 = sphi 0, %s312
      %s329 = sphi 0, %s313
    $region4: #{dense_transformer_encoder.3} parent=1 // loop_header_branch
      %24 = sbr.rel (%p22) target = $region8
    $region5: #{dense_transformer_encoder.3} parent=1 // loop_body
      %s26 = ssub.s32 %s21, 1
      %s27 = ssub.s32 %s21, 2
      %s28 = sadd.s32 %s21, 1
      %s29 = ssub.s32 %s21, %s28
      %p30 = scmp.eq.s32.totalorder %s29, 0
      %s32 = sadd.s32 %s31, 1
      %s33 = scalar_select %p30, %s31, %s32
      %p36 = pneg %p30
      %p37 = scmp.eq.s32.totalorder %s21, 1
      %p38 = por %p36, %p37
      %p39 = scmp.ne.s32.totalorder %s31, %s34
      %p40 = scmp.eq.s32.totalorder %s21, 0
      %p41 = por %p39, %p40
      %p42 = scmp.ne.s32.totalorder %s31, %s34
      %p43 = scmp.eq.s32.totalorder %s26, 1
      %p44 = por %p42, %p43
      %p45 = scmp.ne.s32.totalorder %s34, %s35
      %p46 = scmp.eq.s32.totalorder %s26, 0
      %p47 = por %p45, %p46
      %p48 = scmp.ne.s32.totalorder %s34, %s35
      %p49 = scmp.eq.s32.totalorder %s27, 1
      %p50 = por %p48, %p49
      %p52 = scmp.ne.s32.totalorder %s35, %s51
      %p53 = scmp.eq.s32.totalorder %s27, 0
      %p54 = por %p52, %p53
      %s56 = sadd.s32 %s55, 1
      %p59 = scmp.eq.s32.totalorder %s21, 1
      %p60 = scmp.ne.s32.totalorder %s55, %s57
      %p61 = scmp.eq.s32.totalorder %s21, 0
      %p62 = por %p60, %p61
      %p63 = scmp.ne.s32.totalorder %s55, %s57
      %p64 = scmp.eq.s32.totalorder %s26, 1
      %p65 = por %p63, %p64
      %p66 = scmp.ne.s32.totalorder %s57, %s58
      %p67 = scmp.eq.s32.totalorder %s26, 0
      %p68 = por %p66, %p67
      %p69 = scmp.ne.s32.totalorder %s57, %s58
      %p70 = scmp.eq.s32.totalorder %s27, 1
      %p71 = por %p69, %p70
      %p73 = scmp.ne.s32.totalorder %s58, %s72
      %p74 = scmp.eq.s32.totalorder %s27, 0
      %p75 = por %p73, %p74
      %s77 = sadd.s32 %s76, 1
      %p80 = scmp.eq.s32.totalorder %s21, 1
      %p81 = scmp.ne.s32.totalorder %s76, %s78
      %p82 = scmp.eq.s32.totalorder %s21, 0
      %p83 = por %p81, %p82
      %p84 = scmp.ne.s32.totalorder %s76, %s78
      %p85 = scmp.eq.s32.totalorder %s26, 1
      %p86 = por %p84, %p85
      %p87 = scmp.ne.s32.totalorder %s78, %s79
      %p88 = scmp.eq.s32.totalorder %s26, 0
      %p89 = por %p87, %p88
      %p90 = scmp.ne.s32.totalorder %s78, %s79
      %p91 = scmp.eq.s32.totalorder %s27, 1
      %p92 = por %p90, %p91
      %p94 = scmp.ne.s32.totalorder %s79, %s93
      %p95 = scmp.eq.s32.totalorder %s27, 0
      %p96 = por %p94, %p95
      %s98 = sadd.s32 %s97, 1
      %p101 = scmp.eq.s32.totalorder %s21, 1
      %p102 = scmp.ne.s32.totalorder %s97, %s99
      %p103 = scmp.eq.s32.totalorder %s21, 0
      %p104 = por %p102, %p103
      %p105 = scmp.ne.s32.totalorder %s97, %s99
      %p106 = scmp.eq.s32.totalorder %s26, 1
      %p107 = por %p105, %p106
      %p108 = scmp.ne.s32.totalorder %s99, %s100
      %p109 = scmp.eq.s32.totalorder %s26, 0
      %p110 = por %p108, %p109
      %p111 = scmp.ne.s32.totalorder %s99, %s100
      %p112 = scmp.eq.s32.totalorder %s27, 1
      %p113 = por %p111, %p112
      %p115 = scmp.ne.s32.totalorder %s100, %s114
      %p116 = scmp.eq.s32.totalorder %s27, 0
      %p117 = por %p115, %p116
      %s119 = sadd.s32 %s118, 1
      %p122 = scmp.eq.s32.totalorder %s21, 1
      %p123 = scmp.ne.s32.totalorder %s118, %s120
      %p124 = scmp.eq.s32.totalorder %s21, 0
      %p125 = por %p123, %p124
      %p126 = scmp.ne.s32.totalorder %s118, %s120
      %p127 = scmp.eq.s32.totalorder %s26, 1
      %p128 = por %p126, %p127
      %p129 = scmp.ne.s32.totalorder %s120, %s121
      %p130 = scmp.eq.s32.totalorder %s26, 0
      %p131 = por %p129, %p130
      %p132 = scmp.ne.s32.totalorder %s120, %s121
      %p133 = scmp.eq.s32.totalorder %s27, 1
      %p134 = por %p132, %p133
      %p136 = scmp.ne.s32.totalorder %s121, %s135
      %p137 = scmp.eq.s32.totalorder %s27, 0
      %p138 = por %p136, %p137
      %s140 = sadd.s32 %s139, 1
      %p143 = scmp.eq.s32.totalorder %s21, 1
      %p144 = scmp.ne.s32.totalorder %s139, %s141
      %p145 = scmp.eq.s32.totalorder %s21, 0
      %p146 = por %p144, %p145
      %p147 = scmp.ne.s32.totalorder %s139, %s141
      %p148 = scmp.eq.s32.totalorder %s26, 1
      %p149 = por %p147, %p148
      %p150 = scmp.ne.s32.totalorder %s141, %s142
      %p151 = scmp.eq.s32.totalorder %s26, 0
      %p152 = por %p150, %p151
      %p153 = scmp.ne.s32.totalorder %s141, %s142
      %p154 = scmp.eq.s32.totalorder %s27, 1
      %p155 = por %p153, %p154
      %p157 = scmp.ne.s32.totalorder %s142, %s156
      %p158 = scmp.eq.s32.totalorder %s27, 0
      %p159 = por %p157, %p158
      %s161 = sadd.s32 %s160, 1
      %p164 = scmp.eq.s32.totalorder %s21, 1
      %p165 = scmp.ne.s32.totalorder %s160, %s162
      %p166 = scmp.eq.s32.totalorder %s21, 0
      %p167 = por %p165, %p166
      %p168 = scmp.ne.s32.totalorder %s160, %s162
      %p169 = scmp.eq.s32.totalorder %s26, 1
      %p170 = por %p168, %p169
      %p171 = scmp.ne.s32.totalorder %s162, %s163
      %p172 = scmp.eq.s32.totalorder %s26, 0
      %p173 = por %p171, %p172
      %p174 = scmp.ne.s32.totalorder %s162, %s163
      %p175 = scmp.eq.s32.totalorder %s27, 1
      %p176 = por %p174, %p175
      %p178 = scmp.ne.s32.totalorder %s163, %s177
      %p179 = scmp.eq.s32.totalorder %s27, 0
      %p180 = por %p178, %p179
      %s182 = sadd.s32 %s181, 1
      %p185 = scmp.eq.s32.totalorder %s21, 1
      %p186 = scmp.ne.s32.totalorder %s181, %s183
      %p187 = scmp.eq.s32.totalorder %s21, 0
      %p188 = por %p186, %p187
      %p189 = scmp.ne.s32.totalorder %s181, %s183
      %p190 = scmp.eq.s32.totalorder %s26, 1
      %p191 = por %p189, %p190
      %p192 = scmp.ne.s32.totalorder %s183, %s184
      %p193 = scmp.eq.s32.totalorder %s26, 0
      %p194 = por %p192, %p193
      %p195 = scmp.ne.s32.totalorder %s183, %s184
      %p196 = scmp.eq.s32.totalorder %s27, 1
      %p197 = por %p195, %p196
      %p199 = scmp.ne.s32.totalorder %s184, %s198
      %p200 = scmp.eq.s32.totalorder %s27, 0
      %p201 = por %p199, %p200
      %s203 = sadd.s32 %s202, 1
      %p206 = scmp.eq.s32.totalorder %s21, 1
      %p207 = scmp.ne.s32.totalorder %s202, %s204
      %p208 = scmp.eq.s32.totalorder %s21, 0
      %p209 = por %p207, %p208
      %p210 = scmp.ne.s32.totalorder %s202, %s204
      %p211 = scmp.eq.s32.totalorder %s26, 1
      %p212 = por %p210, %p211
      %p213 = scmp.ne.s32.totalorder %s204, %s205
      %p214 = scmp.eq.s32.totalorder %s26, 0
      %p215 = por %p213, %p214
      %p216 = scmp.ne.s32.totalorder %s204, %s205
      %p217 = scmp.eq.s32.totalorder %s27, 1
      %p218 = por %p216, %p217
      %p220 = scmp.ne.s32.totalorder %s205, %s219
      %p221 = scmp.eq.s32.totalorder %s27, 0
      %p222 = por %p220, %p221
      %s224 = sadd.s32 %s223, 1
      %p227 = scmp.eq.s32.totalorder %s21, 1
      %p228 = scmp.ne.s32.totalorder %s223, %s225
      %p229 = scmp.eq.s32.totalorder %s21, 0
      %p230 = por %p228, %p229
      %p231 = scmp.ne.s32.totalorder %s223, %s225
      %p232 = scmp.eq.s32.totalorder %s26, 1
      %p233 = por %p231, %p232
      %p234 = scmp.ne.s32.totalorder %s225, %s226
      %p235 = scmp.eq.s32.totalorder %s26, 0
      %p236 = por %p234, %p235
      %p237 = scmp.ne.s32.totalorder %s225, %s226
      %p238 = scmp.eq.s32.totalorder %s27, 1
      %p239 = por %p237, %p238
      %p241 = scmp.ne.s32.totalorder %s226, %s240
      %p242 = scmp.eq.s32.totalorder %s27, 0
      %p243 = por %p241, %p242
      %s245 = sadd.s32 %s244, 1
      %p248 = scmp.eq.s32.totalorder %s21, 1
      %p249 = scmp.ne.s32.totalorder %s244, %s246
      %p250 = scmp.eq.s32.totalorder %s21, 0
      %p251 = por %p249, %p250
      %p252 = scmp.ne.s32.totalorder %s244, %s246
      %p253 = scmp.eq.s32.totalorder %s26, 1
      %p254 = por %p252, %p253
      %p255 = scmp.ne.s32.totalorder %s246, %s247
      %p256 = scmp.eq.s32.totalorder %s26, 0
      %p257 = por %p255, %p256
      %p258 = scmp.ne.s32.totalorder %s246, %s247
      %p259 = scmp.eq.s32.totalorder %s27, 1
      %p260 = por %p258, %p259
      %p262 = scmp.ne.s32.totalorder %s247, %s261
      %p263 = scmp.eq.s32.totalorder %s27, 0
      %p264 = por %p262, %p263
      %s266 = sadd.s32 %s265, 1
      %p269 = scmp.eq.s32.totalorder %s21, 1
      %p270 = scmp.ne.s32.totalorder %s265, %s267
      %p271 = scmp.eq.s32.totalorder %s21, 0
      %p272 = por %p270, %p271
      %p273 = scmp.ne.s32.totalorder %s265, %s267
      %p274 = scmp.eq.s32.totalorder %s26, 1
      %p275 = por %p273, %p274
      %p276 = scmp.ne.s32.totalorder %s267, %s268
      %p277 = scmp.eq.s32.totalorder %s26, 0
      %p278 = por %p276, %p277
      %p279 = scmp.ne.s32.totalorder %s267, %s268
      %p280 = scmp.eq.s32.totalorder %s27, 1
      %p281 = por %p279, %p280
      %p283 = scmp.ne.s32.totalorder %s268, %s282
      %p284 = scmp.eq.s32.totalorder %s27, 0
      %p285 = por %p283, %p284
      %s287 = sadd.s32 %s286, 1
      %p290 = scmp.eq.s32.totalorder %s21, 1
      %p291 = scmp.ne.s32.totalorder %s286, %s288
      %p292 = scmp.eq.s32.totalorder %s21, 0
      %p293 = por %p291, %p292
      %p294 = scmp.ne.s32.totalorder %s286, %s288
      %p295 = scmp.eq.s32.totalorder %s26, 1
      %p296 = por %p294, %p295
      %p297 = scmp.ne.s32.totalorder %s288, %s289
      %p298 = scmp.eq.s32.totalorder %s26, 0
      %p299 = por %p297, %p298
      %p300 = scmp.ne.s32.totalorder %s288, %s289
      %p301 = scmp.eq.s32.totalorder %s27, 1
      %p302 = por %p300, %p301
      %p304 = scmp.ne.s32.totalorder %s289, %s303
      %p305 = scmp.eq.s32.totalorder %s27, 0
      %p306 = por %p304, %p305
      %s307 = ssub.s32 %s21, %s28
      %p308 = scmp.eq.s32.totalorder %s307, 0
      %s310 = sadd.s32 %s309, 1
      %s311 = scalar_select %p308, %s309, %s310
      %p314 = pneg %p308
      %p315 = scmp.eq.s32.totalorder %s21, 1
      %p316 = por %p314, %p315
      %p317 = scmp.ne.s32.totalorder %s309, %s312
      %p318 = scmp.eq.s32.totalorder %s21, 0
      %p319 = por %p317, %p318
      %p320 = scmp.ne.s32.totalorder %s309, %s312
      %p321 = scmp.eq.s32.totalorder %s26, 1
      %p322 = por %p320, %p321
      %p323 = scmp.ne.s32.totalorder %s312, %s313
      %p324 = scmp.eq.s32.totalorder %s26, 0
      %p325 = por %p323, %p324
      %p326 = scmp.ne.s32.totalorder %s312, %s313
      %p327 = scmp.eq.s32.totalorder %s27, 1
      %p328 = por %p326, %p327
      %p330 = scmp.ne.s32.totalorder %s313, %s329
      %p331 = scmp.eq.s32.totalorder %s27, 0
      %p332 = por %p330, %p331
      %p333 = scmp.le.s32.totalorder 1, %s21
      %p334 = scmp.lt.s32.totalorder %s21, 3
      %p335 = pnand %p333, %p334
      %p336 = pneg %p335
      // Predicated region
      $region9: #{dense_transformer_encoder.3} parent=5 // pred_check
        _
      $region10: #{dense_transformer_encoder.3} parent=5 // pred_check_branch
        %338 = sbr.rel (%p335) target = $region12
      $region11: #{dense_transformer_encoder.3} parent=5 // pred_region
        %s339 = ssub.s32 %s21, 1
        // Predicated region
        $region13: #{dense_transformer_encoder.3} parent=11 // pred_check
          %p340 = pneg %p68
        $region14: #{dense_transformer_encoder.3} parent=11 // pred_check_branch
          %342 = sbr.rel (%p340) target = $region16
        $region15: #{dense_transformer_encoder.3} parent=11 // pred_region
          _
        $region16: #{dense_transformer_encoder.3} parent=11 // pred_fallthru
          _
        // Predicated region
        $region17: #{dense_transformer_encoder.3} parent=11 // pred_check
          %p343 = pneg %p89
        $region18: #{dense_transformer_encoder.3} parent=11 // pred_check_branch
          %345 = sbr.rel (%p343) target = $region20
        $region19: #{dense_transformer_encoder.3} parent=11 // pred_region
          _
        $region20: #{dense_transformer_encoder.3} parent=11 // pred_fallthru
          _
        // Predicated region
        $region21: #{dense_transformer_encoder.3} parent=11 // pred_check
          %p346 = pneg %p110
        $region22: #{dense_transformer_encoder.3} parent=11 // pred_check_branch
          %348 = sbr.rel (%p346) target = $region24
        $region23: #{dense_transformer_encoder.3} parent=11 // pred_region
          %350 = vsyncadd [#allocation3], 0
          %s351 = sshll.u32 %s3, 4
          %s352 = int_to_ptr.hbm [resolvable:$true] %s351
          %s353 = sshll.u32 [#allocation2], 4
          %s354 = int_to_ptr.vmem [resolvable:$true] %s353
          %359 = dma.hbm_to_vmem [thread:$0]  %s352, 256, %s354, [#allocation3], 64, 64, 4
        $region24: #{dense_transformer_encoder.3} parent=11 // pred_fallthru
          _
        // Predicated region
        $region25: #{dense_transformer_encoder.3} parent=11 // pred_check
          %p360 = pneg %p131
        $region26: #{dense_transformer_encoder.3} parent=11 // pred_check_branch
          %362 = sbr.rel (%p360) target = $region28
        $region27: #{dense_transformer_encoder.3} parent=11 // pred_region
          _
        $region28: #{dense_transformer_encoder.3} parent=11 // pred_fallthru
          _
        // Predicated region
        $region29: #{dense_transformer_encoder.3} parent=11 // pred_check
          %p363 = pneg %p152
        $region30: #{dense_transformer_encoder.3} parent=11 // pred_check_branch
          %365 = sbr.rel (%p363) target = $region32
        $region31: #{dense_transformer_encoder.3} parent=11 // pred_region
          %367 = vsyncadd [#allocation5], 0
          %s368 = sshll.u32 %s5, 4
          %s369 = int_to_ptr.hbm [resolvable:$true] %s368
          %s370 = sshll.u32 [#allocation4], 4
          %s371 = int_to_ptr.vmem [resolvable:$true] %s370
          %376 = dma.hbm_to_vmem [thread:$0]  %s369, 256, %s371, [#allocation5], 64, 64, 4
        $region32: #{dense_transformer_encoder.3} parent=11 // pred_fallthru
          _
        // Predicated region
        $region33: #{dense_transformer_encoder.3} parent=11 // pred_check
          %p377 = pneg %p173
        $region34: #{dense_transformer_encoder.3} parent=11 // pred_check_branch
          %379 = sbr.rel (%p377) target = $region36
        $region35: #{dense_transformer_encoder.3} parent=11 // pred_region
          _
        $region36: #{dense_transformer_encoder.3} parent=11 // pred_fallthru
          _
        // Predicated region
        $region37: #{dense_transformer_encoder.3} parent=11 // pred_check
          %p380 = pneg %p194
        $region38: #{dense_transformer_encoder.3} parent=11 // pred_check_branch
          %382 = sbr.rel (%p380) target = $region40
        $region39: #{dense_transformer_encoder.3} parent=11 // pred_region
          _
        $region40: #{dense_transformer_encoder.3} parent=11 // pred_fallthru
          _
        // Predicated region
        $region41: #{dense_transformer_encoder.3} parent=11 // pred_check
          %p383 = pneg %p215
        $region42: #{dense_transformer_encoder.3} parent=11 // pred_check_branch
          %385 = sbr.rel (%p383) target = $region44
        $region43: #{dense_transformer_encoder.3} parent=11 // pred_region
          _
        $region44: #{dense_transformer_encoder.3} parent=11 // pred_fallthru
          _
        // Predicated region
        $region45: #{dense_transformer_encoder.3} parent=11 // pred_check
          %p386 = pneg %p236
        $region46: #{dense_transformer_encoder.3} parent=11 // pred_check_branch
          %388 = sbr.rel (%p386) target = $region48
        $region47: #{dense_transformer_encoder.3} parent=11 // pred_region
          _
        $region48: #{dense_transformer_encoder.3} parent=11 // pred_fallthru
          _
        // Predicated region
        $region49: #{dense_transformer_encoder.3} parent=11 // pred_check
          %p389 = pneg %p257
        $region50: #{dense_transformer_encoder.3} parent=11 // pred_check_branch
          %391 = sbr.rel (%p389) target = $region52
        $region51: #{dense_transformer_encoder.3} parent=11 // pred_region
          _
        $region52: #{dense_transformer_encoder.3} parent=11 // pred_fallthru
          _
        // Predicated region
        $region53: #{dense_transformer_encoder.3} parent=11 // pred_check
          %p392 = pneg %p278
        $region54: #{dense_transformer_encoder.3} parent=11 // pred_check_branch
          %394 = sbr.rel (%p392) target = $region56
        $region55: #{dense_transformer_encoder.3} parent=11 // pred_region
          _
        $region56: #{dense_transformer_encoder.3} parent=11 // pred_fallthru
          _
        // Predicated region
        $region57: #{dense_transformer_encoder.3} parent=11 // pred_check
          %p395 = pneg %p299
        $region58: #{dense_transformer_encoder.3} parent=11 // pred_check_branch
          %397 = sbr.rel (%p395) target = $region60
        $region59: #{dense_transformer_encoder.3} parent=11 // pred_region
          _
        $region60: #{dense_transformer_encoder.3} parent=11 // pred_fallthru
          _
      $region12: #{dense_transformer_encoder.3} parent=5 // pred_fallthru
        _
      %p398 = scmp.lt.s32.totalorder %s21, 2
      // Predicated region
      $region61: #{dense_transformer_encoder.3} parent=5 // pred_check
        %p399 = pneg %p398
      $region62: #{dense_transformer_encoder.3} parent=5 // pred_check_branch
        %401 = sbr.rel (%p399) target = $region64
      $region63: #{dense_transformer_encoder.3} parent=5 // pred_region
        // Predicated region
        $region65: #{dense_transformer_encoder.3} parent=63 // pred_check
          %p402 = pneg %p41
        $region66: #{dense_transformer_encoder.3} parent=63 // pred_check_branch
          %404 = sbr.rel (%p402) target = $region68
        $region67: #{dense_transformer_encoder.3} parent=63 // pred_region
          %p405 = scmp.lt.s32.totalorder %s21, 1
          %s406 = scalar_select %p405, %s21, 1
          %s407 = smul.addr %s406, 8
          %s408 = scalar_lea.vmem %s0, %s407
        $region68: #{dense_transformer_encoder.3} parent=63 // pred_fallthru
          _
      $region64: #{dense_transformer_encoder.3} parent=5 // pred_fallthru
        _
      %p409 = scmp.le.s32.totalorder 1, %s21
      %p410 = scmp.lt.s32.totalorder %s21, 3
      %p411 = pnand %p409, %p410
      %p412 = pneg %p411
      // Predicated region
      $region69: #{dense_transformer_encoder.3} parent=5 // pred_check
        _
      $region70: #{dense_transformer_encoder.3} parent=5 // pred_check_branch
        %414 = sbr.rel (%p411) target = $region72
      $region71: #{dense_transformer_encoder.3} parent=5 // pred_region
        %s415 = ssub.s32 %s21, 1
        // Predicated region
        $region73: #{dense_transformer_encoder.3} parent=71 // pred_check
          %p416 = pneg %p110
        $region74: #{dense_transformer_encoder.3} parent=71 // pred_check_branch
          %418 = sbr.rel (%p416) target = $region76
        $region75: #{dense_transformer_encoder.3} parent=71 // pred_region
          %420 = dma.done [#allocation3], 256
        $region76: #{dense_transformer_encoder.3} parent=71 // pred_fallthru
          _
        // Predicated region
        $region77: #{dense_transformer_encoder.3} parent=71 // pred_check
          %p421 = pneg %p152
        $region78: #{dense_transformer_encoder.3} parent=71 // pred_check_branch
          %423 = sbr.rel (%p421) target = $region80
        $region79: #{dense_transformer_encoder.3} parent=71 // pred_region
          %425 = dma.done [#allocation5], 256
        $region80: #{dense_transformer_encoder.3} parent=71 // pred_fallthru
          _
        %p426 = scmp.lt.s32.totalorder %s26, 1
        %s427 = scalar_select %p426, %s26, 1
        %s428 = smul.addr %s427, 8
        %s429 = scalar_lea.vmem %s0, %s428
        %p430 = pneg %p47
        %p431 = pneg %p44
        %p432 = pneg %p68
        %p433 = pneg %p65
        %p434 = pneg %p89
        %p435 = pneg %p86
        %p436 = pneg %p110
        %p437 = pneg %p107
        %p438 = pneg %p131
        %p439 = pneg %p128
        %p440 = pneg %p152
        %p441 = pneg %p149
        %p442 = pneg %p173
        %p443 = pneg %p170
        %p444 = pneg %p194
        %p445 = pneg %p191
        %p446 = pneg %p215
        %p447 = pneg %p212
        %p448 = pneg %p236
        %p449 = pneg %p233
        %p450 = pneg %p257
        %p451 = pneg %p254
        %p452 = pneg %p278
        %p453 = pneg %p275
        %p454 = pneg %p299
        %p455 = pneg %p296
        %p456 = pneg %p325
        %p457 = pneg %p322
        %p458 = scmp.lt.s32.totalorder %s26, 1
        %s459 = scalar_select %p458, %s26, 1
        %s460 = smul.addr %s459, 8
        %s461 = scalar_lea.vmem %s13, %s460
        %p462 = scmp.lt.s32.totalorder %s26, 1
        %s463 = scalar_select %p462, %s26, 1
        %s464 = smul.addr %s463, 8
        %s465 = scalar_lea.vmem %s0, %s464
        %p466 = scmp.lt.s32.totalorder %s26, 1
        %s467 = scalar_select %p466, %s26, 1
        %s468 = smul.addr %s467, 8
        %s469 = scalar_lea.vmem %s13, %s468
        %v471 = vld [vmem:[%s465] sm:$0xff]
        %v472 = vpack.c.bf16 %v471, %v471
        %v473 = vld [vmem:[%s1] sm:$0xf]
        %v474 = vld [vmem:[%s1 + $0x4] sm:$0xf]
        %v475 = vld [vmem:[%s1 + $0x8] sm:$0xf]
        %v476 = vld [vmem:[%s1 + $0xc] sm:$0xf]
        %v477 = vld [vmem:[%s2] sm:$0x1]
        %v479 = vperm.slane %v477, 0
        %v485 = vunpack.c.l.b16 %v473
        %v486 = vunpack.c.l.b16 %v474
        %v487 = vunpack.c.l.b16 %v475
        %v488 = vunpack.c.l.b16 %v476
        %v489 = vpack.c.b16 %v486, %v485
        %v490 = vpack.c.b16 %v488, %v487
        %vm493 = vcmask 261120
        %v495 = vsel %vm493, %v472, 0
        %497 = vmatpush.bf16.msra.mxu0 0
        %498 = vmatpush.bf16.msra.mxu0 0
        %499 = vmatpush.bf16.msra.mxu0 0
        %500 = vmatpush.bf16.msra.mxu0 0
        %501 = vmatpush.bf16.msra.mxu0 0
        %502 = vmatpush.bf16.msra.mxu0 0
        %503 = vmatpush.bf16.msra.mxu0 %v490
        %504 = vmatpush.bf16.msra.mxu0 %v489
        %505 = vmatmul.bf16.gmra.mxu0 %v495
        %v506 = vpop.f32.mrf.mxu0
        %v507 = vadd.f32 %v479, %v506
        %v508 = vpop.f32.mrf.mxu0
        %509 = vdwg.mxu0
        %v510 = vmul.f32 %v507, 0.35355338
        %v511 = vpack.c.bf16 %v510, %v510
        %v512 = vpack.c.bf16 %v507, %v507
        %514 = vrot.lane.b32.xlu0 %v512, 96
        %v515 = vpop.permute.xlu0 %514
        %vm516 = vcmask 64512
        %v518 = vsel %vm516, %v511, 0
        %v521 = vsel %vm516, %v515, 0
        %523 = vmatpush.bf16.xpose.msra.mxu0 0
        %524 = vmatpush.bf16.xpose.msra.mxu0 0
        %525 = vmatpush.bf16.xpose.msra.mxu0 0
        %526 = vmatpush.bf16.xpose.msra.mxu0 0
        %527 = vmatpush.bf16.xpose.msra.mxu0 0
        %528 = vmatpush.bf16.xpose.msra.mxu0 0
        %529 = vmatpush.bf16.xpose.msra.mxu0 0
        %530 = vmatpush.bf16.xpose.msra.mxu0 %v521
        %531 = vmatmul.bf16.gmra.mxu0 %v518
        %v532 = vpop.f32.mrf.mxu0
        %v533 = vadd.f32 0.0, %v532
        %v534 = vpop.f32.mrf.mxu0
        %535 = vdwg.mxu0
        %v536 = vsel %vm516, %v533, -inf
        %537 = vmax.xlane.f32.xlu0 %v536
        %v538 = vpop.xlane.xlu0 %537
        %v539 = vsub.f32 %v533, %v538
        %v540 = vmul.f32 %v539, 1.442695
        %v541 = vpow.pop %v540
        %v542 = vsel %vm516, %v541, 0.0
        %543 = vadd.xlane.f32.xlu0 %v542
        %v544 = vpop.xlane.xlu0 %543
        %v545 = vrcp.pop %v544
        %v546 = vmul.f32 %v541, %v545
        %v547 = vpack.c.bf16 %v546, %v546
        %548 = vrot.lane.b32.xlu0 %v512, 64
        %v549 = vpop.permute.xlu0 %548
        %v551 = vsel %vm516, %v547, 0
        %vm553 = vcmask 1043456
        %v555 = vsel %vm553, %v549, 0
        %557 = vmatpush.bf16.msra.mxu0 0
        %558 = vmatpush.bf16.msra.mxu0 0
        %559 = vmatpush.bf16.msra.mxu0 0
        %560 = vmatpush.bf16.msra.mxu0 0
        %561 = vmatpush.bf16.msra.mxu0 0
        %562 = vmatpush.bf16.msra.mxu0 0
        %563 = vmatpush.bf16.msra.mxu0 0
        %564 = vmatpush.bf16.msra.mxu0 %v555
        %565 = vmatmul.bf16.gmra.mxu0 %v551
        %v566 = vpop.f32.mrf.mxu0
        %v567 = vadd.f32 0.0, %v566
        %v568 = vpop.f32.mrf.mxu0
        %569 = vdwg.mxu0
        %571 = vrot.lane.b32.xlu0 %v511, 120
        %v572 = vpop.permute.xlu0 %571
        %573 = vrot.lane.b32.xlu0 %v512, 88
        %v574 = vpop.permute.xlu0 %573
        %v576 = vsel %vm516, %v572, 0
        %v579 = vsel %vm516, %v574, 0
        %581 = vmatpush.bf16.xpose.msra.mxu0 0
        %582 = vmatpush.bf16.xpose.msra.mxu0 0
        %583 = vmatpush.bf16.xpose.msra.mxu0 0
        %584 = vmatpush.bf16.xpose.msra.mxu0 0
        %585 = vmatpush.bf16.xpose.msra.mxu0 0
        %586 = vmatpush.bf16.xpose.msra.mxu0 0
        %587 = vmatpush.bf16.xpose.msra.mxu0 0
        %588 = vmatpush.bf16.xpose.msra.mxu0 %v579
        %589 = vmatmul.bf16.gmra.mxu0 %v576
        %v590 = vpop.f32.mrf.mxu0
        %v591 = vadd.f32 0.0, %v590
        %v592 = vpop.f32.mrf.mxu0
        %593 = vdwg.mxu0
        %v594 = vsel %vm516, %v591, -inf
        %595 = vmax.xlane.f32.xlu0 %v594
        %v596 = vpop.xlane.xlu0 %595
        %v597 = vsub.f32 %v591, %v596
        %v598 = vmul.f32 %v597, 1.442695
        %v599 = vpow.pop %v598
        %v600 = vsel %vm516, %v599, 0.0
        %601 = vadd.xlane.f32.xlu0 %v600
        %v602 = vpop.xlane.xlu0 %601
        %v603 = vrcp.pop %v602
        %v604 = vmul.f32 %v599, %v603
        %v605 = vpack.c.bf16 %v604, %v604
        %606 = vrot.lane.b32.xlu0 %v512, 56
        %v607 = vpop.permute.xlu0 %606
        %v609 = vsel %vm516, %v605, 0
        %v612 = vsel %vm553, %v607, 0
        %614 = vmatpush.bf16.msra.mxu0 0
        %615 = vmatpush.bf16.msra.mxu0 0
        %616 = vmatpush.bf16.msra.mxu0 0
        %617 = vmatpush.bf16.msra.mxu0 0
        %618 = vmatpush.bf16.msra.mxu0 0
        %619 = vmatpush.bf16.msra.mxu0 0
        %620 = vmatpush.bf16.msra.mxu0 0
        %621 = vmatpush.bf16.msra.mxu0 %v612
        %622 = vmatmul.bf16.gmra.mxu0 %v609
        %v623 = vpop.f32.mrf.mxu0
        %v624 = vadd.f32 0.0, %v623
        %v625 = vpop.f32.mrf.mxu0
        %626 = vdwg.mxu0
        %627 = vrot.lane.b32.xlu0 %v511, 112
        %v628 = vpop.permute.xlu0 %627
        %629 = vrot.lane.b32.xlu0 %v512, 80
        %v630 = vpop.permute.xlu0 %629
        %v632 = vsel %vm516, %v628, 0
        %v635 = vsel %vm516, %v630, 0
        %637 = vmatpush.bf16.xpose.msra.mxu0 0
        %638 = vmatpush.bf16.xpose.msra.mxu0 0
        %639 = vmatpush.bf16.xpose.msra.mxu0 0
        %640 = vmatpush.bf16.xpose.msra.mxu0 0
        %641 = vmatpush.bf16.xpose.msra.mxu0 0
        %642 = vmatpush.bf16.xpose.msra.mxu0 0
        %643 = vmatpush.bf16.xpose.msra.mxu0 0
        %644 = vmatpush.bf16.xpose.msra.mxu0 %v635
        %645 = vmatmul.bf16.gmra.mxu0 %v632
        %v646 = vpop.f32.mrf.mxu0
        %v647 = vadd.f32 0.0, %v646
        %v648 = vpop.f32.mrf.mxu0
        %649 = vdwg.mxu0
        %v650 = vsel %vm516, %v647, -inf
        %651 = vmax.xlane.f32.xlu0 %v650
        %v652 = vpop.xlane.xlu0 %651
        %v653 = vsub.f32 %v647, %v652
        %v654 = vmul.f32 %v653, 1.442695
        %v655 = vpow.pop %v654
        %v656 = vsel %vm516, %v655, 0.0
        %657 = vadd.xlane.f32.xlu0 %v656
        %v658 = vpop.xlane.xlu0 %657
        %v659 = vrcp.pop %v658
        %v660 = vmul.f32 %v655, %v659
        %v661 = vpack.c.bf16 %v660, %v660
        %662 = vrot.lane.b32.xlu0 %v512, 48
        %v663 = vpop.permute.xlu0 %662
        %v665 = vsel %vm516, %v661, 0
        %v668 = vsel %vm553, %v663, 0
        %670 = vmatpush.bf16.msra.mxu0 0
        %671 = vmatpush.bf16.msra.mxu0 0
        %672 = vmatpush.bf16.msra.mxu0 0
        %673 = vmatpush.bf16.msra.mxu0 0
        %674 = vmatpush.bf16.msra.mxu0 0
        %675 = vmatpush.bf16.msra.mxu0 0
        %676 = vmatpush.bf16.msra.mxu0 0
        %677 = vmatpush.bf16.msra.mxu0 %v668
        %678 = vmatmul.bf16.gmra.mxu0 %v665
        %v679 = vpop.f32.mrf.mxu0
        %v680 = vadd.f32 0.0, %v679
        %v681 = vpop.f32.mrf.mxu0
        %682 = vdwg.mxu0
        %683 = vrot.lane.b32.xlu0 %v511, 104
        %v684 = vpop.permute.xlu0 %683
        %685 = vrot.lane.b32.xlu0 %v512, 72
        %v686 = vpop.permute.xlu0 %685
        %v688 = vsel %vm516, %v684, 0
        %v691 = vsel %vm516, %v686, 0
        %693 = vmatpush.bf16.xpose.msra.mxu0 0
        %694 = vmatpush.bf16.xpose.msra.mxu0 0
        %695 = vmatpush.bf16.xpose.msra.mxu0 0
        %696 = vmatpush.bf16.xpose.msra.mxu0 0
        %697 = vmatpush.bf16.xpose.msra.mxu0 0
        %698 = vmatpush.bf16.xpose.msra.mxu0 0
        %699 = vmatpush.bf16.xpose.msra.mxu0 0
        %700 = vmatpush.bf16.xpose.msra.mxu0 %v691
        %701 = vmatmul.bf16.gmra.mxu0 %v688
        %v702 = vpop.f32.mrf.mxu0
        %v703 = vadd.f32 0.0, %v702
        %v704 = vpop.f32.mrf.mxu0
        %705 = vdwg.mxu0
        %v706 = vsel %vm516, %v703, -inf
        %707 = vmax.xlane.f32.xlu0 %v706
        %v708 = vpop.xlane.xlu0 %707
        %v709 = vsub.f32 %v703, %v708
        %v710 = vmul.f32 %v709, 1.442695
        %v711 = vpow.pop %v710
        %v712 = vsel %vm516, %v711, 0.0
        %713 = vadd.xlane.f32.xlu0 %v712
        %v714 = vpop.xlane.xlu0 %713
        %v715 = vrcp.pop %v714
        %v716 = vmul.f32 %v711, %v715
        %v717 = vpack.c.bf16 %v716, %v716
        %718 = vrot.lane.b32.xlu0 %v512, 40
        %v719 = vpop.permute.xlu0 %718
        %v721 = vsel %vm516, %v717, 0
        %v724 = vsel %vm553, %v719, 0
        %726 = vmatpush.bf16.msra.mxu0 0
        %727 = vmatpush.bf16.msra.mxu0 0
        %728 = vmatpush.bf16.msra.mxu0 0
        %729 = vmatpush.bf16.msra.mxu0 0
        %730 = vmatpush.bf16.msra.mxu0 0
        %731 = vmatpush.bf16.msra.mxu0 0
        %732 = vmatpush.bf16.msra.mxu0 0
        %733 = vmatpush.bf16.msra.mxu0 %v724
        %734 = vmatmul.bf16.gmra.mxu0 %v721
        %v735 = vpop.f32.mrf.mxu0
        %v736 = vadd.f32 0.0, %v735
        %v737 = vpop.f32.mrf.mxu0
        %738 = vdwg.mxu0
        %740 = vrot.lane.b32.xlu0 %v624, 8
        %v741 = vpop.permute.xlu0 %740
        %744 = vrot.lane.b32.xlu0 %v680, 16
        %v745 = vpop.permute.xlu0 %744
        %748 = vrot.lane.b32.xlu0 %v736, 24
        %v749 = vpop.permute.xlu0 %748
        %v751 = vsel %vm516, %v567, %v741
        %vm752 = vcmask 130048
        %v753 = vsel %vm752, %v751, %v745
        %vm754 = vcmask 195584
        %v755 = vsel %vm754, %v753, %v749
        %v756 = vpack.c.bf16 %v755, %v755
        %v757 = vld [vmem:[#allocation2] sm:$0xf]
        %v758 = vld [vmem:[#allocation2 + $0x4] sm:$0xf]
        %v759 = vld [vmem:[#allocation2 + $0x8] sm:$0xf]
        %v760 = vld [vmem:[#allocation2 + $0xc] sm:$0xf]
        %v761 = vld [vmem:[%s4] sm:$0x1]
        %v763 = vperm.slane %v761, 0
        %v769 = vunpack.c.l.b16 %v757
        %v770 = vunpack.c.l.b16 %v758
        %v771 = vunpack.c.l.b16 %v759
        %v772 = vunpack.c.l.b16 %v760
        %v773 = vpack.c.b16 %v770, %v769
        %v774 = vpack.c.b16 %v772, %v771
        %v778 = vsel %vm493, %v756, 0
        %780 = vmatpush.bf16.msra.mxu0 0
        %781 = vmatpush.bf16.msra.mxu0 0
        %782 = vmatpush.bf16.msra.mxu0 0
        %783 = vmatpush.bf16.msra.mxu0 0
        %784 = vmatpush.bf16.msra.mxu0 0
        %785 = vmatpush.bf16.msra.mxu0 0
        %786 = vmatpush.bf16.msra.mxu0 %v774
        %787 = vmatpush.bf16.msra.mxu0 %v773
        %788 = vmatmul.bf16.gmra.mxu0 %v778
        %v789 = vpop.f32.mrf.mxu0
        %v790 = vadd.f32 %v763, %v789
        %v791 = vpop.f32.mrf.mxu0
        %792 = vdwg.mxu0
        %v793 = vadd.f32 %v471, %v790
        %v794 = vld [vmem:[%s9] sm:$0x1]
        %v795 = vld [vmem:[%s10] sm:$0x1]
        %v796 = vsel %vm493, %v793, 0.0
        %797 = vadd.xlane.f32.xlu0 %v796
        %v798 = vpop.xlane.xlu0 %797
        %v799 = vrcp.pop 32.0
        %v800 = vmul.f32 32.0, %v799
        %v801 = vsub.f32 1.0, %v800
        %v802 = vmul.f32 %v799, %v801
        %v803 = vadd.f32 %v799, %v802
        %vm804 = vweird.f32 %v799
        %v805 = vsel %vm804, %v799, %v803
        %v806 = vmul.f32 %v798, %v805
        %v807 = vsub.f32 %v793, %v806
        %v808 = vmul.f32 %v807, %v807
        %v809 = vsel %vm493, %v808, 0.0
        %810 = vadd.xlane.f32.xlu0 %v809
        %v811 = vpop.xlane.xlu0 %810
        %v812 = vmul.f32 %v811, %v805
        %v813 = vadd.f32 %v812, 1e-05
        %v814 = vrsqrt.pop %v813
        %v815 = vmul.f32 %v814, %v813
        %v816 = vmul.f32 %v815, %v814
        %v817 = vmul.f32 0.5, %v816
        %v818 = vsub.f32 1.5, %v817
        %v819 = vmul.f32 %v814, %v818
        %vm820 = vweird.f32 %v813
        %vm821 = vweird.f32 %v814
        %vm822 = vmor %vm820, %vm821
        %v823 = vsel %vm822, %v814, %v819
        %v824 = vmul.f32 %v807, %v823
        %v826 = vperm.slane %v794, 0
        %v828 = vmul.f32 %v824, %v826
        %v830 = vperm.slane %v795, 0
        %v832 = vadd.f32 %v828, %v830
        %v833 = vpack.c.bf16 %v832, %v832
        %v834 = vld [vmem:[#allocation4] sm:$0xf]
        %v835 = vld [vmem:[#allocation4 + $0x4] sm:$0xf]
        %v836 = vld [vmem:[#allocation4 + $0x8] sm:$0xf]
        %v837 = vld [vmem:[#allocation4 + $0xc] sm:$0xf]
        %v838 = vld [vmem:[%s6] sm:$0x1]
        %v840 = vperm.slane %v838, 0
        %v846 = vunpack.c.l.b16 %v834
        %v847 = vunpack.c.l.b16 %v835
        %v848 = vunpack.c.l.b16 %v836
        %v849 = vunpack.c.l.b16 %v837
        %v850 = vpack.c.b16 %v847, %v846
        %v851 = vpack.c.b16 %v849, %v848
        %v855 = vsel %vm493, %v833, 0
        %857 = vmatpush.bf16.msra.mxu0 0
        %858 = vmatpush.bf16.msra.mxu0 0
        %859 = vmatpush.bf16.msra.mxu0 0
        %860 = vmatpush.bf16.msra.mxu0 0
        %861 = vmatpush.bf16.msra.mxu0 0
        %862 = vmatpush.bf16.msra.mxu0 0
        %863 = vmatpush.bf16.msra.mxu0 %v851
        %864 = vmatpush.bf16.msra.mxu0 %v850
        %865 = vmatmul.bf16.gmra.mxu0 %v855
        %v866 = vpop.f32.mrf.mxu0
        %v867 = vadd.f32 %v840, %v866
        %v868 = vpop.f32.mrf.mxu0
        %869 = vdwg.mxu0
        %v870 = vmax.f32 %v867, 0.0
        %v871 = vpack.c.bf16 %v870, %v870
        %v872 = vld [vmem:[%s7] sm:$0xf]
        %v873 = vld [vmem:[%s7 + $0x4] sm:$0xf]
        %v874 = vld [vmem:[%s7 + $0x8] sm:$0xf]
        %v875 = vld [vmem:[%s7 + $0xc] sm:$0xf]
        %v876 = vld [vmem:[%s7 + $0x10] sm:$0xf]
        %v877 = vld [vmem:[%s7 + $0x14] sm:$0xf]
        %v878 = vld [vmem:[%s7 + $0x18] sm:$0xf]
        %v879 = vld [vmem:[%s7 + $0x1c] sm:$0xf]
        %v880 = vld [vmem:[%s8] sm:$0x1]
        %v882 = vperm.slane %v880, 0
        %v892 = vunpack.c.l.b16 %v872
        %v893 = vunpack.c.l.b16 %v873
        %v894 = vunpack.c.l.b16 %v874
        %v895 = vunpack.c.l.b16 %v875
        %v896 = vunpack.c.l.b16 %v876
        %v897 = vunpack.c.l.b16 %v877
        %v898 = vunpack.c.l.b16 %v878
        %v899 = vunpack.c.l.b16 %v879
        %v900 = vpack.c.b16 %v893, %v892
        %v901 = vpack.c.b16 %v895, %v894
        %v902 = vpack.c.b16 %v897, %v896
        %v903 = vpack.c.b16 %v899, %v898
        %vm908 = vcmask 523264
        %v910 = vsel %vm908, %v871, 0
        %912 = vmatpush.bf16.msra.mxu0 0
        %913 = vmatpush.bf16.msra.mxu0 0
        %914 = vmatpush.bf16.msra.mxu0 0
        %915 = vmatpush.bf16.msra.mxu0 0
        %916 = vmatpush.bf16.msra.mxu0 %v903
        %917 = vmatpush.bf16.msra.mxu0 %v902
        %918 = vmatpush.bf16.msra.mxu0 %v901
        %919 = vmatpush.bf16.msra.mxu0 %v900
        %920 = vmatmul.bf16.gmra.mxu0 %v910
        %v921 = vpop.f32.mrf.mxu0
        %v922 = vadd.f32 %v882, %v921
        %v923 = vpop.f32.mrf.mxu0
        %924 = vdwg.mxu0
        %v925 = vadd.f32 %v832, %v922
        %v926 = vld [vmem:[%s11] sm:$0x1]
        %v927 = vld [vmem:[%s12] sm:$0x1]
        %v928 = vsel %vm493, %v925, 0.0
        %929 = vadd.xlane.f32.xlu0 %v928
        %v930 = vpop.xlane.xlu0 %929
        %v931 = vmul.f32 %v930, %v805
        %v932 = vsub.f32 %v925, %v931
        %v933 = vmul.f32 %v932, %v932
        %v934 = vsel %vm493, %v933, 0.0
        %935 = vadd.xlane.f32.xlu0 %v934
        %v936 = vpop.xlane.xlu0 %935
        %v937 = vmul.f32 %v936, %v805
        %v938 = vadd.f32 %v937, 1e-05
        %v939 = vrsqrt.pop %v938
        %v940 = vmul.f32 %v939, %v938
        %v941 = vmul.f32 %v940, %v939
        %v942 = vmul.f32 0.5, %v941
        %v943 = vsub.f32 1.5, %v942
        %v944 = vmul.f32 %v939, %v943
        %vm945 = vweird.f32 %v938
        %vm946 = vweird.f32 %v939
        %vm947 = vmor %vm945, %vm946
        %v948 = vsel %vm947, %v939, %v944
        %v949 = vmul.f32 %v932, %v948
        %v951 = vperm.slane %v926, 0
        %v953 = vmul.f32 %v949, %v951
        %v955 = vperm.slane %v927, 0
        %v957 = vadd.f32 %v953, %v955
        %958 = vst.msk [vmem:[%s469] sm:$0xff] %vm493, %v957
        %p959 = scmp.lt.s32.totalorder %s26, 1
        %s960 = scalar_select %p959, %s26, 1
        %s961 = smul.addr %s960, 8
        %s962 = scalar_lea.vmem %s13, %s961
        // Predicated region
        $region81: #{dense_transformer_encoder.3} parent=71 // pred_check
          %p963 = pneg %p322
        $region82: #{dense_transformer_encoder.3} parent=71 // pred_check_branch
          %965 = sbr.rel (%p963) target = $region84
        $region83: #{dense_transformer_encoder.3} parent=71 // pred_region
          _
        $region84: #{dense_transformer_encoder.3} parent=71 // pred_fallthru
          _
      $region72: #{dense_transformer_encoder.3} parent=5 // pred_fallthru
        _
      %p966 = scmp.le.s32.totalorder 2, %s21
      // Predicated region
      $region85: #{dense_transformer_encoder.3} parent=5 // pred_check
        %p967 = pneg %p966
      $region86: #{dense_transformer_encoder.3} parent=5 // pred_check_branch
        %969 = sbr.rel (%p967) target = $region88
      $region87: #{dense_transformer_encoder.3} parent=5 // pred_region
        %s970 = ssub.s32 %s21, 2
        // Predicated region
        $region89: #{dense_transformer_encoder.3} parent=87 // pred_check
          %p971 = pneg %p328
        $region90: #{dense_transformer_encoder.3} parent=87 // pred_check_branch
          %973 = sbr.rel (%p971) target = $region92
        $region91: #{dense_transformer_encoder.3} parent=87 // pred_region
          %p974 = scmp.lt.s32.totalorder %s27, 1
          %s975 = scalar_select %p974, %s27, 1
          %s976 = smul.addr %s975, 8
          %s977 = scalar_lea.vmem %s13, %s976
        $region92: #{dense_transformer_encoder.3} parent=87 // pred_fallthru
          _
      $region88: #{dense_transformer_encoder.3} parent=5 // pred_fallthru
        _
    $region6: #{dense_transformer_encoder.3} parent=1 // loop_footer
      %s25 = sadd.s32 1, %s21
    $region7: #{dense_transformer_encoder.3} parent=1 // loop_footer_branch
      %20 = sbr.rel target = $region3
    $region8: #{dense_transformer_encoder.3} parent=1 // loop_exit
      _
    %978 = vsyncpa [#allocation3], 1
    %s979 = scalar_lea.sflag [#allocation3], 1
    %980 = vsyncpa %s979, 1
    %981 = vsyncpa [#allocation5], 1

</llo_original>
